<compile_context>
chip_gen: v6e
topology: v6e:2x2x1
jax: 0.10.0
libtpu: 0.0.40
codegen_flags: <defaults>
</compile_context>

<pallas_src>
import functools
import math

import jax
import jax.numpy as jnp
from jax.experimental import pallas as pl
from jax.experimental.pallas import tpu as pltpu

# --- small-BERT config (structure identical to bert-base, sizes reduced) ---
VOCAB = 100
VOCAB_PAD = 128                # lane-dense padded vocab for one-hot MXU gather
TYPE_VOCAB = 2
MAX_POS = 64
HIDDEN = 128
HEADS = 2
HEAD_DIM = HIDDEN // HEADS
INTER = 256
LAYERS = 2
EPS = 1e-12                    # BERT LayerNorm eps
N_LOGITS = 9 + 3 + 2           # fc_repeat + fc_relative_time + fc_exact_time
PAD_LOGITS = 128               # lane-dense padded classifier output width


# ------------------------------ fused kernel --------------------------------

def _bert_fused_kernel(
    ids_ref, amask_ref, wemb_ref, pemb_ref, temb_ref, embg_ref, embb_ref,
    wqkv_ref, bqkv_ref, wo_ref, bo_ref, ln1g_ref, ln1b_ref,
    w1_ref, b1_ref, w2_ref, b2_ref, ln2g_ref, ln2b_ref,
    wp_ref, bp_ref, wh_ref, bh_ref,
    out_ref, *, batch, seq):
  """Whole BERT forward (embeddings -> encoder -> pooler -> heads) in VMEM."""
  tokens = batch * seq
  f32 = jnp.float32
  bf16 = jnp.bfloat16

  def layernorm(x, g, b):
    mean = jnp.mean(x, axis=-1, keepdims=True)
    xc = x - mean
    var = jnp.mean(xc * xc, axis=-1, keepdims=True)
    return xc * jax.lax.rsqrt(var + EPS) * g + b

  # ---- embeddings: one-hot MXU gather (fused; no JAX-side gather kernel) ----
  ids = ids_ref[...]                                            # (T, 1) int32
  lane_v = jax.lax.broadcasted_iota(jnp.int32, (tokens, VOCAB_PAD), 1)
  one_hot = (lane_v == ids).astype(f32)                         # (T, VOCAB_PAD)
  x = jnp.dot(one_hot, wemb_ref[...], preferred_element_type=f32)   # exact gather
  pos = pemb_ref[0:seq, :]                                      # (S, H) static slice
  pos_full = jnp.concatenate([pos] * batch, axis=0)             # (T, H)
  # TODO(synk): token_type_ids hardcoded to 0 (matches the reference call signature).
  x = x + pos_full + temb_ref[0:1, :]
  x = layernorm(x, embg_ref[...], embb_ref[...])                # (T, HIDDEN) f32

  # Precomputed additive attention mask: key-padding bias + block-diag batch mask.
  attn_bias = amask_ref[...]                                    # (T, T) f32

  # Per-head lane masks (hoisted: computed once, reused by every layer).
  lane_h = jax.lax.broadcasted_iota(jnp.int32, (1, HIDDEN), 1)
  head_masks = [
      ((lane_h >= h * HEAD_DIM) & (lane_h < (h + 1) * HEAD_DIM)).astype(f32)
      for h in range(HEADS)]

  for l in range(LAYERS):
    # Fused QKV projection (Q columns pre-scaled by 1/sqrt(head_dim) at pack time).
    qkv = jnp.dot(x.astype(bf16), wqkv_ref[l],
                  preferred_element_type=f32) + bqkv_ref[l]     # (T, 3H) f32
    q = qkv[:, 0:HIDDEN].astype(bf16)                           # 128-lane aligned
    k = qkv[:, HIDDEN:2 * HIDDEN]
    v = qkv[:, 2 * HIDDEN:3 * HIDDEN]

    # Batch-merged, head-masked attention: all (batch, head) work in big tiles.
    ctx = None
    for h in range(HEADS):
      mh = head_masks[h]
      kh = (k * mh).astype(bf16)            # zero off-head lanes -> contraction
      vh = (v * mh).astype(bf16)            #   only over this head's 64 dims
      s = jax.lax.dot_general(q, kh, (((1,), (1,)), ((), ())),
                              preferred_element_type=f32)       # (T, T)
      s = s + attn_bias                     # key bias + cross-batch -1e9
      m = jnp.max(s, axis=-1, keepdims=True)
      p = jnp.exp(s - m)
      p = p * pl.reciprocal(jnp.sum(p, axis=-1, keepdims=True), approx=True)
      part = jnp.dot(p.astype(bf16), vh, preferred_element_type=f32)  # (T, H)
      ctx = part if ctx is None else ctx + part                 # heads land in own lanes

    attn = jnp.dot(ctx.astype(bf16), wo_ref[l],
                   preferred_element_type=f32) + bo_ref[l]
    x = layernorm(attn + x, ln1g_ref[l], ln1b_ref[l])

    # FFN (N=256 up / N=128 down), bias folded into the epilogue.
    hmid = jnp.dot(x.astype(bf16), w1_ref[l],
                   preferred_element_type=f32) + b1_ref[l]
    # TODO(synk): HF BERT uses exact (erf) gelu; tanh approximation used here.
    hmid = jax.nn.gelu(hmid, approximate=True)
    ffn = jnp.dot(hmid.astype(bf16), w2_ref[l],
                  preferred_element_type=f32) + b2_ref[l]
    x = layernorm(ffn + x, ln2g_ref[l], ln2b_ref[l])

  # Pooler + fused/padded classifier heads: CLS rows are at static offsets b*seq.
  for b in range(batch):
    cls_b = x[b * seq:b * seq + 1, :]                           # (1, H) static slice
    pooled_b = jnp.tanh(
        jnp.dot(cls_b.astype(bf16), wp_ref[...],
                preferred_element_type=f32) + bp_ref[...])
    logits_b = jnp.dot(pooled_b.astype(bf16), wh_ref[...],
                       preferred_element_type=f32) + bh_ref[...]
    out_ref[b:b + 1, :] = logits_b.astype(out_ref.dtype)


def _full_spec(shape):
  zeros = (0,) * len(shape)
  return pl.BlockSpec(shape, lambda i, _z=zeros: _z)


def bert_forward_fused(packed, ids, attn_bias, *, batch, seq):
  """One pallas_call for the whole model. Returns padded logits (B, 128)."""
  args = [
      ids, attn_bias,
      packed["word_emb"], packed["pos_emb"], packed["tok_emb"],
      packed["emb_ln_g"], packed["emb_ln_b"],
      packed["wqkv"], packed["bqkv"], packed["wo"], packed["bo"],
      packed["ln1_g"], packed["ln1_b"],
      packed["w1"], packed["b1"], packed["w2"], packed["b2"],
      packed["ln2_g"], packed["ln2_b"],
      packed["wp"], packed["bp"], packed["w_heads"], packed["b_heads"],
  ]
  return pl.pallas_call(
      functools.partial(_bert_fused_kernel, batch=batch, seq=seq),
      grid=(1,),
      in_specs=[_full_spec(a.shape) for a in args],
      out_specs=pl.BlockSpec((batch, PAD_LOGITS), lambda i: (0, 0)),
      out_shape=jax.ShapeDtypeStruct((batch, PAD_LOGITS), jnp.float32),
      compiler_params=pltpu.CompilerParams(
          dimension_semantics=("arbitrary",),
          vmem_limit_bytes=32 * 1024 * 1024),
  )(*args)


# ------------------------- parameter initialization ------------------------

def init_params(key):
  def norm(k, shape):
    return 0.02 * jax.random.normal(k, shape, dtype=jnp.float32)

  keys = iter(jax.random.split(key, 16 + LAYERS * 16))
  nk = lambda: next(keys)

  params = {
      "word_emb": norm(nk(), (VOCAB, HIDDEN)),
      "pos_emb": norm(nk(), (MAX_POS, HIDDEN)),
      "tok_emb": norm(nk(), (TYPE_VOCAB, HIDDEN)),
      "emb_ln_g": jnp.ones((HIDDEN,), jnp.float32),
      "emb_ln_b": jnp.zeros((HIDDEN,), jnp.float32),
      "layers": [],
      "wp": norm(nk(), (HIDDEN, HIDDEN)),
      "bp": jnp.zeros((HIDDEN,), jnp.float32),
      # three classification heads (fc_repeat=9, fc_relative_time=3, fc_exact_time=2)
      "w_repeat": norm(nk(), (HIDDEN, 9)),
      "b_repeat": jnp.zeros((9,), jnp.float32),
      "w_rel": norm(nk(), (HIDDEN, 3)),
      "b_rel": jnp.zeros((3,), jnp.float32),
      "w_exact": norm(nk(), (HIDDEN, 2)),
      "b_exact": jnp.zeros((2,), jnp.float32),
  }
  for _ in range(LAYERS):
    layer = {
        "wq": norm(nk(), (HIDDEN, HIDDEN)), "bq": jnp.zeros((HIDDEN,), jnp.float32),
        "wk": norm(nk(), (HIDDEN, HIDDEN)), "bk": jnp.zeros((HIDDEN,), jnp.float32),
        "wv": norm(nk(), (HIDDEN, HIDDEN)), "bv": jnp.zeros((HIDDEN,), jnp.float32),
        "wo": norm(nk(), (HIDDEN, HIDDEN)), "bo": jnp.zeros((HIDDEN,), jnp.float32),
        "ln1_g": jnp.ones((HIDDEN,), jnp.float32),
        "ln1_b": jnp.zeros((HIDDEN,), jnp.float32),
        "w1": norm(nk(), (HIDDEN, INTER)), "b1": jnp.zeros((INTER,), jnp.float32),
        "w2": norm(nk(), (INTER, HIDDEN)), "b2": jnp.zeros((HIDDEN,), jnp.float32),
        "ln2_g": jnp.ones((HIDDEN,), jnp.float32),
        "ln2_b": jnp.zeros((HIDDEN,), jnp.float32),
    }
    params["layers"].append(layer)
  return params


def pack_params(params):
  """Stack per-layer weights, fuse+prescale QKV, bf16 matmul weights,
  pad vocab to 128 rows and the 3 classifier heads to 128 lanes."""
  Ls = params["layers"]
  bf16 = jnp.bfloat16
  row = lambda v, n: v.reshape(1, n)
  scale = 1.0 / math.sqrt(HEAD_DIM)      # folded into Q columns (and bq)

  w_heads = jnp.concatenate(
      [params["w_repeat"], params["w_rel"], params["w_exact"]], axis=1)  # (H, 14)
  b_heads = jnp.concatenate(
      [params["b_repeat"], params["b_rel"], params["b_exact"]], axis=0)  # (14,)
  w_heads = jnp.pad(w_heads, ((0, 0), (0, PAD_LOGITS - N_LOGITS))).astype(bf16)
  b_heads = jnp.pad(b_heads, (0, PAD_LOGITS - N_LOGITS)).reshape(1, PAD_LOGITS)

  # Word embedding stays f32 (exact one-hot gather); padded to 128 rows.
  word_emb_pad = jnp.pad(params["word_emb"], ((0, VOCAB_PAD - VOCAB), (0, 0)))

  return {
      "word_emb": word_emb_pad,
      "pos_emb": params["pos_emb"],
      "tok_emb": params["tok_emb"],
      "emb_ln_g": row(params["emb_ln_g"], HIDDEN),
      "emb_ln_b": row(params["emb_ln_b"], HIDDEN),
      "wqkv": jnp.stack(
          [jnp.concatenate([L["wq"] * scale, L["wk"], L["wv"]], axis=1)
           for L in Ls]).astype(bf16),
      "bqkv": jnp.stack(
          [row(jnp.concatenate([L["bq"] * scale, L["bk"], L["bv"]], axis=0),
               3 * HIDDEN) for L in Ls]),
      "wo": jnp.stack([L["wo"] for L in Ls]).astype(bf16),
      "bo": jnp.stack([row(L["bo"], HIDDEN) for L in Ls]),
      "ln1_g": jnp.stack([row(L["ln1_g"], HIDDEN) for L in Ls]),
      "ln1_b": jnp.stack([row(L["ln1_b"], HIDDEN) for L in Ls]),
      "w1": jnp.stack([L["w1"] for L in Ls]).astype(bf16),
      "b1": jnp.stack([row(L["b1"], INTER) for L in Ls]),
      "w2": jnp.stack([L["w2"] for L in Ls]).astype(bf16),
      "b2": jnp.stack([row(L["b2"], HIDDEN) for L in Ls]),
      "ln2_g": jnp.stack([row(L["ln2_g"], HIDDEN) for L in Ls]),
      "ln2_b": jnp.stack([row(L["ln2_b"], HIDDEN) for L in Ls]),
      "wp": params["wp"].astype(bf16),
      "bp": row(params["bp"], HIDDEN),
      "w_heads": w_heads,
      "b_heads": b_heads,
  }


# ------------------------------ forward pass --------------------------------

def forward(packed, input_ids, attention_mask):
  B, S = input_ids.shape
  T = B * S

  # Tiny host-side glue: flatten ids and build the (B*S, B*S) additive mask
  # (HF-style -10000 key-padding bias + -1e9 off the per-batch diagonal blocks
  #  so the batch-merged attention cannot leak across sequences).
  ids = input_ids.reshape(T, 1).astype(jnp.int32)
  key_bias = (1.0 - attention_mask.astype(jnp.float32)) * -10000.0       # (B, S)
  batch_ids = jnp.repeat(jnp.arange(B, dtype=jnp.int32), S)              # (T,)
  same_batch = batch_ids[:, None] == batch_ids[None, :]
  attn_bias = jnp.where(same_batch, key_bias.reshape(T)[None, :], -1e9)  # (T, T)
  attn_bias = attn_bias.astype(jnp.float32)

  logits = bert_forward_fused(packed, ids, attn_bias, batch=B, seq=S)    # (B, 128)
  logits_repeat = logits[:, 0:9]
  logits_relative_time = logits[:, 9:12]
  logits_exact_time = logits[:, 12:14]
  return logits_repeat, logits_relative_time, logits_exact_time


# ---------------------------------- main ------------------------------------

if __name__ == "__main__":
  key = jax.random.PRNGKey(0)
  pkey, ikey = jax.random.split(key)
  params = init_params(pkey)
  packed = pack_params(params)

  B, S = 2, 16
  input_ids = jax.random.randint(ikey, (B, S), 0, VOCAB, dtype=jnp.int32)
  attention_mask = jnp.ones((B, S), dtype=jnp.int32).at[1, 12:].set(0)

  fwd = jax.jit(forward)
  out = fwd(packed, input_ids, attention_mask)
  out = jax.block_until_ready(out)

  assert out[0].shape == (B, 9)
  assert out[1].shape == (B, 3)
  assert out[2].shape == (B, 2)
  assert all(bool(jnp.all(jnp.isfinite(o))) for o in out)
  print("KERNEL_OK")
</pallas_src>

<mosaic_0001>
module attributes {stable_mosaic.version = 11 : i64} {
  func.func @_bert_fused_kernel(%arg0: i32, %arg1: memref<32x1xi32, #tpu.memory_space<vmem>>, %arg2: memref<32x32xf32, #tpu.memory_space<vmem>>, %arg3: memref<128x128xf32, #tpu.memory_space<vmem>>, %arg4: memref<64x128xf32, #tpu.memory_space<vmem>>, %arg5: memref<2x128xf32, #tpu.memory_space<vmem>>, %arg6: memref<1x128xf32, #tpu.memory_space<vmem>>, %arg7: memref<1x128xf32, #tpu.memory_space<vmem>>, %arg8: memref<2x128x384xbf16, #tpu.memory_space<vmem>>, %arg9: memref<2x1x384xf32, #tpu.memory_space<vmem>>, %arg10: memref<2x128x128xbf16, #tpu.memory_space<vmem>>, %arg11: memref<2x1x128xf32, #tpu.memory_space<vmem>>, %arg12: memref<2x1x128xf32, #tpu.memory_space<vmem>>, %arg13: memref<2x1x128xf32, #tpu.memory_space<vmem>>, %arg14: memref<2x128x256xbf16, #tpu.memory_space<vmem>>, %arg15: memref<2x1x256xf32, #tpu.memory_space<vmem>>, %arg16: memref<2x256x128xbf16, #tpu.memory_space<vmem>>, %arg17: memref<2x1x128xf32, #tpu.memory_space<vmem>>, %arg18: memref<2x1x128xf32, #tpu.memory_space<vmem>>, %arg19: memref<2x1x128xf32, #tpu.memory_space<vmem>>, %arg20: memref<128x128xbf16, #tpu.memory_space<vmem>>, %arg21: memref<1x128xf32, #tpu.memory_space<vmem>>, %arg22: memref<128x128xbf16, #tpu.memory_space<vmem>>, %arg23: memref<1x128xf32, #tpu.memory_space<vmem>>, %arg24: memref<2x128xf32, #tpu.memory_space<vmem>>) attributes {dimension_semantics = [#tpu.dimension_semantics<arbitrary>], iteration_bounds = array<i64: 1>, scalar_prefetch = 0 : i64, scratch_operands = 0 : i64, tpu.core_type = #tpu.core_type<tc>, window_params = [{pipeline_mode = #tpu.pipeline_mode<synchronous>, transform_indices = @transform_0, window_bounds = array<i64: 32, 1>}, {pipeline_mode = #tpu.pipeline_mode<synchronous>, transform_indices = @transform_1, window_bounds = array<i64: 32, 32>}, {pipeline_mode = #tpu.pipeline_mode<synchronous>, transform_indices = @transform_2, window_bounds = array<i64: 128, 128>}, {pipeline_mode = #tpu.pipeline_mode<synchronous>, transform_indices = @transform_3, window_bounds = array<i64: 64, 128>}, {pipeline_mode = #tpu.pipeline_mode<synchronous>, transform_indices = @transform_4, window_bounds = array<i64: 2, 128>}, {pipeline_mode = #tpu.pipeline_mode<synchronous>, transform_indices = @transform_5, window_bounds = array<i64: 1, 128>}, {pipeline_mode = #tpu.pipeline_mode<synchronous>, transform_indices = @transform_6, window_bounds = array<i64: 1, 128>}, {pipeline_mode = #tpu.pipeline_mode<synchronous>, transform_indices = @transform_7, window_bounds = array<i64: 2, 128, 384>}, {pipeline_mode = #tpu.pipeline_mode<synchronous>, transform_indices = @transform_8, window_bounds = array<i64: 2, 1, 384>}, {pipeline_mode = #tpu.pipeline_mode<synchronous>, transform_indices = @transform_9, window_bounds = array<i64: 2, 128, 128>}, {pipeline_mode = #tpu.pipeline_mode<synchronous>, transform_indices = @transform_10, window_bounds = array<i64: 2, 1, 128>}, {pipeline_mode = #tpu.pipeline_mode<synchronous>, transform_indices = @transform_11, window_bounds = array<i64: 2, 1, 128>}, {pipeline_mode = #tpu.pipeline_mode<synchronous>, transform_indices = @transform_12, window_bounds = array<i64: 2, 1, 128>}, {pipeline_mode = #tpu.pipeline_mode<synchronous>, transform_indices = @transform_13, window_bounds = array<i64: 2, 128, 256>}, {pipeline_mode = #tpu.pipeline_mode<synchronous>, transform_indices = @transform_14, window_bounds = array<i64: 2, 1, 256>}, {pipeline_mode = #tpu.pipeline_mode<synchronous>, transform_indices = @transform_15, window_bounds = array<i64: 2, 256, 128>}, {pipeline_mode = #tpu.pipeline_mode<synchronous>, transform_indices = @transform_16, window_bounds = array<i64: 2, 1, 128>}, {pipeline_mode = #tpu.pipeline_mode<synchronous>, transform_indices = @transform_17, window_bounds = array<i64: 2, 1, 128>}, {pipeline_mode = #tpu.pipeline_mode<synchronous>, transform_indices = @transform_18, window_bounds = array<i64: 2, 1, 128>}, {pipeline_mode = #tpu.pipeline_mode<synchronous>, transform_indices = @transform_19, window_bounds = array<i64: 128, 128>}, {pipeline_mode = #tpu.pipeline_mode<synchronous>, transform_indices = @transform_20, window_bounds = array<i64: 1, 128>}, {pipeline_mode = #tpu.pipeline_mode<synchronous>, transform_indices = @transform_21, window_bounds = array<i64: 128, 128>}, {pipeline_mode = #tpu.pipeline_mode<synchronous>, transform_indices = @transform_22, window_bounds = array<i64: 1, 128>}, {pipeline_mode = #tpu.pipeline_mode<synchronous>, transform_indices = @transform_23, window_bounds = array<i64: 2, 128>}]} {
    %c0 = arith.constant 0 : index
    %c0_0 = arith.constant 0 : index
    %0 = vector.load %arg1[%c0, %c0_0] : memref<32x1xi32, #tpu.memory_space<vmem>>, vector<32x1xi32>
    %1 = tpu.iota {dimensions = array<i32: 1>} : vector<32x128xi32>
    %2 = vector.broadcast %0 : vector<32x1xi32> to vector<32x128xi32>
    %3 = arith.cmpi eq, %1, %2 : vector<32x128xi32>
    %4 = arith.extui %3 : vector<32x128xi1> to vector<32x128xi32>
    %5 = arith.sitofp %4 : vector<32x128xi32> to vector<32x128xf32>
    %c0_1 = arith.constant 0 : index
    %c0_2 = arith.constant 0 : index
    %6 = vector.load %arg3[%c0_1, %c0_2] : memref<128x128xf32, #tpu.memory_space<vmem>>, vector<128x128xf32>
    %cst = arith.constant dense<0.000000e+00> : vector<32x128xf32>
    %7 = tpu.matmul %5, %6, %cst {dimension_numbers = #tpu.dot_dimension_numbers<[1], [0], [0], [1], [0, 0, 1, 1], [], []>} : vector<32x128xf32>, vector<128x128xf32>, vector<32x128xf32> -> vector<32x128xf32>
    %c0_3 = arith.constant 0 : index
    %c0_4 = arith.constant 0 : index
    %8 = vector.load %arg4[%c0_3, %c0_4] : memref<64x128xf32, #tpu.memory_space<vmem>>, vector<16x128xf32>
    %9 = tpu.concatenate %8, %8 in 0 : vector<16x128xf32>, vector<16x128xf32> -> vector<32x128xf32>
    %10 = arith.addf %7, %9 : vector<32x128xf32>
    %c0_5 = arith.constant 0 : index
    %c0_6 = arith.constant 0 : index
    %11 = vector.load %arg5[%c0_5, %c0_6] : memref<2x128xf32, #tpu.memory_space<vmem>>, vector<1x128xf32>
    %12 = vector.broadcast %11 : vector<1x128xf32> to vector<32x128xf32>
    %13 = arith.addf %10, %12 : vector<32x128xf32>
    %c0_7 = arith.constant 0 : index
    %c0_8 = arith.constant 0 : index
    %14 = vector.load %arg6[%c0_7, %c0_8] : memref<1x128xf32, #tpu.memory_space<vmem>>, vector<1x128xf32>
    %c0_9 = arith.constant 0 : index
    %c0_10 = arith.constant 0 : index
    %15 = vector.load %arg7[%c0_9, %c0_10] : memref<1x128xf32, #tpu.memory_space<vmem>>, vector<1x128xf32>
    %cst_11 = arith.constant dense<0.000000e+00> : vector<32xf32>
    %16 = vector.multi_reduction <add>, %13, %cst_11 [1] : vector<32x128xf32> to vector<32xf32>
    %17 = vector.shape_cast %16 : vector<32xf32> to vector<32x1xf32>
    %cst_12 = arith.constant 1.280000e+02 : f32
    %18 = vector.broadcast %cst_12 : f32 to vector<32x1xf32>
    %19 = arith.divf %17, %18 : vector<32x1xf32>
    %20 = vector.broadcast %19 : vector<32x1xf32> to vector<32x128xf32>
    %21 = arith.subf %13, %20 : vector<32x128xf32>
    %22 = arith.mulf %21, %21 : vector<32x128xf32>
    %cst_13 = arith.constant dense<0.000000e+00> : vector<32xf32>
    %23 = vector.multi_reduction <add>, %22, %cst_13 [1] : vector<32x128xf32> to vector<32xf32>
    %24 = vector.shape_cast %23 : vector<32xf32> to vector<32x1xf32>
    %cst_14 = arith.constant 1.280000e+02 : f32
    %25 = vector.broadcast %cst_14 : f32 to vector<32x1xf32>
    %26 = arith.divf %24, %25 : vector<32x1xf32>
    %cst_15 = arith.constant 9.99999996E-13 : f32
    %27 = vector.broadcast %cst_15 : f32 to vector<32x1xf32>
    %28 = arith.addf %26, %27 : vector<32x1xf32>
    %29 = math.rsqrt %28 : vector<32x1xf32>
    %30 = vector.broadcast %29 : vector<32x1xf32> to vector<32x128xf32>
    %31 = arith.mulf %21, %30 : vector<32x128xf32>
    %32 = vector.broadcast %14 : vector<1x128xf32> to vector<32x128xf32>
    %33 = arith.mulf %31, %32 : vector<32x128xf32>
    %34 = vector.broadcast %15 : vector<1x128xf32> to vector<32x128xf32>
    %35 = arith.addf %33, %34 : vector<32x128xf32>
    %c0_16 = arith.constant 0 : index
    %c0_17 = arith.constant 0 : index
    %36 = vector.load %arg2[%c0_16, %c0_17] : memref<32x32xf32, #tpu.memory_space<vmem>>, vector<32x32xf32>
    %37 = tpu.iota {dimensions = array<i32: 1>} : vector<1x128xi32>
    %c0_i32 = arith.constant 0 : i32
    %38 = vector.broadcast %c0_i32 : i32 to vector<1x128xi32>
    %39 = arith.cmpi sge, %37, %38 : vector<1x128xi32>
    %c64_i32 = arith.constant 64 : i32
    %40 = vector.broadcast %c64_i32 : i32 to vector<1x128xi32>
    %41 = arith.cmpi slt, %37, %40 : vector<1x128xi32>
    %42 = arith.andi %39, %41 : vector<1x128xi1>
    %43 = arith.extui %42 : vector<1x128xi1> to vector<1x128xi32>
    %44 = arith.sitofp %43 : vector<1x128xi32> to vector<1x128xf32>
    %c64_i32_18 = arith.constant 64 : i32
    %45 = vector.broadcast %c64_i32_18 : i32 to vector<1x128xi32>
    %46 = arith.cmpi sge, %37, %45 : vector<1x128xi32>
    %c128_i32 = arith.constant 128 : i32
    %47 = vector.broadcast %c128_i32 : i32 to vector<1x128xi32>
    %48 = arith.cmpi slt, %37, %47 : vector<1x128xi32>
    %49 = arith.andi %46, %48 : vector<1x128xi1>
    %50 = arith.extui %49 : vector<1x128xi1> to vector<1x128xi32>
    %51 = arith.sitofp %50 : vector<1x128xi32> to vector<1x128xf32>
    %52 = arith.truncf %35 : vector<32x128xf32> to vector<32x128xbf16>
    %c0_19 = arith.constant 0 : index
    %c0_20 = arith.constant 0 : index
    %c0_21 = arith.constant 0 : index
    %53 = vector.load %arg8[%c0_19, %c0_20, %c0_21] : memref<2x128x384xbf16, #tpu.memory_space<vmem>>, vector<1x128x384xbf16>
    %54 = vector.shape_cast %53 : vector<1x128x384xbf16> to vector<128x384xbf16>
    %cst_22 = arith.constant dense<0.000000e+00> : vector<32x384xf32>
    %55 = tpu.matmul %52, %54, %cst_22 {dimension_numbers = #tpu.dot_dimension_numbers<[1], [0], [0], [1], [0, 0, 1, 1], [], []>} : vector<32x128xbf16>, vector<128x384xbf16>, vector<32x384xf32> -> vector<32x384xf32>
    %c0_23 = arith.constant 0 : index
    %c0_24 = arith.constant 0 : index
    %c0_25 = arith.constant 0 : index
    %56 = vector.load %arg9[%c0_23, %c0_24, %c0_25] : memref<2x1x384xf32, #tpu.memory_space<vmem>>, vector<1x1x384xf32>
    %57 = vector.shape_cast %56 : vector<1x1x384xf32> to vector<1x384xf32>
    %58 = vector.broadcast %57 : vector<1x384xf32> to vector<32x384xf32>
    %59 = arith.addf %55, %58 : vector<32x384xf32>
    %60 = vector.extract_strided_slice %59 {offsets = [0, 0], sizes = [32, 128], strides = [1, 1]} : vector<32x384xf32> to vector<32x128xf32>
    %61 = arith.truncf %60 : vector<32x128xf32> to vector<32x128xbf16>
    %62 = vector.extract_strided_slice %59 {offsets = [0, 128], sizes = [32, 128], strides = [1, 1]} : vector<32x384xf32> to vector<32x128xf32>
    %63 = vector.extract_strided_slice %59 {offsets = [0, 256], sizes = [32, 128], strides = [1, 1]} : vector<32x384xf32> to vector<32x128xf32>
    %64 = vector.broadcast %44 : vector<1x128xf32> to vector<32x128xf32>
    %65 = arith.mulf %62, %64 : vector<32x128xf32>
    %66 = arith.truncf %65 : vector<32x128xf32> to vector<32x128xbf16>
    %67 = vector.broadcast %44 : vector<1x128xf32> to vector<32x128xf32>
    %68 = arith.mulf %63, %67 : vector<32x128xf32>
    %69 = arith.truncf %68 : vector<32x128xf32> to vector<32x128xbf16>
    %cst_26 = arith.constant dense<0.000000e+00> : vector<32x32xf32>
    %70 = tpu.matmul %61, %66, %cst_26 {dimension_numbers = #tpu.dot_dimension_numbers<[1], [1], [0], [0], [0, 0, 1, 0], [], []>} : vector<32x128xbf16>, vector<32x128xbf16>, vector<32x32xf32> -> vector<32x32xf32>
    %71 = arith.addf %70, %36 : vector<32x32xf32>
    %cst_27 = arith.constant dense<0xFF800000> : vector<32xf32>
    %72 = vector.multi_reduction <maximumf>, %71, %cst_27 [1] : vector<32x32xf32> to vector<32xf32>
    %73 = vector.shape_cast %72 : vector<32xf32> to vector<32x1xf32>
    %74 = vector.broadcast %73 : vector<32x1xf32> to vector<32x32xf32>
    %75 = arith.subf %71, %74 : vector<32x32xf32>
    %76 = math.exp %75 : vector<32x32xf32>
    %cst_28 = arith.constant dense<0.000000e+00> : vector<32xf32>
    %77 = vector.multi_reduction <add>, %76, %cst_28 [1] : vector<32x32xf32> to vector<32xf32>
    %78 = vector.shape_cast %77 : vector<32xf32> to vector<32x1xf32>
    %79 = tpu.reciprocal %78 {approx = true} : vector<32x1xf32> -> vector<32x1xf32>
    %80 = vector.broadcast %79 : vector<32x1xf32> to vector<32x32xf32>
    %81 = arith.mulf %76, %80 : vector<32x32xf32>
    %82 = arith.truncf %81 : vector<32x32xf32> to vector<32x32xbf16>
    %cst_29 = arith.constant dense<0.000000e+00> : vector<32x128xf32>
    %83 = tpu.matmul %82, %69, %cst_29 {dimension_numbers = #tpu.dot_dimension_numbers<[1], [0], [0], [1], [0, 0, 1, 1], [], []>} : vector<32x32xbf16>, vector<32x128xbf16>, vector<32x128xf32> -> vector<32x128xf32>
    %84 = vector.broadcast %51 : vector<1x128xf32> to vector<32x128xf32>
    %85 = arith.mulf %62, %84 : vector<32x128xf32>
    %86 = arith.truncf %85 : vector<32x128xf32> to vector<32x128xbf16>
    %87 = vector.broadcast %51 : vector<1x128xf32> to vector<32x128xf32>
    %88 = arith.mulf %63, %87 : vector<32x128xf32>
    %89 = arith.truncf %88 : vector<32x128xf32> to vector<32x128xbf16>
    %cst_30 = arith.constant dense<0.000000e+00> : vector<32x32xf32>
    %90 = tpu.matmul %61, %86, %cst_30 {dimension_numbers = #tpu.dot_dimension_numbers<[1], [1], [0], [0], [0, 0, 1, 0], [], []>} : vector<32x128xbf16>, vector<32x128xbf16>, vector<32x32xf32> -> vector<32x32xf32>
    %91 = arith.addf %90, %36 : vector<32x32xf32>
    %cst_31 = arith.constant dense<0xFF800000> : vector<32xf32>
    %92 = vector.multi_reduction <maximumf>, %91, %cst_31 [1] : vector<32x32xf32> to vector<32xf32>
    %93 = vector.shape_cast %92 : vector<32xf32> to vector<32x1xf32>
    %94 = vector.broadcast %93 : vector<32x1xf32> to vector<32x32xf32>
    %95 = arith.subf %91, %94 : vector<32x32xf32>
    %96 = math.exp %95 : vector<32x32xf32>
    %cst_32 = arith.constant dense<0.000000e+00> : vector<32xf32>
    %97 = vector.multi_reduction <add>, %96, %cst_32 [1] : vector<32x32xf32> to vector<32xf32>
    %98 = vector.shape_cast %97 : vector<32xf32> to vector<32x1xf32>
    %99 = tpu.reciprocal %98 {approx = true} : vector<32x1xf32> -> vector<32x1xf32>
    %100 = vector.broadcast %99 : vector<32x1xf32> to vector<32x32xf32>
    %101 = arith.mulf %96, %100 : vector<32x32xf32>
    %102 = arith.truncf %101 : vector<32x32xf32> to vector<32x32xbf16>
    %cst_33 = arith.constant dense<0.000000e+00> : vector<32x128xf32>
    %103 = tpu.matmul %102, %89, %cst_33 {dimension_numbers = #tpu.dot_dimension_numbers<[1], [0], [0], [1], [0, 0, 1, 1], [], []>} : vector<32x32xbf16>, vector<32x128xbf16>, vector<32x128xf32> -> vector<32x128xf32>
    %104 = arith.addf %83, %103 : vector<32x128xf32>
    %105 = arith.truncf %104 : vector<32x128xf32> to vector<32x128xbf16>
    %c0_34 = arith.constant 0 : index
    %c0_35 = arith.constant 0 : index
    %c0_36 = arith.constant 0 : index
    %106 = vector.load %arg10[%c0_34, %c0_35, %c0_36] : memref<2x128x128xbf16, #tpu.memory_space<vmem>>, vector<1x128x128xbf16>
    %107 = vector.shape_cast %106 : vector<1x128x128xbf16> to vector<128x128xbf16>
    %cst_37 = arith.constant dense<0.000000e+00> : vector<32x128xf32>
    %108 = tpu.matmul %105, %107, %cst_37 {dimension_numbers = #tpu.dot_dimension_numbers<[1], [0], [0], [1], [0, 0, 1, 1], [], []>} : vector<32x128xbf16>, vector<128x128xbf16>, vector<32x128xf32> -> vector<32x128xf32>
    %c0_38 = arith.constant 0 : index
    %c0_39 = arith.constant 0 : index
    %c0_40 = arith.constant 0 : index
    %109 = vector.load %arg11[%c0_38, %c0_39, %c0_40] : memref<2x1x128xf32, #tpu.memory_space<vmem>>, vector<1x1x128xf32>
    %110 = vector.shape_cast %109 : vector<1x1x128xf32> to vector<1x128xf32>
    %111 = vector.broadcast %110 : vector<1x128xf32> to vector<32x128xf32>
    %112 = arith.addf %108, %111 : vector<32x128xf32>
    %113 = arith.addf %112, %35 : vector<32x128xf32>
    %c0_41 = arith.constant 0 : index
    %c0_42 = arith.constant 0 : index
    %c0_43 = arith.constant 0 : index
    %114 = vector.load %arg12[%c0_41, %c0_42, %c0_43] : memref<2x1x128xf32, #tpu.memory_space<vmem>>, vector<1x1x128xf32>
    %115 = vector.shape_cast %114 : vector<1x1x128xf32> to vector<1x128xf32>
    %c0_44 = arith.constant 0 : index
    %c0_45 = arith.constant 0 : index
    %c0_46 = arith.constant 0 : index
    %116 = vector.load %arg13[%c0_44, %c0_45, %c0_46] : memref<2x1x128xf32, #tpu.memory_space<vmem>>, vector<1x1x128xf32>
    %117 = vector.shape_cast %116 : vector<1x1x128xf32> to vector<1x128xf32>
    %cst_47 = arith.constant dense<0.000000e+00> : vector<32xf32>
    %118 = vector.multi_reduction <add>, %113, %cst_47 [1] : vector<32x128xf32> to vector<32xf32>
    %119 = vector.shape_cast %118 : vector<32xf32> to vector<32x1xf32>
    %cst_48 = arith.constant 1.280000e+02 : f32
    %120 = vector.broadcast %cst_48 : f32 to vector<32x1xf32>
    %121 = arith.divf %119, %120 : vector<32x1xf32>
    %122 = vector.broadcast %121 : vector<32x1xf32> to vector<32x128xf32>
    %123 = arith.subf %113, %122 : vector<32x128xf32>
    %124 = arith.mulf %123, %123 : vector<32x128xf32>
    %cst_49 = arith.constant dense<0.000000e+00> : vector<32xf32>
    %125 = vector.multi_reduction <add>, %124, %cst_49 [1] : vector<32x128xf32> to vector<32xf32>
    %126 = vector.shape_cast %125 : vector<32xf32> to vector<32x1xf32>
    %cst_50 = arith.constant 1.280000e+02 : f32
    %127 = vector.broadcast %cst_50 : f32 to vector<32x1xf32>
    %128 = arith.divf %126, %127 : vector<32x1xf32>
    %cst_51 = arith.constant 9.99999996E-13 : f32
    %129 = vector.broadcast %cst_51 : f32 to vector<32x1xf32>
    %130 = arith.addf %128, %129 : vector<32x1xf32>
    %131 = math.rsqrt %130 : vector<32x1xf32>
    %132 = vector.broadcast %131 : vector<32x1xf32> to vector<32x128xf32>
    %133 = arith.mulf %123, %132 : vector<32x128xf32>
    %134 = vector.broadcast %115 : vector<1x128xf32> to vector<32x128xf32>
    %135 = arith.mulf %133, %134 : vector<32x128xf32>
    %136 = vector.broadcast %117 : vector<1x128xf32> to vector<32x128xf32>
    %137 = arith.addf %135, %136 : vector<32x128xf32>
    %138 = arith.truncf %137 : vector<32x128xf32> to vector<32x128xbf16>
    %c0_52 = arith.constant 0 : index
    %c0_53 = arith.constant 0 : index
    %c0_54 = arith.constant 0 : index
    %139 = vector.load %arg14[%c0_52, %c0_53, %c0_54] : memref<2x128x256xbf16, #tpu.memory_space<vmem>>, vector<1x128x256xbf16>
    %140 = vector.shape_cast %139 : vector<1x128x256xbf16> to vector<128x256xbf16>
    %cst_55 = arith.constant dense<0.000000e+00> : vector<32x256xf32>
    %141 = tpu.matmul %138, %140, %cst_55 {dimension_numbers = #tpu.dot_dimension_numbers<[1], [0], [0], [1], [0, 0, 1, 1], [], []>} : vector<32x128xbf16>, vector<128x256xbf16>, vector<32x256xf32> -> vector<32x256xf32>
    %c0_56 = arith.constant 0 : index
    %c0_57 = arith.constant 0 : index
    %c0_58 = arith.constant 0 : index
    %142 = vector.load %arg15[%c0_56, %c0_57, %c0_58] : memref<2x1x256xf32, #tpu.memory_space<vmem>>, vector<1x1x256xf32>
    %143 = vector.shape_cast %142 : vector<1x1x256xf32> to vector<1x256xf32>
    %144 = vector.broadcast %143 : vector<1x256xf32> to vector<32x256xf32>
    %145 = arith.addf %141, %144 : vector<32x256xf32>
    %146 = arith.mulf %145, %145 : vector<32x256xf32>
    %147 = arith.mulf %145, %146 : vector<32x256xf32>
    %cst_59 = arith.constant 4.471500e-02 : f32
    %148 = vector.broadcast %cst_59 : f32 to vector<32x256xf32>
    %149 = arith.mulf %148, %147 : vector<32x256xf32>
    %150 = arith.addf %145, %149 : vector<32x256xf32>
    %cst_60 = arith.constant 0.797884583 : f32
    %151 = vector.broadcast %cst_60 : f32 to vector<32x256xf32>
    %152 = arith.mulf %151, %150 : vector<32x256xf32>
    %153 = math.tanh %152 : vector<32x256xf32>
    %cst_61 = arith.constant 1.000000e+00 : f32
    %154 = vector.broadcast %cst_61 : f32 to vector<32x256xf32>
    %155 = arith.addf %154, %153 : vector<32x256xf32>
    %cst_62 = arith.constant 5.000000e-01 : f32
    %156 = vector.broadcast %cst_62 : f32 to vector<32x256xf32>
    %157 = arith.mulf %156, %155 : vector<32x256xf32>
    %158 = arith.mulf %145, %157 : vector<32x256xf32>
    %159 = arith.truncf %158 : vector<32x256xf32> to vector<32x256xbf16>
    %c0_63 = arith.constant 0 : index
    %c0_64 = arith.constant 0 : index
    %c0_65 = arith.constant 0 : index
    %160 = vector.load %arg16[%c0_63, %c0_64, %c0_65] : memref<2x256x128xbf16, #tpu.memory_space<vmem>>, vector<1x256x128xbf16>
    %161 = vector.shape_cast %160 : vector<1x256x128xbf16> to vector<256x128xbf16>
    %cst_66 = arith.constant dense<0.000000e+00> : vector<32x128xf32>
    %162 = tpu.matmul %159, %161, %cst_66 {dimension_numbers = #tpu.dot_dimension_numbers<[1], [0], [0], [1], [0, 0, 1, 1], [], []>} : vector<32x256xbf16>, vector<256x128xbf16>, vector<32x128xf32> -> vector<32x128xf32>
    %c0_67 = arith.constant 0 : index
    %c0_68 = arith.constant 0 : index
    %c0_69 = arith.constant 0 : index
    %163 = vector.load %arg17[%c0_67, %c0_68, %c0_69] : memref<2x1x128xf32, #tpu.memory_space<vmem>>, vector<1x1x128xf32>
    %164 = vector.shape_cast %163 : vector<1x1x128xf32> to vector<1x128xf32>
    %165 = vector.broadcast %164 : vector<1x128xf32> to vector<32x128xf32>
    %166 = arith.addf %162, %165 : vector<32x128xf32>
    %167 = arith.addf %166, %137 : vector<32x128xf32>
    %c0_70 = arith.constant 0 : index
    %c0_71 = arith.constant 0 : index
    %c0_72 = arith.constant 0 : index
    %168 = vector.load %arg18[%c0_70, %c0_71, %c0_72] : memref<2x1x128xf32, #tpu.memory_space<vmem>>, vector<1x1x128xf32>
    %169 = vector.shape_cast %168 : vector<1x1x128xf32> to vector<1x128xf32>
    %c0_73 = arith.constant 0 : index
    %c0_74 = arith.constant 0 : index
    %c0_75 = arith.constant 0 : index
    %170 = vector.load %arg19[%c0_73, %c0_74, %c0_75] : memref<2x1x128xf32, #tpu.memory_space<vmem>>, vector<1x1x128xf32>
    %171 = vector.shape_cast %170 : vector<1x1x128xf32> to vector<1x128xf32>
    %cst_76 = arith.constant dense<0.000000e+00> : vector<32xf32>
    %172 = vector.multi_reduction <add>, %167, %cst_76 [1] : vector<32x128xf32> to vector<32xf32>
    %173 = vector.shape_cast %172 : vector<32xf32> to vector<32x1xf32>
    %cst_77 = arith.constant 1.280000e+02 : f32
    %174 = vector.broadcast %cst_77 : f32 to vector<32x1xf32>
    %175 = arith.divf %173, %174 : vector<32x1xf32>
    %176 = vector.broadcast %175 : vector<32x1xf32> to vector<32x128xf32>
    %177 = arith.subf %167, %176 : vector<32x128xf32>
    %178 = arith.mulf %177, %177 : vector<32x128xf32>
    %cst_78 = arith.constant dense<0.000000e+00> : vector<32xf32>
    %179 = vector.multi_reduction <add>, %178, %cst_78 [1] : vector<32x128xf32> to vector<32xf32>
    %180 = vector.shape_cast %179 : vector<32xf32> to vector<32x1xf32>
    %cst_79 = arith.constant 1.280000e+02 : f32
    %181 = vector.broadcast %cst_79 : f32 to vector<32x1xf32>
    %182 = arith.divf %180, %181 : vector<32x1xf32>
    %cst_80 = arith.constant 9.99999996E-13 : f32
    %183 = vector.broadcast %cst_80 : f32 to vector<32x1xf32>
    %184 = arith.addf %182, %183 : vector<32x1xf32>
    %185 = math.rsqrt %184 : vector<32x1xf32>
    %186 = vector.broadcast %185 : vector<32x1xf32> to vector<32x128xf32>
    %187 = arith.mulf %177, %186 : vector<32x128xf32>
    %188 = vector.broadcast %169 : vector<1x128xf32> to vector<32x128xf32>
    %189 = arith.mulf %187, %188 : vector<32x128xf32>
    %190 = vector.broadcast %171 : vector<1x128xf32> to vector<32x128xf32>
    %191 = arith.addf %189, %190 : vector<32x128xf32>
    %192 = arith.truncf %191 : vector<32x128xf32> to vector<32x128xbf16>
    %c1 = arith.constant 1 : index
    %c0_81 = arith.constant 0 : index
    %c0_82 = arith.constant 0 : index
    %193 = vector.load %arg8[%c1, %c0_81, %c0_82] : memref<2x128x384xbf16, #tpu.memory_space<vmem>>, vector<1x128x384xbf16>
    %194 = vector.shape_cast %193 : vector<1x128x384xbf16> to vector<128x384xbf16>
    %cst_83 = arith.constant dense<0.000000e+00> : vector<32x384xf32>
    %195 = tpu.matmul %192, %194, %cst_83 {dimension_numbers = #tpu.dot_dimension_numbers<[1], [0], [0], [1], [0, 0, 1, 1], [], []>} : vector<32x128xbf16>, vector<128x384xbf16>, vector<32x384xf32> -> vector<32x384xf32>
    %c1_84 = arith.constant 1 : index
    %c0_85 = arith.constant 0 : index
    %c0_86 = arith.constant 0 : index
    %196 = vector.load %arg9[%c1_84, %c0_85, %c0_86] : memref<2x1x384xf32, #tpu.memory_space<vmem>>, vector<1x1x384xf32>
    %197 = vector.shape_cast %196 : vector<1x1x384xf32> to vector<1x384xf32>
    %198 = vector.broadcast %197 : vector<1x384xf32> to vector<32x384xf32>
    %199 = arith.addf %195, %198 : vector<32x384xf32>
    %200 = vector.extract_strided_slice %199 {offsets = [0, 0], sizes = [32, 128], strides = [1, 1]} : vector<32x384xf32> to vector<32x128xf32>
    %201 = arith.truncf %200 : vector<32x128xf32> to vector<32x128xbf16>
    %202 = vector.extract_strided_slice %199 {offsets = [0, 128], sizes = [32, 128], strides = [1, 1]} : vector<32x384xf32> to vector<32x128xf32>
    %203 = vector.extract_strided_slice %199 {offsets = [0, 256], sizes = [32, 128], strides = [1, 1]} : vector<32x384xf32> to vector<32x128xf32>
    %204 = vector.broadcast %44 : vector<1x128xf32> to vector<32x128xf32>
    %205 = arith.mulf %202, %204 : vector<32x128xf32>
    %206 = arith.truncf %205 : vector<32x128xf32> to vector<32x128xbf16>
    %207 = vector.broadcast %44 : vector<1x128xf32> to vector<32x128xf32>
    %208 = arith.mulf %203, %207 : vector<32x128xf32>
    %209 = arith.truncf %208 : vector<32x128xf32> to vector<32x128xbf16>
    %cst_87 = arith.constant dense<0.000000e+00> : vector<32x32xf32>
    %210 = tpu.matmul %201, %206, %cst_87 {dimension_numbers = #tpu.dot_dimension_numbers<[1], [1], [0], [0], [0, 0, 1, 0], [], []>} : vector<32x128xbf16>, vector<32x128xbf16>, vector<32x32xf32> -> vector<32x32xf32>
    %211 = arith.addf %210, %36 : vector<32x32xf32>
    %cst_88 = arith.constant dense<0xFF800000> : vector<32xf32>
    %212 = vector.multi_reduction <maximumf>, %211, %cst_88 [1] : vector<32x32xf32> to vector<32xf32>
    %213 = vector.shape_cast %212 : vector<32xf32> to vector<32x1xf32>
    %214 = vector.broadcast %213 : vector<32x1xf32> to vector<32x32xf32>
    %215 = arith.subf %211, %214 : vector<32x32xf32>
    %216 = math.exp %215 : vector<32x32xf32>
    %cst_89 = arith.constant dense<0.000000e+00> : vector<32xf32>
    %217 = vector.multi_reduction <add>, %216, %cst_89 [1] : vector<32x32xf32> to vector<32xf32>
    %218 = vector.shape_cast %217 : vector<32xf32> to vector<32x1xf32>
    %219 = tpu.reciprocal %218 {approx = true} : vector<32x1xf32> -> vector<32x1xf32>
    %220 = vector.broadcast %219 : vector<32x1xf32> to vector<32x32xf32>
    %221 = arith.mulf %216, %220 : vector<32x32xf32>
    %222 = arith.truncf %221 : vector<32x32xf32> to vector<32x32xbf16>
    %cst_90 = arith.constant dense<0.000000e+00> : vector<32x128xf32>
    %223 = tpu.matmul %222, %209, %cst_90 {dimension_numbers = #tpu.dot_dimension_numbers<[1], [0], [0], [1], [0, 0, 1, 1], [], []>} : vector<32x32xbf16>, vector<32x128xbf16>, vector<32x128xf32> -> vector<32x128xf32>
    %224 = vector.broadcast %51 : vector<1x128xf32> to vector<32x128xf32>
    %225 = arith.mulf %202, %224 : vector<32x128xf32>
    %226 = arith.truncf %225 : vector<32x128xf32> to vector<32x128xbf16>
    %227 = vector.broadcast %51 : vector<1x128xf32> to vector<32x128xf32>
    %228 = arith.mulf %203, %227 : vector<32x128xf32>
    %229 = arith.truncf %228 : vector<32x128xf32> to vector<32x128xbf16>
    %cst_91 = arith.constant dense<0.000000e+00> : vector<32x32xf32>
    %230 = tpu.matmul %201, %226, %cst_91 {dimension_numbers = #tpu.dot_dimension_numbers<[1], [1], [0], [0], [0, 0, 1, 0], [], []>} : vector<32x128xbf16>, vector<32x128xbf16>, vector<32x32xf32> -> vector<32x32xf32>
    %231 = arith.addf %230, %36 : vector<32x32xf32>
    %cst_92 = arith.constant dense<0xFF800000> : vector<32xf32>
    %232 = vector.multi_reduction <maximumf>, %231, %cst_92 [1] : vector<32x32xf32> to vector<32xf32>
    %233 = vector.shape_cast %232 : vector<32xf32> to vector<32x1xf32>
    %234 = vector.broadcast %233 : vector<32x1xf32> to vector<32x32xf32>
    %235 = arith.subf %231, %234 : vector<32x32xf32>
    %236 = math.exp %235 : vector<32x32xf32>
    %cst_93 = arith.constant dense<0.000000e+00> : vector<32xf32>
    %237 = vector.multi_reduction <add>, %236, %cst_93 [1] : vector<32x32xf32> to vector<32xf32>
    %238 = vector.shape_cast %237 : vector<32xf32> to vector<32x1xf32>
    %239 = tpu.reciprocal %238 {approx = true} : vector<32x1xf32> -> vector<32x1xf32>
    %240 = vector.broadcast %239 : vector<32x1xf32> to vector<32x32xf32>
    %241 = arith.mulf %236, %240 : vector<32x32xf32>
    %242 = arith.truncf %241 : vector<32x32xf32> to vector<32x32xbf16>
    %cst_94 = arith.constant dense<0.000000e+00> : vector<32x128xf32>
    %243 = tpu.matmul %242, %229, %cst_94 {dimension_numbers = #tpu.dot_dimension_numbers<[1], [0], [0], [1], [0, 0, 1, 1], [], []>} : vector<32x32xbf16>, vector<32x128xbf16>, vector<32x128xf32> -> vector<32x128xf32>
    %244 = arith.addf %223, %243 : vector<32x128xf32>
    %245 = arith.truncf %244 : vector<32x128xf32> to vector<32x128xbf16>
    %c1_95 = arith.constant 1 : index
    %c0_96 = arith.constant 0 : index
    %c0_97 = arith.constant 0 : index
    %246 = vector.load %arg10[%c1_95, %c0_96, %c0_97] : memref<2x128x128xbf16, #tpu.memory_space<vmem>>, vector<1x128x128xbf16>
    %247 = vector.shape_cast %246 : vector<1x128x128xbf16> to vector<128x128xbf16>
    %cst_98 = arith.constant dense<0.000000e+00> : vector<32x128xf32>
    %248 = tpu.matmul %245, %247, %cst_98 {dimension_numbers = #tpu.dot_dimension_numbers<[1], [0], [0], [1], [0, 0, 1, 1], [], []>} : vector<32x128xbf16>, vector<128x128xbf16>, vector<32x128xf32> -> vector<32x128xf32>
    %c1_99 = arith.constant 1 : index
    %c0_100 = arith.constant 0 : index
    %c0_101 = arith.constant 0 : index
    %249 = vector.load %arg11[%c1_99, %c0_100, %c0_101] : memref<2x1x128xf32, #tpu.memory_space<vmem>>, vector<1x1x128xf32>
    %250 = vector.shape_cast %249 : vector<1x1x128xf32> to vector<1x128xf32>
    %251 = vector.broadcast %250 : vector<1x128xf32> to vector<32x128xf32>
    %252 = arith.addf %248, %251 : vector<32x128xf32>
    %253 = arith.addf %252, %191 : vector<32x128xf32>
    %c1_102 = arith.constant 1 : index
    %c0_103 = arith.constant 0 : index
    %c0_104 = arith.constant 0 : index
    %254 = vector.load %arg12[%c1_102, %c0_103, %c0_104] : memref<2x1x128xf32, #tpu.memory_space<vmem>>, vector<1x1x128xf32>
    %255 = vector.shape_cast %254 : vector<1x1x128xf32> to vector<1x128xf32>
    %c1_105 = arith.constant 1 : index
    %c0_106 = arith.constant 0 : index
    %c0_107 = arith.constant 0 : index
    %256 = vector.load %arg13[%c1_105, %c0_106, %c0_107] : memref<2x1x128xf32, #tpu.memory_space<vmem>>, vector<1x1x128xf32>
    %257 = vector.shape_cast %256 : vector<1x1x128xf32> to vector<1x128xf32>
    %cst_108 = arith.constant dense<0.000000e+00> : vector<32xf32>
    %258 = vector.multi_reduction <add>, %253, %cst_108 [1] : vector<32x128xf32> to vector<32xf32>
    %259 = vector.shape_cast %258 : vector<32xf32> to vector<32x1xf32>
    %cst_109 = arith.constant 1.280000e+02 : f32
    %260 = vector.broadcast %cst_109 : f32 to vector<32x1xf32>
    %261 = arith.divf %259, %260 : vector<32x1xf32>
    %262 = vector.broadcast %261 : vector<32x1xf32> to vector<32x128xf32>
    %263 = arith.subf %253, %262 : vector<32x128xf32>
    %264 = arith.mulf %263, %263 : vector<32x128xf32>
    %cst_110 = arith.constant dense<0.000000e+00> : vector<32xf32>
    %265 = vector.multi_reduction <add>, %264, %cst_110 [1] : vector<32x128xf32> to vector<32xf32>
    %266 = vector.shape_cast %265 : vector<32xf32> to vector<32x1xf32>
    %cst_111 = arith.constant 1.280000e+02 : f32
    %267 = vector.broadcast %cst_111 : f32 to vector<32x1xf32>
    %268 = arith.divf %266, %267 : vector<32x1xf32>
    %cst_112 = arith.constant 9.99999996E-13 : f32
    %269 = vector.broadcast %cst_112 : f32 to vector<32x1xf32>
    %270 = arith.addf %268, %269 : vector<32x1xf32>
    %271 = math.rsqrt %270 : vector<32x1xf32>
    %272 = vector.broadcast %271 : vector<32x1xf32> to vector<32x128xf32>
    %273 = arith.mulf %263, %272 : vector<32x128xf32>
    %274 = vector.broadcast %255 : vector<1x128xf32> to vector<32x128xf32>
    %275 = arith.mulf %273, %274 : vector<32x128xf32>
    %276 = vector.broadcast %257 : vector<1x128xf32> to vector<32x128xf32>
    %277 = arith.addf %275, %276 : vector<32x128xf32>
    %278 = arith.truncf %277 : vector<32x128xf32> to vector<32x128xbf16>
    %c1_113 = arith.constant 1 : index
    %c0_114 = arith.constant 0 : index
    %c0_115 = arith.constant 0 : index
    %279 = vector.load %arg14[%c1_113, %c0_114, %c0_115] : memref<2x128x256xbf16, #tpu.memory_space<vmem>>, vector<1x128x256xbf16>
    %280 = vector.shape_cast %279 : vector<1x128x256xbf16> to vector<128x256xbf16>
    %cst_116 = arith.constant dense<0.000000e+00> : vector<32x256xf32>
    %281 = tpu.matmul %278, %280, %cst_116 {dimension_numbers = #tpu.dot_dimension_numbers<[1], [0], [0], [1], [0, 0, 1, 1], [], []>} : vector<32x128xbf16>, vector<128x256xbf16>, vector<32x256xf32> -> vector<32x256xf32>
    %c1_117 = arith.constant 1 : index
    %c0_118 = arith.constant 0 : index
    %c0_119 = arith.constant 0 : index
    %282 = vector.load %arg15[%c1_117, %c0_118, %c0_119] : memref<2x1x256xf32, #tpu.memory_space<vmem>>, vector<1x1x256xf32>
    %283 = vector.shape_cast %282 : vector<1x1x256xf32> to vector<1x256xf32>
    %284 = vector.broadcast %283 : vector<1x256xf32> to vector<32x256xf32>
    %285 = arith.addf %281, %284 : vector<32x256xf32>
    %286 = arith.mulf %285, %285 : vector<32x256xf32>
    %287 = arith.mulf %285, %286 : vector<32x256xf32>
    %cst_120 = arith.constant 4.471500e-02 : f32
    %288 = vector.broadcast %cst_120 : f32 to vector<32x256xf32>
    %289 = arith.mulf %288, %287 : vector<32x256xf32>
    %290 = arith.addf %285, %289 : vector<32x256xf32>
    %cst_121 = arith.constant 0.797884583 : f32
    %291 = vector.broadcast %cst_121 : f32 to vector<32x256xf32>
    %292 = arith.mulf %291, %290 : vector<32x256xf32>
    %293 = math.tanh %292 : vector<32x256xf32>
    %cst_122 = arith.constant 1.000000e+00 : f32
    %294 = vector.broadcast %cst_122 : f32 to vector<32x256xf32>
    %295 = arith.addf %294, %293 : vector<32x256xf32>
    %cst_123 = arith.constant 5.000000e-01 : f32
    %296 = vector.broadcast %cst_123 : f32 to vector<32x256xf32>
    %297 = arith.mulf %296, %295 : vector<32x256xf32>
    %298 = arith.mulf %285, %297 : vector<32x256xf32>
    %299 = arith.truncf %298 : vector<32x256xf32> to vector<32x256xbf16>
    %c1_124 = arith.constant 1 : index
    %c0_125 = arith.constant 0 : index
    %c0_126 = arith.constant 0 : index
    %300 = vector.load %arg16[%c1_124, %c0_125, %c0_126] : memref<2x256x128xbf16, #tpu.memory_space<vmem>>, vector<1x256x128xbf16>
    %301 = vector.shape_cast %300 : vector<1x256x128xbf16> to vector<256x128xbf16>
    %cst_127 = arith.constant dense<0.000000e+00> : vector<32x128xf32>
    %302 = tpu.matmul %299, %301, %cst_127 {dimension_numbers = #tpu.dot_dimension_numbers<[1], [0], [0], [1], [0, 0, 1, 1], [], []>} : vector<32x256xbf16>, vector<256x128xbf16>, vector<32x128xf32> -> vector<32x128xf32>
    %c1_128 = arith.constant 1 : index
    %c0_129 = arith.constant 0 : index
    %c0_130 = arith.constant 0 : index
    %303 = vector.load %arg17[%c1_128, %c0_129, %c0_130] : memref<2x1x128xf32, #tpu.memory_space<vmem>>, vector<1x1x128xf32>
    %304 = vector.shape_cast %303 : vector<1x1x128xf32> to vector<1x128xf32>
    %305 = vector.broadcast %304 : vector<1x128xf32> to vector<32x128xf32>
    %306 = arith.addf %302, %305 : vector<32x128xf32>
    %307 = arith.addf %306, %277 : vector<32x128xf32>
    %c1_131 = arith.constant 1 : index
    %c0_132 = arith.constant 0 : index
    %c0_133 = arith.constant 0 : index
    %308 = vector.load %arg18[%c1_131, %c0_132, %c0_133] : memref<2x1x128xf32, #tpu.memory_space<vmem>>, vector<1x1x128xf32>
    %309 = vector.shape_cast %308 : vector<1x1x128xf32> to vector<1x128xf32>
    %c1_134 = arith.constant 1 : index
    %c0_135 = arith.constant 0 : index
    %c0_136 = arith.constant 0 : index
    %310 = vector.load %arg19[%c1_134, %c0_135, %c0_136] : memref<2x1x128xf32, #tpu.memory_space<vmem>>, vector<1x1x128xf32>
    %311 = vector.shape_cast %310 : vector<1x1x128xf32> to vector<1x128xf32>
    %cst_137 = arith.constant dense<0.000000e+00> : vector<32xf32>
    %312 = vector.multi_reduction <add>, %307, %cst_137 [1] : vector<32x128xf32> to vector<32xf32>
    %313 = vector.shape_cast %312 : vector<32xf32> to vector<32x1xf32>
    %cst_138 = arith.constant 1.280000e+02 : f32
    %314 = vector.broadcast %cst_138 : f32 to vector<32x1xf32>
    %315 = arith.divf %313, %314 : vector<32x1xf32>
    %316 = vector.broadcast %315 : vector<32x1xf32> to vector<32x128xf32>
    %317 = arith.subf %307, %316 : vector<32x128xf32>
    %318 = arith.mulf %317, %317 : vector<32x128xf32>
    %cst_139 = arith.constant dense<0.000000e+00> : vector<32xf32>
    %319 = vector.multi_reduction <add>, %318, %cst_139 [1] : vector<32x128xf32> to vector<32xf32>
    %320 = vector.shape_cast %319 : vector<32xf32> to vector<32x1xf32>
    %cst_140 = arith.constant 1.280000e+02 : f32
    %321 = vector.broadcast %cst_140 : f32 to vector<32x1xf32>
    %322 = arith.divf %320, %321 : vector<32x1xf32>
    %cst_141 = arith.constant 9.99999996E-13 : f32
    %323 = vector.broadcast %cst_141 : f32 to vector<32x1xf32>
    %324 = arith.addf %322, %323 : vector<32x1xf32>
    %325 = math.rsqrt %324 : vector<32x1xf32>
    %326 = vector.broadcast %325 : vector<32x1xf32> to vector<32x128xf32>
    %327 = arith.mulf %317, %326 : vector<32x128xf32>
    %328 = vector.broadcast %309 : vector<1x128xf32> to vector<32x128xf32>
    %329 = arith.mulf %327, %328 : vector<32x128xf32>
    %330 = vector.broadcast %311 : vector<1x128xf32> to vector<32x128xf32>
    %331 = arith.addf %329, %330 : vector<32x128xf32>
    %332 = vector.extract_strided_slice %331 {offsets = [0, 0], sizes = [1, 128], strides = [1, 1]} : vector<32x128xf32> to vector<1x128xf32>
    %333 = arith.truncf %332 : vector<1x128xf32> to vector<1x128xbf16>
    %c0_142 = arith.constant 0 : index
    %c0_143 = arith.constant 0 : index
    %334 = vector.load %arg20[%c0_142, %c0_143] : memref<128x128xbf16, #tpu.memory_space<vmem>>, vector<128x128xbf16>
    %cst_144 = arith.constant dense<0.000000e+00> : vector<1x128xf32>
    %335 = tpu.matmul %333, %334, %cst_144 {dimension_numbers = #tpu.dot_dimension_numbers<[1], [0], [0], [1], [0, 0, 1, 1], [], []>} : vector<1x128xbf16>, vector<128x128xbf16>, vector<1x128xf32> -> vector<1x128xf32>
    %c0_145 = arith.constant 0 : index
    %c0_146 = arith.constant 0 : index
    %336 = vector.load %arg21[%c0_145, %c0_146] : memref<1x128xf32, #tpu.memory_space<vmem>>, vector<1x128xf32>
    %337 = arith.addf %335, %336 : vector<1x128xf32>
    %338 = math.tanh %337 : vector<1x128xf32>
    %339 = arith.truncf %338 : vector<1x128xf32> to vector<1x128xbf16>
    %c0_147 = arith.constant 0 : index
    %c0_148 = arith.constant 0 : index
    %340 = vector.load %arg22[%c0_147, %c0_148] : memref<128x128xbf16, #tpu.memory_space<vmem>>, vector<128x128xbf16>
    %cst_149 = arith.constant dense<0.000000e+00> : vector<1x128xf32>
    %341 = tpu.matmul %339, %340, %cst_149 {dimension_numbers = #tpu.dot_dimension_numbers<[1], [0], [0], [1], [0, 0, 1, 1], [], []>} : vector<1x128xbf16>, vector<128x128xbf16>, vector<1x128xf32> -> vector<1x128xf32>
    %c0_150 = arith.constant 0 : index
    %c0_151 = arith.constant 0 : index
    %342 = vector.load %arg23[%c0_150, %c0_151] : memref<1x128xf32, #tpu.memory_space<vmem>>, vector<1x128xf32>
    %343 = arith.addf %341, %342 : vector<1x128xf32>
    %c0_152 = arith.constant 0 : index
    %c0_153 = arith.constant 0 : index
    %344 = vector.load %arg24[%c0_152, %c0_153] : memref<2x128xf32, #tpu.memory_space<vmem>>, vector<1x128xf32>
    tpu.vector_store %arg24[%c0_152, %c0_153], %343 {strides = array<i32>} : memref<2x128xf32, #tpu.memory_space<vmem>>, vector<1x128xf32>,
    %345 = vector.extract_strided_slice %331 {offsets = [16, 0], sizes = [1, 128], strides = [1, 1]} : vector<32x128xf32> to vector<1x128xf32>
    %346 = arith.truncf %345 : vector<1x128xf32> to vector<1x128xbf16>
    %c0_154 = arith.constant 0 : index
    %c0_155 = arith.constant 0 : index
    %347 = vector.load %arg20[%c0_154, %c0_155] : memref<128x128xbf16, #tpu.memory_space<vmem>>, vector<128x128xbf16>
    %cst_156 = arith.constant dense<0.000000e+00> : vector<1x128xf32>
    %348 = tpu.matmul %346, %347, %cst_156 {dimension_numbers = #tpu.dot_dimension_numbers<[1], [0], [0], [1], [0, 0, 1, 1], [], []>} : vector<1x128xbf16>, vector<128x128xbf16>, vector<1x128xf32> -> vector<1x128xf32>
    %c0_157 = arith.constant 0 : index
    %c0_158 = arith.constant 0 : index
    %349 = vector.load %arg21[%c0_157, %c0_158] : memref<1x128xf32, #tpu.memory_space<vmem>>, vector<1x128xf32>
    %350 = arith.addf %348, %349 : vector<1x128xf32>
    %351 = math.tanh %350 : vector<1x128xf32>
    %352 = arith.truncf %351 : vector<1x128xf32> to vector<1x128xbf16>
    %c0_159 = arith.constant 0 : index
    %c0_160 = arith.constant 0 : index
    %353 = vector.load %arg22[%c0_159, %c0_160] : memref<128x128xbf16, #tpu.memory_space<vmem>>, vector<128x128xbf16>
    %cst_161 = arith.constant dense<0.000000e+00> : vector<1x128xf32>
    %354 = tpu.matmul %352, %353, %cst_161 {dimension_numbers = #tpu.dot_dimension_numbers<[1], [0], [0], [1], [0, 0, 1, 1], [], []>} : vector<1x128xbf16>, vector<128x128xbf16>, vector<1x128xf32> -> vector<1x128xf32>
    %c0_162 = arith.constant 0 : index
    %c0_163 = arith.constant 0 : index
    %355 = vector.load %arg23[%c0_162, %c0_163] : memref<1x128xf32, #tpu.memory_space<vmem>>, vector<1x128xf32>
    %356 = arith.addf %354, %355 : vector<1x128xf32>
    %c1_164 = arith.constant 1 : index
    %c0_165 = arith.constant 0 : index
    %357 = vector.load %arg24[%c1_164, %c0_165] : memref<2x128xf32, #tpu.memory_space<vmem>>, vector<1x128xf32>
    tpu.vector_store %arg24[%c1_164, %c0_165], %356 {strides = array<i32>} : memref<2x128xf32, #tpu.memory_space<vmem>>, vector<1x128xf32>,
    return
  }
  func.func @transform_0(%arg0: i32) -> (i32, i32) {
    %c0_i32 = arith.constant 0 : i32
    %c0_i32_0 = arith.constant 0 : i32
    %c0_i32_1 = arith.constant 0 : i32
    return %c0_i32, %c0_i32_0 : i32, i32
  }
  func.func @transform_1(%arg0: i32) -> (i32, i32) {
    %c0_i32 = arith.constant 0 : i32
    %c0_i32_0 = arith.constant 0 : i32
    %c0_i32_1 = arith.constant 0 : i32
    return %c0_i32, %c0_i32_0 : i32, i32
  }
  func.func @transform_2(%arg0: i32) -> (i32, i32) {
    %c0_i32 = arith.constant 0 : i32
    %c0_i32_0 = arith.constant 0 : i32
    %c0_i32_1 = arith.constant 0 : i32
    return %c0_i32, %c0_i32_0 : i32, i32
  }
  func.func @transform_3(%arg0: i32) -> (i32, i32) {
    %c0_i32 = arith.constant 0 : i32
    %c0_i32_0 = arith.constant 0 : i32
    %c0_i32_1 = arith.constant 0 : i32
    return %c0_i32, %c0_i32_0 : i32, i32
  }
  func.func @transform_4(%arg0: i32) -> (i32, i32) {
    %c0_i32 = arith.constant 0 : i32
    %c0_i32_0 = arith.constant 0 : i32
    %c0_i32_1 = arith.constant 0 : i32
    return %c0_i32, %c0_i32_0 : i32, i32
  }
  func.func @transform_5(%arg0: i32) -> (i32, i32) {
    %c0_i32 = arith.constant 0 : i32
    %c0_i32_0 = arith.constant 0 : i32
    %c0_i32_1 = arith.constant 0 : i32
    return %c0_i32, %c0_i32_0 : i32, i32
  }
  func.func @transform_6(%arg0: i32) -> (i32, i32) {
    %c0_i32 = arith.constant 0 : i32
    %c0_i32_0 = arith.constant 0 : i32
    %c0_i32_1 = arith.constant 0 : i32
    return %c0_i32, %c0_i32_0 : i32, i32
  }
  func.func @transform_7(%arg0: i32) -> (i32, i32, i32) {
    %c0_i32 = arith.constant 0 : i32
    %c0_i32_0 = arith.constant 0 : i32
    %c0_i32_1 = arith.constant 0 : i32
    %c0_i32_2 = arith.constant 0 : i32
    return %c0_i32, %c0_i32_0, %c0_i32_1 : i32, i32, i32
  }
  func.func @transform_8(%arg0: i32) -> (i32, i32, i32) {
    %c0_i32 = arith.constant 0 : i32
    %c0_i32_0 = arith.constant 0 : i32
    %c0_i32_1 = arith.constant 0 : i32
    %c0_i32_2 = arith.constant 0 : i32
    return %c0_i32, %c0_i32_0, %c0_i32_1 : i32, i32, i32
  }
  func.func @transform_9(%arg0: i32) -> (i32, i32, i32) {
    %c0_i32 = arith.constant 0 : i32
    %c0_i32_0 = arith.constant 0 : i32
    %c0_i32_1 = arith.constant 0 : i32
    %c0_i32_2 = arith.constant 0 : i32
    return %c0_i32, %c0_i32_0, %c0_i32_1 : i32, i32, i32
  }
  func.func @transform_10(%arg0: i32) -> (i32, i32, i32) {
    %c0_i32 = arith.constant 0 : i32
    %c0_i32_0 = arith.constant 0 : i32
    %c0_i32_1 = arith.constant 0 : i32
    %c0_i32_2 = arith.constant 0 : i32
    return %c0_i32, %c0_i32_0, %c0_i32_1 : i32, i32, i32
  }
  func.func @transform_11(%arg0: i32) -> (i32, i32, i32) {
    %c0_i32 = arith.constant 0 : i32
    %c0_i32_0 = arith.constant 0 : i32
    %c0_i32_1 = arith.constant 0 : i32
    %c0_i32_2 = arith.constant 0 : i32
    return %c0_i32, %c0_i32_0, %c0_i32_1 : i32, i32, i32
  }
  func.func @transform_12(%arg0: i32) -> (i32, i32, i32) {
    %c0_i32 = arith.constant 0 : i32
    %c0_i32_0 = arith.constant 0 : i32
    %c0_i32_1 = arith.constant 0 : i32
    %c0_i32_2 = arith.constant 0 : i32
    return %c0_i32, %c0_i32_0, %c0_i32_1 : i32, i32, i32
  }
  func.func @transform_13(%arg0: i32) -> (i32, i32, i32) {
    %c0_i32 = arith.constant 0 : i32
    %c0_i32_0 = arith.constant 0 : i32
    %c0_i32_1 = arith.constant 0 : i32
    %c0_i32_2 = arith.constant 0 : i32
    return %c0_i32, %c0_i32_0, %c0_i32_1 : i32, i32, i32
  }
  func.func @transform_14(%arg0: i32) -> (i32, i32, i32) {
    %c0_i32 = arith.constant 0 : i32
    %c0_i32_0 = arith.constant 0 : i32
    %c0_i32_1 = arith.constant 0 : i32
    %c0_i32_2 = arith.constant 0 : i32
    return %c0_i32, %c0_i32_0, %c0_i32_1 : i32, i32, i32
  }
  func.func @transform_15(%arg0: i32) -> (i32, i32, i32) {
    %c0_i32 = arith.constant 0 : i32
    %c0_i32_0 = arith.constant 0 : i32
    %c0_i32_1 = arith.constant 0 : i32
    %c0_i32_2 = arith.constant 0 : i32
    return %c0_i32, %c0_i32_0, %c0_i32_1 : i32, i32, i32
  }
  func.func @transform_16(%arg0: i32) -> (i32, i32, i32) {
    %c0_i32 = arith.constant 0 : i32
    %c0_i32_0 = arith.constant 0 : i32
    %c0_i32_1 = arith.constant 0 : i32
    %c0_i32_2 = arith.constant 0 : i32
    return %c0_i32, %c0_i32_0, %c0_i32_1 : i32, i32, i32
  }
  func.func @transform_17(%arg0: i32) -> (i32, i32, i32) {
    %c0_i32 = arith.constant 0 : i32
    %c0_i32_0 = arith.constant 0 : i32
    %c0_i32_1 = arith.constant 0 : i32
    %c0_i32_2 = arith.constant 0 : i32
    return %c0_i32, %c0_i32_0, %c0_i32_1 : i32, i32, i32
  }
  func.func @transform_18(%arg0: i32) -> (i32, i32, i32) {
    %c0_i32 = arith.constant 0 : i32
    %c0_i32_0 = arith.constant 0 : i32
    %c0_i32_1 = arith.constant 0 : i32
    %c0_i32_2 = arith.constant 0 : i32
    return %c0_i32, %c0_i32_0, %c0_i32_1 : i32, i32, i32
  }
  func.func @transform_19(%arg0: i32) -> (i32, i32) {
    %c0_i32 = arith.constant 0 : i32
    %c0_i32_0 = arith.constant 0 : i32
    %c0_i32_1 = arith.constant 0 : i32
    return %c0_i32, %c0_i32_0 : i32, i32
  }
  func.func @transform_20(%arg0: i32) -> (i32, i32) {
    %c0_i32 = arith.constant 0 : i32
    %c0_i32_0 = arith.constant 0 : i32
    %c0_i32_1 = arith.constant 0 : i32
    return %c0_i32, %c0_i32_0 : i32, i32
  }
  func.func @transform_21(%arg0: i32) -> (i32, i32) {
    %c0_i32 = arith.constant 0 : i32
    %c0_i32_0 = arith.constant 0 : i32
    %c0_i32_1 = arith.constant 0 : i32
    return %c0_i32, %c0_i32_0 : i32, i32
  }
  func.func @transform_22(%arg0: i32) -> (i32, i32) {
    %c0_i32 = arith.constant 0 : i32
    %c0_i32_0 = arith.constant 0 : i32
    %c0_i32_1 = arith.constant 0 : i32
    return %c0_i32, %c0_i32_0 : i32, i32
  }
  func.func @transform_23(%arg0: i32) -> (i32, i32) {
    %c0_i32 = arith.constant 0 : i32
    %c0_i32_0 = arith.constant 0 : i32
    %c0_i32_1 = arith.constant 0 : i32
    return %c0_i32, %c0_i32_0 : i32, i32
  }
}

</mosaic_0001>

<llo_original>
// kernel: eq.8
$region0: #{eq.8}
  %s0 = inlined_call_operand.vmem [shape: s32[2,16], index: 0, kind: input, shape index: {}]
  %s1 = inlined_call_operand.vmem [shape: s32[32], index: 1, kind: output, shape index: {}]
  $region1: #{eq.8} parent=0
    #allocation0 [shape = 'u8[4096]{0}', space=vmem, size = 0x1000, scoped, tag = 'scoped mem for output reshape']
    #allocation1 [shape = 'u8[4096]{0}', space=vmem, size = 0x1000, scoped, tag = 'scoped mem for input reshape']
    %s3 = sshll.u32 1, 2
    %s4 = ssub.s32 %s3, 1
    %v5 = vld [vmem:[%s0] sm:%s4]
    %6 = vst [vmem:[#allocation1] sm:%s4] %v5
    %v7 = vld [vmem:[#allocation1] sm:$0x1]
    %vm8 = vcmask 130048
    %9 = vst.msk [vmem:[#allocation0] sm:$0x1] %vm8, %v7
    %s10 = scalar_lea.vmem [#allocation1], 1
    %v11 = vld [vmem:[%s10] sm:$0x1]
    %12 = vrot.lane.b32.xlu0 %v11, 16
    %v13 = vpop.permute.xlu0 %12
    %vm14 = vcmask 261248
    %15 = vst.msk [vmem:[#allocation0] sm:$0x1] %vm14, %v13
    %s17 = sshll.u32 1, 1
    %s18 = ssub.s32 %s17, 1
    %v20 = vld [vmem:[#allocation0] sm:%s18]
    %s21 = sshll.u32 1, 1
    %s22 = ssub.s32 %s21, 1
    %23 = vst [vmem:[%s1] sm:%s22] %v20

// kernel: forward.1
$region0: #{forward.1}
  #allocation0 [shape = 'u32[]', space=smem, size = 0x4, offset = 0x4, fixed_abs, tag = 'smem constant byte address 0x4 - core index']
  #allocation1 [shape = 'u32[144,128]{1,0:T(1,128)}', space=vmem, size = 0x12000, scoped, tag = 'internal scratch']
  %s0 = inlined_call_operand.vmem [shape: s32[32,1], index: 0, kind: input, shape index: {}]
  %s1 = inlined_call_operand.vmem [shape: f32[32,32], index: 1, kind: input, shape index: {}]
  %s2 = inlined_call_operand.hbm [shape: f32[128,128], index: 2, kind: input, shape index: {}]
  %s3 = inlined_call_operand.vmem [shape: f32[64,128], index: 3, kind: input, shape index: {}]
  %s4 = inlined_call_operand.vmem [shape: f32[2,128], index: 4, kind: input, shape index: {}]
  %s5 = inlined_call_operand.vmem [shape: f32[1,128], index: 5, kind: input, shape index: {}]
  %s6 = inlined_call_operand.vmem [shape: f32[1,128], index: 6, kind: input, shape index: {}]
  %s7 = inlined_call_operand.hbm [shape: bf16[2,128,384], index: 7, kind: input, shape index: {}]
  %s8 = inlined_call_operand.vmem [shape: f32[2,1,384], index: 8, kind: input, shape index: {}]
  %s9 = inlined_call_operand.hbm [shape: bf16[2,128,128], index: 9, kind: input, shape index: {}]
  %s10 = inlined_call_operand.vmem [shape: f32[2,1,128], index: 10, kind: input, shape index: {}]
  %s11 = inlined_call_operand.vmem [shape: f32[2,1,128], index: 11, kind: input, shape index: {}]
  %s12 = inlined_call_operand.vmem [shape: f32[2,1,128], index: 12, kind: input, shape index: {}]
  %s13 = inlined_call_operand.hbm [shape: bf16[2,128,256], index: 13, kind: input, shape index: {}]
  %s14 = inlined_call_operand.vmem [shape: f32[2,1,256], index: 14, kind: input, shape index: {}]
  %s15 = inlined_call_operand.hbm [shape: bf16[2,256,128], index: 15, kind: input, shape index: {}]
  %s16 = inlined_call_operand.vmem [shape: f32[2,1,128], index: 16, kind: input, shape index: {}]
  %s17 = inlined_call_operand.vmem [shape: f32[2,1,128], index: 17, kind: input, shape index: {}]
  %s18 = inlined_call_operand.vmem [shape: f32[2,1,128], index: 18, kind: input, shape index: {}]
  %s19 = inlined_call_operand.hbm [shape: bf16[128,128], index: 19, kind: input, shape index: {}]
  %s20 = inlined_call_operand.vmem [shape: f32[1,128], index: 20, kind: input, shape index: {}]
  %s21 = inlined_call_operand.hbm [shape: bf16[128,128], index: 21, kind: input, shape index: {}]
  %s22 = inlined_call_operand.vmem [shape: f32[1,128], index: 22, kind: input, shape index: {}]
  %s23 = inlined_call_operand.vmem [shape: f32[2,128], index: 23, kind: output, shape index: {}]
  %s24 = sld [smem:[#allocation0]]
  $region130: #{forward.1} parent=0
    _
  %s26 = ssub.s32 1, %s24
  %s27 = scalar_select 0, %s26, %s24
  $region1: #{forward.1} parent=0
    #allocation2 [shape = 'u8[65536]{0}', space=vmem, size = 0x10000, scoped, tag = 'input window, operand 2, single buffered']
    #allocation3 [shape = 's32[1]{0}', space=sflag, size = 0x4, scoped, tag = 'scoped memory for forward.1']
    #allocation4 [shape = 'u8[196608]{0}', space=vmem, size = 0x30000, scoped, tag = 'input window, operand 7, single buffered']
    #allocation5 [shape = 's32[1]{0}', space=sflag, size = 0x4, scoped, tag = 'scoped memory for forward.1']
    #allocation6 [shape = 'u8[65536]{0}', space=vmem, size = 0x10000, scoped, tag = 'input window, operand 9, single buffered']
    #allocation7 [shape = 'u8[131072]{0}', space=vmem, size = 0x20000, scoped, tag = 'input window, operand 13, single buffered']
    #allocation8 [shape = 's32[1]{0}', space=sflag, size = 0x4, scoped, tag = 'scoped memory for forward.1']
    #allocation9 [shape = 'u8[131072]{0}', space=vmem, size = 0x20000, scoped, tag = 'input window, operand 15, single buffered']
    #allocation10 [shape = 'u8[32768]{0}', space=vmem, size = 0x8000, scoped, tag = 'input window, operand 19, single buffered']
    #allocation11 [shape = 's32[1]{0}', space=sflag, size = 0x4, scoped, tag = 'scoped memory for forward.1']
    #allocation12 [shape = 'u8[32768]{0}', space=vmem, size = 0x8000, scoped, tag = 'input window, operand 21, single buffered']
    %28 = vsyncpa [#allocation3], 0
    %29 = vsyncpa [#allocation5], 0
    %30 = vsyncpa [#allocation8], 0
    %31 = vsyncpa [#allocation11], 0
    // Predicated region
    $region2: #{forward.1} parent=1 // pred_check
      _
    $region3: #{forward.1} parent=1 // pred_check_branch
      %33 = sbr.rel (0) target = $region5
    $region4: #{forward.1} parent=1 // pred_region
      _
    $region5: #{forward.1} parent=1 // pred_fallthru
      _
    // Predicated region
    $region6: #{forward.1} parent=1 // pred_check
      _
    $region7: #{forward.1} parent=1 // pred_check_branch
      %35 = sbr.rel (0) target = $region9
    $region8: #{forward.1} parent=1 // pred_region
      _
    $region9: #{forward.1} parent=1 // pred_fallthru
      _
    // Predicated region
    $region10: #{forward.1} parent=1 // pred_check
      _
    $region11: #{forward.1} parent=1 // pred_check_branch
      %37 = sbr.rel (0) target = $region13
    $region12: #{forward.1} parent=1 // pred_region
      %s39 = ssub.s32 2048, 2048
      %40 = vsyncadd [#allocation3], %s39
      %s41 = sshll.u32 [#allocation2], 4
      %s42 = int_to_ptr.vmem [resolvable:$true] %s41
      %47 = dma.hbm_to_vmem [thread:$0]  %s2, 2048, %s42, [#allocation3], 128, 128, 8
    $region13: #{forward.1} parent=1 // pred_fallthru
      _
    // Predicated region
    $region14: #{forward.1} parent=1 // pred_check
      _
    $region15: #{forward.1} parent=1 // pred_check_branch
      %49 = sbr.rel (0) target = $region17
    $region16: #{forward.1} parent=1 // pred_region
      _
    $region17: #{forward.1} parent=1 // pred_fallthru
      _
    // Predicated region
    $region18: #{forward.1} parent=1 // pred_check
      _
    $region19: #{forward.1} parent=1 // pred_check_branch
      %51 = sbr.rel (0) target = $region21
    $region20: #{forward.1} parent=1 // pred_region
      _
    $region21: #{forward.1} parent=1 // pred_fallthru
      _
    // Predicated region
    $region22: #{forward.1} parent=1 // pred_check
      _
    $region23: #{forward.1} parent=1 // pred_check_branch
      %53 = sbr.rel (0) target = $region25
    $region24: #{forward.1} parent=1 // pred_region
      _
    $region25: #{forward.1} parent=1 // pred_fallthru
      _
    // Predicated region
    $region26: #{forward.1} parent=1 // pred_check
      _
    $region27: #{forward.1} parent=1 // pred_check_branch
      %55 = sbr.rel (0) target = $region29
    $region28: #{forward.1} parent=1 // pred_region
      _
    $region29: #{forward.1} parent=1 // pred_fallthru
      _
    // Predicated region
    $region30: #{forward.1} parent=1 // pred_check
      _
    $region31: #{forward.1} parent=1 // pred_check_branch
      %57 = sbr.rel (0) target = $region33
    $region32: #{forward.1} parent=1 // pred_region
      %s59 = ssub.s32 6144, 6144
      %60 = vsyncadd [#allocation5], %s59
      %s61 = sshll.u32 [#allocation4], 4
      %s62 = int_to_ptr.vmem [resolvable:$true] %s61
      %67 = dma.hbm_to_vmem [thread:$0]  %s7, 6144, %s62, [#allocation5], 192, 192, 12
    $region33: #{forward.1} parent=1 // pred_fallthru
      _
    // Predicated region
    $region34: #{forward.1} parent=1 // pred_check
      _
    $region35: #{forward.1} parent=1 // pred_check_branch
      %69 = sbr.rel (0) target = $region37
    $region36: #{forward.1} parent=1 // pred_region
      _
    $region37: #{forward.1} parent=1 // pred_fallthru
      _
    // Predicated region
    $region38: #{forward.1} parent=1 // pred_check
      _
    $region39: #{forward.1} parent=1 // pred_check_branch
      %71 = sbr.rel (0) target = $region41
    $region40: #{forward.1} parent=1 // pred_region
      %s73 = ssub.s32 2048, 2048
      %74 = vsyncadd [#allocation5], %s73
      %s75 = sshll.u32 [#allocation6], 4
      %s76 = int_to_ptr.vmem [resolvable:$true] %s75
      %81 = dma.hbm_to_vmem [thread:$0]  %s9, 2048, %s76, [#allocation5], 64, 64, 4
    $region41: #{forward.1} parent=1 // pred_fallthru
      _
    // Predicated region
    $region42: #{forward.1} parent=1 // pred_check
      _
    $region43: #{forward.1} parent=1 // pred_check_branch
      %83 = sbr.rel (0) target = $region45
    $region44: #{forward.1} parent=1 // pred_region
      _
    $region45: #{forward.1} parent=1 // pred_fallthru
      _
    // Predicated region
    $region46: #{forward.1} parent=1 // pred_check
      _
    $region47: #{forward.1} parent=1 // pred_check_branch
      %85 = sbr.rel (0) target = $region49
    $region48: #{forward.1} parent=1 // pred_region
      _
    $region49: #{forward.1} parent=1 // pred_fallthru
      _
    // Predicated region
    $region50: #{forward.1} parent=1 // pred_check
      _
    $region51: #{forward.1} parent=1 // pred_check_branch
      %87 = sbr.rel (0) target = $region53
    $region52: #{forward.1} parent=1 // pred_region
      _
    $region53: #{forward.1} parent=1 // pred_fallthru
      _
    // Predicated region
    $region54: #{forward.1} parent=1 // pred_check
      _
    $region55: #{forward.1} parent=1 // pred_check_branch
      %89 = sbr.rel (0) target = $region57
    $region56: #{forward.1} parent=1 // pred_region
      %s91 = ssub.s32 4096, 4096
      %92 = vsyncadd [#allocation8], %s91
      %s93 = sshll.u32 [#allocation7], 4
      %s94 = int_to_ptr.vmem [resolvable:$true] %s93
      %99 = dma.hbm_to_vmem [thread:$0]  %s13, 4096, %s94, [#allocation8], 128, 128, 8
    $region57: #{forward.1} parent=1 // pred_fallthru
      _
    // Predicated region
    $region58: #{forward.1} parent=1 // pred_check
      _
    $region59: #{forward.1} parent=1 // pred_check_branch
      %101 = sbr.rel (0) target = $region61
    $region60: #{forward.1} parent=1 // pred_region
      _
    $region61: #{forward.1} parent=1 // pred_fallthru
      _
    // Predicated region
    $region62: #{forward.1} parent=1 // pred_check
      _
    $region63: #{forward.1} parent=1 // pred_check_branch
      %103 = sbr.rel (0) target = $region65
    $region64: #{forward.1} parent=1 // pred_region
      %s105 = ssub.s32 4096, 4096
      %106 = vsyncadd [#allocation8], %s105
      %s107 = sshll.u32 [#allocation9], 4
      %s108 = int_to_ptr.vmem [resolvable:$true] %s107
      %113 = dma.hbm_to_vmem [thread:$0]  %s15, 4096, %s108, [#allocation8], 64, 64, 4
    $region65: #{forward.1} parent=1 // pred_fallthru
      _
    // Predicated region
    $region66: #{forward.1} parent=1 // pred_check
      _
    $region67: #{forward.1} parent=1 // pred_check_branch
      %115 = sbr.rel (0) target = $region69
    $region68: #{forward.1} parent=1 // pred_region
      _
    $region69: #{forward.1} parent=1 // pred_fallthru
      _
    // Predicated region
    $region70: #{forward.1} parent=1 // pred_check
      _
    $region71: #{forward.1} parent=1 // pred_check_branch
      %117 = sbr.rel (0) target = $region73
    $region72: #{forward.1} parent=1 // pred_region
      _
    $region73: #{forward.1} parent=1 // pred_fallthru
      _
    // Predicated region
    $region74: #{forward.1} parent=1 // pred_check
      _
    $region75: #{forward.1} parent=1 // pred_check_branch
      %119 = sbr.rel (0) target = $region77
    $region76: #{forward.1} parent=1 // pred_region
      _
    $region77: #{forward.1} parent=1 // pred_fallthru
      _
    // Predicated region
    $region78: #{forward.1} parent=1 // pred_check
      _
    $region79: #{forward.1} parent=1 // pred_check_branch
      %121 = sbr.rel (0) target = $region81
    $region80: #{forward.1} parent=1 // pred_region
      %s123 = ssub.s32 1024, 1024
      %124 = vsyncadd [#allocation11], %s123
      %s125 = sshll.u32 [#allocation10], 4
      %s126 = int_to_ptr.vmem [resolvable:$true] %s125
      %131 = dma.hbm_to_vmem [thread:$0]  %s19, 1024, %s126, [#allocation11], 64, 64, 4
    $region81: #{forward.1} parent=1 // pred_fallthru
      _
    // Predicated region
    $region82: #{forward.1} parent=1 // pred_check
      _
    $region83: #{forward.1} parent=1 // pred_check_branch
      %133 = sbr.rel (0) target = $region85
    $region84: #{forward.1} parent=1 // pred_region
      _
    $region85: #{forward.1} parent=1 // pred_fallthru
      _
    // Predicated region
    $region86: #{forward.1} parent=1 // pred_check
      _
    $region87: #{forward.1} parent=1 // pred_check_branch
      %135 = sbr.rel (0) target = $region89
    $region88: #{forward.1} parent=1 // pred_region
      %s137 = ssub.s32 1024, 1024
      %138 = vsyncadd [#allocation11], %s137
      %s139 = sshll.u32 [#allocation12], 4
      %s140 = int_to_ptr.vmem [resolvable:$true] %s139
      %145 = dma.hbm_to_vmem [thread:$0]  %s21, 1024, %s140, [#allocation11], 64, 64, 4
    $region89: #{forward.1} parent=1 // pred_fallthru
      _
    // Predicated region
    $region90: #{forward.1} parent=1 // pred_check
      _
    $region91: #{forward.1} parent=1 // pred_check_branch
      %147 = sbr.rel (0) target = $region93
    $region92: #{forward.1} parent=1 // pred_region
      _
    $region93: #{forward.1} parent=1 // pred_fallthru
      _
    // Predicated region
    $region94: #{forward.1} parent=1 // pred_check
      _
    $region95: #{forward.1} parent=1 // pred_check_branch
      %149 = sbr.rel (0) target = $region97
    $region96: #{forward.1} parent=1 // pred_region
      %150 = dma.done [#allocation3], 2048
    $region97: #{forward.1} parent=1 // pred_fallthru
      _
    // Predicated region
    $region98: #{forward.1} parent=1 // pred_check
      _
    $region99: #{forward.1} parent=1 // pred_check_branch
      %152 = sbr.rel (0) target = $region101
    $region100: #{forward.1} parent=1 // pred_region
      %153 = dma.done [#allocation5], 6144
    $region101: #{forward.1} parent=1 // pred_fallthru
      _
    // Predicated region
    $region102: #{forward.1} parent=1 // pred_check
      _
    $region103: #{forward.1} parent=1 // pred_check_branch
      %155 = sbr.rel (0) target = $region105
    $region104: #{forward.1} parent=1 // pred_region
      %156 = dma.done [#allocation5], 2048
    $region105: #{forward.1} parent=1 // pred_fallthru
      _
    // Predicated region
    $region106: #{forward.1} parent=1 // pred_check
      _
    $region107: #{forward.1} parent=1 // pred_check_branch
      %158 = sbr.rel (0) target = $region109
    $region108: #{forward.1} parent=1 // pred_region
      %159 = dma.done [#allocation8], 4096
    $region109: #{forward.1} parent=1 // pred_fallthru
      _
    // Predicated region
    $region110: #{forward.1} parent=1 // pred_check
      _
    $region111: #{forward.1} parent=1 // pred_check_branch
      %161 = sbr.rel (0) target = $region113
    $region112: #{forward.1} parent=1 // pred_region
      %162 = dma.done [#allocation8], 4096
    $region113: #{forward.1} parent=1 // pred_fallthru
      _
    // Predicated region
    $region114: #{forward.1} parent=1 // pred_check
      _
    $region115: #{forward.1} parent=1 // pred_check_branch
      %164 = sbr.rel (0) target = $region117
    $region116: #{forward.1} parent=1 // pred_region
      %165 = dma.done [#allocation11], 1024
    $region117: #{forward.1} parent=1 // pred_fallthru
      _
    // Predicated region
    $region118: #{forward.1} parent=1 // pred_check
      _
    $region119: #{forward.1} parent=1 // pred_check_branch
      %167 = sbr.rel (0) target = $region121
    $region120: #{forward.1} parent=1 // pred_region
      %168 = dma.done [#allocation11], 1024
    $region121: #{forward.1} parent=1 // pred_fallthru
      _
    %v170 = vld [vmem:[%s0] sm:$0xff]
    %v171 = vld [vmem:[%s0 + $0x8] sm:$0xff]
    %v172 = vld [vmem:[%s0 + $0x10] sm:$0xff]
    %v173 = vld [vmem:[%s0 + $0x18] sm:$0xff]
    %v174 = vlaneseq
    %v175 = vand.u32 %v174, 127
    %176 = vset.pattern.permute.xlu0 0
    %177 = vperm.xlu0 %176, %v170
    %v178 = vpop.permute.xlu0 %177
    %179 = vset.pattern.permute.xlu0 0
    %180 = vperm.xlu0 %179, %v171
    %v181 = vpop.permute.xlu0 %180
    %182 = vset.pattern.permute.xlu0 0
    %183 = vperm.xlu0 %182, %v172
    %v184 = vpop.permute.xlu0 %183
    %185 = vset.pattern.permute.xlu0 0
    %186 = vperm.xlu0 %185, %v173
    %v187 = vpop.permute.xlu0 %186
    %vm188 = vcmp.eq.s32.totalorder %v175, %v178
    %vm189 = vcmp.eq.s32.totalorder %v175, %v181
    %vm190 = vcmp.eq.s32.totalorder %v175, %v184
    %vm191 = vcmp.eq.s32.totalorder %v175, %v187
    %v192 = vsel %vm188, 1, 0
    %v193 = vsel %vm189, 1, 0
    %v194 = vsel %vm190, 1, 0
    %v195 = vsel %vm191, 1, 0
    %v196 = vcvt.s32.f32 %v192
    %v197 = vcvt.s32.f32 %v193
    %v198 = vcvt.s32.f32 %v194
    %v199 = vcvt.s32.f32 %v195
    %v200 = vld [vmem:[#allocation2] sm:$0xff]
    %v201 = vld [vmem:[#allocation2 + $0x8] sm:$0xff]
    %v202 = vld [vmem:[#allocation2 + $0x10] sm:$0xff]
    %v203 = vld [vmem:[#allocation2 + $0x18] sm:$0xff]
    %v204 = vld [vmem:[#allocation2 + $0x20] sm:$0xff]
    %v205 = vld [vmem:[#allocation2 + $0x28] sm:$0xff]
    %v206 = vld [vmem:[#allocation2 + $0x30] sm:$0xff]
    %v207 = vld [vmem:[#allocation2 + $0x38] sm:$0xff]
    %v208 = vld [vmem:[#allocation2 + $0x40] sm:$0xff]
    %v209 = vld [vmem:[#allocation2 + $0x48] sm:$0xff]
    %v210 = vld [vmem:[#allocation2 + $0x50] sm:$0xff]
    %v211 = vld [vmem:[#allocation2 + $0x58] sm:$0xff]
    %v212 = vld [vmem:[#allocation2 + $0x60] sm:$0xff]
    %v213 = vld [vmem:[#allocation2 + $0x68] sm:$0xff]
    %v214 = vld [vmem:[#allocation2 + $0x70] sm:$0xff]
    %v215 = vld [vmem:[#allocation2 + $0x78] sm:$0xff]
    %v216 = vld [vmem:[%s3] sm:$0xff]
    %v217 = vld [vmem:[%s3 + $0x8] sm:$0xff]
    %218 = vmatprep.subr.mxu0 0.0
    %219 = vmatpush1.msra.mxu0 %v215
    %220 = vmatprep.subr.mxu0 0.0
    %221 = vmatpush1.msra.mxu0 %v214
    %222 = vmatprep.subr.mxu0 0.0
    %223 = vmatpush1.msra.mxu0 %v213
    %224 = vmatprep.subr.mxu0 0.0
    %225 = vmatpush1.msra.mxu0 %v212
    %226 = vmatprep.subr.mxu0 0.0
    %227 = vmatpush1.msra.mxu0 %v211
    %228 = vmatprep.subr.mxu0 0.0
    %229 = vmatpush1.msra.mxu0 %v210
    %230 = vmatprep.subr.mxu0 0.0
    %231 = vmatpush1.msra.mxu0 %v209
    %232 = vmatprep.subr.mxu0 0.0
    %233 = vmatpush1.msra.mxu0 %v208
    %234 = vmatprep.subr.mxu0 0.0
    %235 = vmatpush1.msra.mxu0 %v207
    %236 = vmatprep.subr.mxu0 0.0
    %237 = vmatpush1.msra.mxu0 %v206
    %238 = vmatprep.subr.mxu0 0.0
    %239 = vmatpush1.msra.mxu0 %v205
    %240 = vmatprep.subr.mxu0 0.0
    %241 = vmatpush1.msra.mxu0 %v204
    %242 = vmatprep.subr.mxu0 0.0
    %243 = vmatpush1.msra.mxu0 %v203
    %244 = vmatprep.subr.mxu0 0.0
    %245 = vmatpush1.msra.mxu0 %v202
    %246 = vmatprep.subr.mxu0 0.0
    %247 = vmatpush1.msra.mxu0 %v201
    %248 = vmatprep.subr.mxu0 0.0
    %249 = vmatpush1.msra.mxu0 %v200
    %250 = vmatprep.subr.mxu0 0.0
    %251 = vmatpush2.msra.mxu0 0.0
    %252 = vmatprep.subr.mxu0 0.0
    %253 = vmatpush2.msra.mxu0 0.0
    %254 = vmatprep.subr.mxu0 0.0
    %255 = vmatpush2.msra.mxu0 0.0
    %256 = vmatprep.subr.mxu0 0.0
    %257 = vmatpush2.msra.mxu0 0.0
    %258 = vmatprep.subr.mxu0 0.0
    %259 = vmatpush2.msra.mxu0 0.0
    %260 = vmatprep.subr.mxu0 0.0
    %261 = vmatpush2.msra.mxu0 0.0
    %262 = vmatprep.subr.mxu0 0.0
    %263 = vmatpush2.msra.mxu0 0.0
    %264 = vmatprep.subr.mxu0 0.0
    %265 = vmatpush2.msra.mxu0 0.0
    %266 = vmatprep.subr.mxu0 0.0
    %267 = vmatpush2.msra.mxu0 0.0
    %268 = vmatprep.subr.mxu0 0.0
    %269 = vmatpush2.msra.mxu0 0.0
    %270 = vmatprep.subr.mxu0 0.0
    %271 = vmatpush2.msra.mxu0 0.0
    %272 = vmatprep.subr.mxu0 0.0
    %273 = vmatpush2.msra.mxu0 0.0
    %274 = vmatprep.subr.mxu0 0.0
    %275 = vmatpush2.msra.mxu0 0.0
    %276 = vmatprep.subr.mxu0 0.0
    %277 = vmatpush2.msra.mxu0 0.0
    %278 = vmatprep.subr.mxu0 0.0
    %279 = vmatpush2.msra.mxu0 0.0
    %280 = vmatprep.subr.mxu0 0.0
    %281 = vmatpush2.msra.mxu0 0.0
    %282 = vmatprep.mubr.f32.mxu0 0.0
    %283 = vmatmul.mubr.f32.gmra.mxu0 %v196
    %v284 = vpop.f32.mrf.mxu0
    %v285 = vadd.f32 %v216, %v284
    %v286 = vpop.f32.mrf.mxu0
    %287 = vmatprep.mubr.f32.mxu0 0.0
    %288 = vmatmul.mubr.f32.gmra.mxu0 %v197
    %v289 = vpop.f32.mrf.mxu0
    %v290 = vadd.f32 %v217, %v289
    %v291 = vpop.f32.mrf.mxu0
    %292 = vmatprep.mubr.f32.mxu0 0.0
    %293 = vmatmul.mubr.f32.gmra.mxu0 %v198
    %v294 = vpop.f32.mrf.mxu0
    %v295 = vadd.f32 %v216, %v294
    %v296 = vpop.f32.mrf.mxu0
    %297 = vmatprep.mubr.f32.mxu0 0.0
    %298 = vmatmul.mubr.f32.gmra.mxu0 %v199
    %v299 = vpop.f32.mrf.mxu0
    %v300 = vadd.f32 %v217, %v299
    %v301 = vpop.f32.mrf.mxu0
    %302 = vdwg.mxu0
    %v303 = vld [vmem:[%s4] sm:$0x1]
    %v304 = vlaneseq
    %v305 = vshrl.u32 %v304, 7
    %v306 = vsub.s32 0, %v305
    %v307 = vrot.slane %v303, %v306
    %v308 = vadd.f32 %v285, %v307
    %v309 = vadd.f32 %v290, %v307
    %v310 = vadd.f32 %v295, %v307
    %v311 = vadd.f32 %v300, %v307
    %v312 = vld [vmem:[%s5] sm:$0x1]
    %v313 = vld [vmem:[%s6] sm:$0x1]
    %314 = vadd.xlane.f32.xlu0 %v308
    %v315 = vpop.xlane.xlu0 %314
    %316 = vadd.xlane.f32.xlu0 %v309
    %v317 = vpop.xlane.xlu0 %316
    %318 = vadd.xlane.f32.xlu0 %v310
    %v319 = vpop.xlane.xlu0 %318
    %320 = vadd.xlane.f32.xlu0 %v311
    %v321 = vpop.xlane.xlu0 %320
    %v322 = vrcp.pop 128.0
    %v323 = vmul.f32 %v315, %v322
    %v324 = vmul.f32 %v317, %v322
    %v325 = vmul.f32 %v319, %v322
    %v326 = vmul.f32 %v321, %v322
    %v327 = vsub.f32 %v308, %v323
    %v328 = vsub.f32 %v309, %v324
    %v329 = vsub.f32 %v310, %v325
    %v330 = vsub.f32 %v311, %v326
    %v331 = vmul.f32 %v327, %v327
    %v332 = vmul.f32 %v328, %v328
    %v333 = vmul.f32 %v329, %v329
    %v334 = vmul.f32 %v330, %v330
    %335 = vadd.xlane.f32.xlu0 %v331
    %v336 = vpop.xlane.xlu0 %335
    %337 = vadd.xlane.f32.xlu0 %v332
    %v338 = vpop.xlane.xlu0 %337
    %339 = vadd.xlane.f32.xlu0 %v333
    %v340 = vpop.xlane.xlu0 %339
    %341 = vadd.xlane.f32.xlu0 %v334
    %v342 = vpop.xlane.xlu0 %341
    %v343 = vmul.f32 %v336, %v322
    %v344 = vmul.f32 %v338, %v322
    %v345 = vmul.f32 %v340, %v322
    %v346 = vmul.f32 %v342, %v322
    %v347 = vadd.f32 %v343, 1e-12
    %v348 = vadd.f32 %v344, 1e-12
    %v349 = vadd.f32 %v345, 1e-12
    %v350 = vadd.f32 %v346, 1e-12
    %v351 = vrsqrt.pop %v347
    %v352 = vrsqrt.pop %v348
    %v353 = vrsqrt.pop %v349
    %v354 = vrsqrt.pop %v350
    %v355 = vmul.f32 %v327, %v351
    %v356 = vmul.f32 %v328, %v352
    %v357 = vmul.f32 %v329, %v353
    %v358 = vmul.f32 %v330, %v354
    %v360 = vlaneseq
    %v361 = vshrl.u32 %v360, 7
    %v362 = vsub.s32 0, %v361
    %v363 = vrot.slane %v312, %v362
    %v365 = vmul.f32 %v355, %v363
    %v366 = vmul.f32 %v356, %v363
    %v367 = vmul.f32 %v357, %v363
    %v368 = vmul.f32 %v358, %v363
    %v370 = vlaneseq
    %v371 = vshrl.u32 %v370, 7
    %v372 = vsub.s32 0, %v371
    %v373 = vrot.slane %v313, %v372
    %v375 = vadd.f32 %v365, %v373
    %v376 = vadd.f32 %v366, %v373
    %v377 = vadd.f32 %v367, %v373
    %v378 = vadd.f32 %v368, %v373
    %v379 = vld [vmem:[%s1] sm:$0xff]
    %v380 = vld [vmem:[%s1 + $0x8] sm:$0xff]
    %v381 = vld [vmem:[%s1 + $0x10] sm:$0xff]
    %v382 = vld [vmem:[%s1 + $0x18] sm:$0xff]
    %vm383 = vcmp.ge.s32.totalorder %v175, 0
    %vm384 = vcmp.lt.s32.totalorder %v175, 64
    %vm385 = vmand %vm383, %vm384
    %v386 = vsel %vm385, 1, 0
    %v387 = vcvt.s32.f32 %v386
    %vm388 = vcmp.ge.s32.totalorder %v175, 64
    %vm389 = vcmp.lt.s32.totalorder %v175, 128
    %vm390 = vmand %vm388, %vm389
    %v391 = vsel %vm390, 1, 0
    %v392 = vcvt.s32.f32 %v391
    %v393 = vpack.c.bf16 %v376, %v375
    %v394 = vpack.c.bf16 %v378, %v377
    %v395 = vld [vmem:[#allocation4] sm:$0xff]
    %v396 = vld [vmem:[#allocation4 + $0x8] sm:$0xf]
    %v397 = vld [vmem:[#allocation4 + $0xc] sm:$0xff]
    %v398 = vld [vmem:[#allocation4 + $0x14] sm:$0xf]
    %v399 = vld [vmem:[#allocation4 + $0x18] sm:$0xff]
    %v400 = vld [vmem:[#allocation4 + $0x20] sm:$0xf]
    %v401 = vld [vmem:[#allocation4 + $0x24] sm:$0xff]
    %v402 = vld [vmem:[#allocation4 + $0x2c] sm:$0xf]
    %v403 = vld [vmem:[#allocation4 + $0x30] sm:$0xff]
    %v404 = vld [vmem:[#allocation4 + $0x38] sm:$0xf]
    %v405 = vld [vmem:[#allocation4 + $0x3c] sm:$0xff]
    %v406 = vld [vmem:[#allocation4 + $0x44] sm:$0xf]
    %v407 = vld [vmem:[#allocation4 + $0x48] sm:$0xff]
    %v408 = vld [vmem:[#allocation4 + $0x50] sm:$0xf]
    %v409 = vld [vmem:[#allocation4 + $0x54] sm:$0xff]
    %v410 = vld [vmem:[#allocation4 + $0x5c] sm:$0xf]
    %v411 = vld [vmem:[#allocation4 + $0x60] sm:$0xff]
    %v412 = vld [vmem:[#allocation4 + $0x68] sm:$0xf]
    %v413 = vld [vmem:[#allocation4 + $0x6c] sm:$0xff]
    %v414 = vld [vmem:[#allocation4 + $0x74] sm:$0xf]
    %v415 = vld [vmem:[#allocation4 + $0x78] sm:$0xff]
    %v416 = vld [vmem:[#allocation4 + $0x80] sm:$0xf]
    %v417 = vld [vmem:[#allocation4 + $0x84] sm:$0xff]
    %v418 = vld [vmem:[#allocation4 + $0x8c] sm:$0xf]
    %v419 = vld [vmem:[#allocation4 + $0x90] sm:$0xff]
    %v420 = vld [vmem:[#allocation4 + $0x98] sm:$0xf]
    %v421 = vld [vmem:[#allocation4 + $0x9c] sm:$0xff]
    %v422 = vld [vmem:[#allocation4 + $0xa4] sm:$0xf]
    %v423 = vld [vmem:[#allocation4 + $0xa8] sm:$0xff]
    %v424 = vld [vmem:[#allocation4 + $0xb0] sm:$0xf]
    %v425 = vld [vmem:[#allocation4 + $0xb4] sm:$0xff]
    %v426 = vld [vmem:[#allocation4 + $0xbc] sm:$0xf]
    %v427 = vld [vmem:[%s8] sm:$0x7]
    %v429 = vlaneseq
    %v430 = vshrl.u32 %v429, 7
    %v431 = vsub.s32 0, %v430
    %v432 = vrot.slane %v427, %v431
    %v433 = vlaneseq
    %v434 = vshrl.u32 %v433, 7
    %v435 = vsub.s32 1, %v434
    %v436 = vrot.slane %v427, %v435
    %v437 = vlaneseq
    %v438 = vshrl.u32 %v437, 7
    %v439 = vsub.s32 2, %v438
    %v440 = vrot.slane %v427, %v439
    %v476 = vunpack.c.l.b16 %v395
    %v477 = vunpack.c.h.b16 %v395
    %v478 = vunpack.c.l.b16 %v396
    %v479 = vunpack.c.l.b16 %v397
    %v480 = vunpack.c.h.b16 %v397
    %v481 = vunpack.c.l.b16 %v398
    %v482 = vunpack.c.l.b16 %v399
    %v483 = vunpack.c.h.b16 %v399
    %v484 = vunpack.c.l.b16 %v400
    %v485 = vunpack.c.l.b16 %v401
    %v486 = vunpack.c.h.b16 %v401
    %v487 = vunpack.c.l.b16 %v402
    %v488 = vunpack.c.l.b16 %v403
    %v489 = vunpack.c.h.b16 %v403
    %v490 = vunpack.c.l.b16 %v404
    %v491 = vunpack.c.l.b16 %v405
    %v492 = vunpack.c.h.b16 %v405
    %v493 = vunpack.c.l.b16 %v406
    %v494 = vunpack.c.l.b16 %v407
    %v495 = vunpack.c.h.b16 %v407
    %v496 = vunpack.c.l.b16 %v408
    %v497 = vunpack.c.l.b16 %v409
    %v498 = vunpack.c.h.b16 %v409
    %v499 = vunpack.c.l.b16 %v410
    %v500 = vunpack.c.l.b16 %v411
    %v501 = vunpack.c.h.b16 %v411
    %v502 = vunpack.c.l.b16 %v412
    %v503 = vunpack.c.l.b16 %v413
    %v504 = vunpack.c.h.b16 %v413
    %v505 = vunpack.c.l.b16 %v414
    %v506 = vunpack.c.l.b16 %v415
    %v507 = vunpack.c.h.b16 %v415
    %v508 = vunpack.c.l.b16 %v416
    %v509 = vunpack.c.l.b16 %v417
    %v510 = vunpack.c.h.b16 %v417
    %v511 = vunpack.c.l.b16 %v418
    %v512 = vunpack.c.l.b16 %v419
    %v513 = vunpack.c.h.b16 %v419
    %v514 = vunpack.c.l.b16 %v420
    %v515 = vunpack.c.l.b16 %v421
    %v516 = vunpack.c.h.b16 %v421
    %v517 = vunpack.c.l.b16 %v422
    %v518 = vunpack.c.l.b16 %v423
    %v519 = vunpack.c.h.b16 %v423
    %v520 = vunpack.c.l.b16 %v424
    %v521 = vunpack.c.l.b16 %v425
    %v522 = vunpack.c.h.b16 %v425
    %v523 = vunpack.c.l.b16 %v426
    %v524 = vpack.c.b16 %v479, %v476
    %v525 = vpack.c.b16 %v480, %v477
    %v526 = vpack.c.b16 %v481, %v478
    %v527 = vpack.c.b16 %v485, %v482
    %v528 = vpack.c.b16 %v486, %v483
    %v529 = vpack.c.b16 %v487, %v484
    %v530 = vpack.c.b16 %v491, %v488
    %v531 = vpack.c.b16 %v492, %v489
    %v532 = vpack.c.b16 %v493, %v490
    %v533 = vpack.c.b16 %v497, %v494
    %v534 = vpack.c.b16 %v498, %v495
    %v535 = vpack.c.b16 %v499, %v496
    %v536 = vpack.c.b16 %v503, %v500
    %v537 = vpack.c.b16 %v504, %v501
    %v538 = vpack.c.b16 %v505, %v502
    %v539 = vpack.c.b16 %v509, %v506
    %v540 = vpack.c.b16 %v510, %v507
    %v541 = vpack.c.b16 %v511, %v508
    %v542 = vpack.c.b16 %v515, %v512
    %v543 = vpack.c.b16 %v516, %v513
    %v544 = vpack.c.b16 %v517, %v514
    %v545 = vpack.c.b16 %v521, %v518
    %v546 = vpack.c.b16 %v522, %v519
    %v547 = vpack.c.b16 %v523, %v520
    %572 = vmatprep.subr.bf16.mxu0 %v546
    %573 = vmatpush1.bf16.msra.mxu0 %v545
    %574 = vmatprep.subr.bf16.mxu0 %v543
    %575 = vmatpush1.bf16.msra.mxu0 %v542
    %576 = vmatprep.subr.bf16.mxu0 %v540
    %577 = vmatpush1.bf16.msra.mxu0 %v539
    %578 = vmatprep.subr.bf16.mxu0 %v537
    %579 = vmatpush1.bf16.msra.mxu0 %v536
    %580 = vmatprep.subr.bf16.mxu0 %v534
    %581 = vmatpush1.bf16.msra.mxu0 %v533
    %582 = vmatprep.subr.bf16.mxu0 %v531
    %583 = vmatpush1.bf16.msra.mxu0 %v530
    %584 = vmatprep.subr.bf16.mxu0 %v528
    %585 = vmatpush1.bf16.msra.mxu0 %v527
    %586 = vmatprep.subr.bf16.mxu0 %v525
    %587 = vmatpush1.bf16.msra.mxu0 %v524
    %588 = vmatprep.subr.bf16.mxu0 0
    %589 = vmatpush2.bf16.msra.mxu0 0
    %590 = vmatprep.subr.bf16.mxu0 0
    %591 = vmatpush2.bf16.msra.mxu0 0
    %592 = vmatprep.subr.bf16.mxu0 0
    %593 = vmatpush2.bf16.msra.mxu0 0
    %594 = vmatprep.subr.bf16.mxu0 0
    %595 = vmatpush2.bf16.msra.mxu0 0
    %596 = vmatprep.subr.bf16.mxu0 0
    %597 = vmatpush2.bf16.msra.mxu0 0
    %598 = vmatprep.subr.bf16.mxu0 0
    %599 = vmatpush2.bf16.msra.mxu0 0
    %600 = vmatprep.subr.bf16.mxu0 0
    %601 = vmatpush2.bf16.msra.mxu0 0
    %602 = vmatprep.subr.bf16.mxu0 0
    %603 = vmatpush2.bf16.msra.mxu0 0
    %604 = vmatprep.mubr.bf16.mxu0 0
    %605 = vmatmul.mubr.bf16.gmra.mxu0 %v393
    %v606 = vpop.f32.mrf.mxu0
    %v607 = vadd.f32 %v432, %v606
    %v608 = vpop.f32.mrf.mxu0
    %v609 = vadd.f32 %v436, %v608
    %v610 = vpop.f32.mrf.mxu0
    %v611 = vadd.f32 %v432, %v610
    %v612 = vpop.f32.mrf.mxu0
    %v613 = vadd.f32 %v436, %v612
    %614 = vmatprep.mubr.bf16.mxu0 0
    %615 = vmatmul.mubr.bf16.gmra.mxu0 %v394
    %v616 = vpop.f32.mrf.mxu0
    %v617 = vadd.f32 %v432, %v616
    %v618 = vpop.f32.mrf.mxu0
    %v619 = vadd.f32 %v436, %v618
    %v620 = vpop.f32.mrf.mxu0
    %v621 = vadd.f32 %v432, %v620
    %v622 = vpop.f32.mrf.mxu0
    %v623 = vadd.f32 %v436, %v622
    %624 = vdwg.mxu0
    %625 = vmatprep.subr.bf16.mxu0 0
    %626 = vmatpush1.bf16.msra.mxu0 %v547
    %627 = vmatprep.subr.bf16.mxu0 0
    %628 = vmatpush1.bf16.msra.mxu0 %v544
    %629 = vmatprep.subr.bf16.mxu0 0
    %630 = vmatpush1.bf16.msra.mxu0 %v541
    %631 = vmatprep.subr.bf16.mxu0 0
    %632 = vmatpush1.bf16.msra.mxu0 %v538
    %633 = vmatprep.subr.bf16.mxu0 0
    %634 = vmatpush1.bf16.msra.mxu0 %v535
    %635 = vmatprep.subr.bf16.mxu0 0
    %636 = vmatpush1.bf16.msra.mxu0 %v532
    %637 = vmatprep.subr.bf16.mxu0 0
    %638 = vmatpush1.bf16.msra.mxu0 %v529
    %639 = vmatprep.subr.bf16.mxu0 0
    %640 = vmatpush1.bf16.msra.mxu0 %v526
    %641 = vmatprep.subr.bf16.mxu0 0
    %642 = vmatpush2.bf16.msra.mxu0 0
    %643 = vmatprep.subr.bf16.mxu0 0
    %644 = vmatpush2.bf16.msra.mxu0 0
    %645 = vmatprep.subr.bf16.mxu0 0
    %646 = vmatpush2.bf16.msra.mxu0 0
    %647 = vmatprep.subr.bf16.mxu0 0
    %648 = vmatpush2.bf16.msra.mxu0 0
    %649 = vmatprep.subr.bf16.mxu0 0
    %650 = vmatpush2.bf16.msra.mxu0 0
    %651 = vmatprep.subr.bf16.mxu0 0
    %652 = vmatpush2.bf16.msra.mxu0 0
    %653 = vmatprep.subr.bf16.mxu0 0
    %654 = vmatpush2.bf16.msra.mxu0 0
    %655 = vmatprep.subr.bf16.mxu0 0
    %656 = vmatpush2.bf16.msra.mxu0 0
    %657 = vmatprep.mubr.bf16.mxu0 0
    %658 = vmatmul.mubr.bf16.gmra.mxu0 %v393
    %v659 = vpop.f32.mrf.mxu0
    %v660 = vadd.f32 %v440, %v659
    %v661 = vpop.f32.mrf.mxu0
    %v662 = vpop.f32.mrf.mxu0
    %v663 = vadd.f32 %v440, %v662
    %v664 = vpop.f32.mrf.mxu0
    %665 = vmatprep.mubr.bf16.mxu0 0
    %666 = vmatmul.mubr.bf16.gmra.mxu0 %v394
    %v667 = vpop.f32.mrf.mxu0
    %v668 = vadd.f32 %v440, %v667
    %v669 = vpop.f32.mrf.mxu0
    %v670 = vpop.f32.mrf.mxu0
    %v671 = vadd.f32 %v440, %v670
    %v672 = vpop.f32.mrf.mxu0
    %673 = vdwg.mxu0
    %v674 = vpack.c.bf16 %v611, %v607
    %v675 = vpack.c.bf16 %v621, %v617
    %v676 = vmul.f32 %v609, %v387
    %v677 = vmul.f32 %v613, %v387
    %v678 = vmul.f32 %v619, %v387
    %v679 = vmul.f32 %v623, %v387
    %v680 = vpack.c.bf16 %v677, %v676
    %v681 = vpack.c.bf16 %v679, %v678
    %v682 = vmul.f32 %v660, %v387
    %v683 = vmul.f32 %v663, %v387
    %v684 = vmul.f32 %v668, %v387
    %v685 = vmul.f32 %v671, %v387
    %v686 = vpack.c.bf16 %v683, %v682
    %v687 = vpack.c.bf16 %v685, %v684
    %688 = vmatprep.subr.bf16.mxu0 0
    %689 = vmatpush1.bf16.xpose.msra.mxu0 0
    %690 = vmatprep.subr.bf16.mxu0 0
    %691 = vmatpush1.bf16.xpose.msra.mxu0 0
    %692 = vmatprep.subr.bf16.mxu0 0
    %693 = vmatpush1.bf16.xpose.msra.mxu0 0
    %694 = vmatprep.subr.bf16.mxu0 0
    %695 = vmatpush1.bf16.xpose.msra.mxu0 0
    %696 = vmatprep.subr.bf16.mxu0 0
    %697 = vmatpush1.bf16.xpose.msra.mxu0 0
    %698 = vmatprep.subr.bf16.mxu0 0
    %699 = vmatpush1.bf16.xpose.msra.mxu0 0
    %700 = vmatprep.subr.bf16.mxu0 0
    %701 = vmatpush1.bf16.xpose.msra.mxu0 %v681
    %702 = vmatprep.subr.bf16.mxu0 0
    %703 = vmatpush1.bf16.xpose.msra.mxu0 %v680
    %704 = vmatprep.subr.bf16.mxu0 0
    %705 = vmatpush2.bf16.xpose.msra.mxu0 0
    %706 = vmatprep.subr.bf16.mxu0 0
    %707 = vmatpush2.bf16.xpose.msra.mxu0 0
    %708 = vmatprep.subr.bf16.mxu0 0
    %709 = vmatpush2.bf16.xpose.msra.mxu0 0
    %710 = vmatprep.subr.bf16.mxu0 0
    %711 = vmatpush2.bf16.xpose.msra.mxu0 0
    %712 = vmatprep.subr.bf16.mxu0 0
    %713 = vmatpush2.bf16.xpose.msra.mxu0 0
    %714 = vmatprep.subr.bf16.mxu0 0
    %715 = vmatpush2.bf16.xpose.msra.mxu0 0
    %716 = vmatprep.subr.bf16.mxu0 0
    %717 = vmatpush2.bf16.xpose.msra.mxu0 0
    %718 = vmatprep.subr.bf16.mxu0 0
    %719 = vmatpush2.bf16.xpose.msra.mxu0 0
    %720 = vmatprep.mubr.bf16.mxu0 0
    %721 = vmatmul.mubr.bf16.gmra.mxu0 %v674
    %v722 = vpop.f32.mrf.mxu0
    %v723 = vadd.f32 %v379, %v722
    %v724 = vpop.f32.mrf.mxu0
    %v725 = vpop.f32.mrf.mxu0
    %v726 = vadd.f32 %v380, %v725
    %v727 = vpop.f32.mrf.mxu0
    %728 = vmatprep.mubr.bf16.mxu0 0
    %729 = vmatmul.mubr.bf16.gmra.mxu0 %v675
    %v730 = vpop.f32.mrf.mxu0
    %v731 = vadd.f32 %v381, %v730
    %v732 = vpop.f32.mrf.mxu0
    %v733 = vpop.f32.mrf.mxu0
    %v734 = vadd.f32 %v382, %v733
    %v735 = vpop.f32.mrf.mxu0
    %736 = vdwg.mxu0
    %vm737 = vcmask 261120
    %v738 = vsel %vm737, %v723, -inf
    %739 = vmax.xlane.f32.xlu0 %v738
    %v740 = vpop.xlane.xlu0 %739
    %v741 = vsel %vm737, %v726, -inf
    %742 = vmax.xlane.f32.xlu0 %v741
    %v743 = vpop.xlane.xlu0 %742
    %v744 = vsel %vm737, %v731, -inf
    %745 = vmax.xlane.f32.xlu0 %v744
    %v746 = vpop.xlane.xlu0 %745
    %v747 = vsel %vm737, %v734, -inf
    %748 = vmax.xlane.f32.xlu0 %v747
    %v749 = vpop.xlane.xlu0 %748
    %v750 = vsub.f32 %v723, %v740
    %v751 = vsub.f32 %v726, %v743
    %v752 = vsub.f32 %v731, %v746
    %v753 = vsub.f32 %v734, %v749
    %v754 = vmul.f32 %v750, 1.442695
    %v755 = vpow.pop %v754
    %v756 = vmul.f32 %v751, 1.442695
    %v757 = vpow.pop %v756
    %v758 = vmul.f32 %v752, 1.442695
    %v759 = vpow.pop %v758
    %v760 = vmul.f32 %v753, 1.442695
    %v761 = vpow.pop %v760
    %v762 = vsel %vm737, %v755, 0.0
    %763 = vadd.xlane.f32.xlu0 %v762
    %v764 = vpop.xlane.xlu0 %763
    %v765 = vsel %vm737, %v757, 0.0
    %766 = vadd.xlane.f32.xlu0 %v765
    %v767 = vpop.xlane.xlu0 %766
    %v768 = vsel %vm737, %v759, 0.0
    %769 = vadd.xlane.f32.xlu0 %v768
    %v770 = vpop.xlane.xlu0 %769
    %v771 = vsel %vm737, %v761, 0.0
    %772 = vadd.xlane.f32.xlu0 %v771
    %v773 = vpop.xlane.xlu0 %772
    %v774 = vrcp.pop %v764
    %v775 = vrcp.pop %v767
    %v776 = vrcp.pop %v770
    %v777 = vrcp.pop %v773
    %v778 = vmul.f32 %v755, %v774
    %v779 = vmul.f32 %v757, %v775
    %v780 = vmul.f32 %v759, %v776
    %v781 = vmul.f32 %v761, %v777
    %v782 = vpack.c.bf16 %v779, %v778
    %v783 = vpack.c.bf16 %v781, %v780
    %v784 = vmul.f32 %v609, %v392
    %v785 = vmul.f32 %v613, %v392
    %v786 = vmul.f32 %v619, %v392
    %v787 = vmul.f32 %v623, %v392
    %v788 = vpack.c.bf16 %v785, %v784
    %v789 = vpack.c.bf16 %v787, %v786
    %v790 = vmul.f32 %v660, %v392
    %v791 = vmul.f32 %v663, %v392
    %v792 = vmul.f32 %v668, %v392
    %v793 = vmul.f32 %v671, %v392
    %v794 = vpack.c.bf16 %v791, %v790
    %v795 = vpack.c.bf16 %v793, %v792
    %796 = vmatprep.subr.bf16.mxu0 0
    %797 = vmatpush1.bf16.xpose.msra.mxu0 0
    %798 = vmatprep.subr.bf16.mxu0 0
    %799 = vmatpush1.bf16.xpose.msra.mxu0 0
    %800 = vmatprep.subr.bf16.mxu0 0
    %801 = vmatpush1.bf16.xpose.msra.mxu0 0
    %802 = vmatprep.subr.bf16.mxu0 0
    %803 = vmatpush1.bf16.xpose.msra.mxu0 0
    %804 = vmatprep.subr.bf16.mxu0 0
    %805 = vmatpush1.bf16.xpose.msra.mxu0 0
    %806 = vmatprep.subr.bf16.mxu0 0
    %807 = vmatpush1.bf16.xpose.msra.mxu0 0
    %808 = vmatprep.subr.bf16.mxu0 0
    %809 = vmatpush1.bf16.xpose.msra.mxu0 %v789
    %810 = vmatprep.subr.bf16.mxu0 0
    %811 = vmatpush1.bf16.xpose.msra.mxu0 %v788
    %812 = vmatprep.subr.bf16.mxu0 0
    %813 = vmatpush2.bf16.xpose.msra.mxu0 0
    %814 = vmatprep.subr.bf16.mxu0 0
    %815 = vmatpush2.bf16.xpose.msra.mxu0 0
    %816 = vmatprep.subr.bf16.mxu0 0
    %817 = vmatpush2.bf16.xpose.msra.mxu0 0
    %818 = vmatprep.subr.bf16.mxu0 0
    %819 = vmatpush2.bf16.xpose.msra.mxu0 0
    %820 = vmatprep.subr.bf16.mxu0 0
    %821 = vmatpush2.bf16.xpose.msra.mxu0 0
    %822 = vmatprep.subr.bf16.mxu0 0
    %823 = vmatpush2.bf16.xpose.msra.mxu0 0
    %824 = vmatprep.subr.bf16.mxu0 0
    %825 = vmatpush2.bf16.xpose.msra.mxu0 0
    %826 = vmatprep.subr.bf16.mxu0 0
    %827 = vmatpush2.bf16.xpose.msra.mxu0 0
    %828 = vmatprep.mubr.bf16.mxu0 0
    %829 = vmatmul.mubr.bf16.gmra.mxu0 %v674
    %v830 = vpop.f32.mrf.mxu0
    %v831 = vadd.f32 %v379, %v830
    %v832 = vpop.f32.mrf.mxu0
    %v833 = vpop.f32.mrf.mxu0
    %v834 = vadd.f32 %v380, %v833
    %v835 = vpop.f32.mrf.mxu0
    %836 = vmatprep.mubr.bf16.mxu0 0
    %837 = vmatmul.mubr.bf16.gmra.mxu0 %v675
    %v838 = vpop.f32.mrf.mxu0
    %v839 = vadd.f32 %v381, %v838
    %v840 = vpop.f32.mrf.mxu0
    %v841 = vpop.f32.mrf.mxu0
    %v842 = vadd.f32 %v382, %v841
    %v843 = vpop.f32.mrf.mxu0
    %844 = vdwg.mxu0
    %v845 = vsel %vm737, %v831, -inf
    %846 = vmax.xlane.f32.xlu0 %v845
    %v847 = vpop.xlane.xlu0 %846
    %v848 = vsel %vm737, %v834, -inf
    %849 = vmax.xlane.f32.xlu0 %v848
    %v850 = vpop.xlane.xlu0 %849
    %v851 = vsel %vm737, %v839, -inf
    %852 = vmax.xlane.f32.xlu0 %v851
    %v853 = vpop.xlane.xlu0 %852
    %v854 = vsel %vm737, %v842, -inf
    %855 = vmax.xlane.f32.xlu0 %v854
    %v856 = vpop.xlane.xlu0 %855
    %v857 = vsub.f32 %v831, %v847
    %v858 = vsub.f32 %v834, %v850
    %v859 = vsub.f32 %v839, %v853
    %v860 = vsub.f32 %v842, %v856
    %v861 = vmul.f32 %v857, 1.442695
    %v862 = vpow.pop %v861
    %v863 = vmul.f32 %v858, 1.442695
    %v864 = vpow.pop %v863
    %v865 = vmul.f32 %v859, 1.442695
    %v866 = vpow.pop %v865
    %v867 = vmul.f32 %v860, 1.442695
    %v868 = vpow.pop %v867
    %v869 = vsel %vm737, %v862, 0.0
    %870 = vadd.xlane.f32.xlu0 %v869
    %v871 = vpop.xlane.xlu0 %870
    %v872 = vsel %vm737, %v864, 0.0
    %873 = vadd.xlane.f32.xlu0 %v872
    %v874 = vpop.xlane.xlu0 %873
    %v875 = vsel %vm737, %v866, 0.0
    %876 = vadd.xlane.f32.xlu0 %v875
    %v877 = vpop.xlane.xlu0 %876
    %v878 = vsel %vm737, %v868, 0.0
    %879 = vadd.xlane.f32.xlu0 %v878
    %v880 = vpop.xlane.xlu0 %879
    %v881 = vrcp.pop %v871
    %v882 = vrcp.pop %v874
    %v883 = vrcp.pop %v877
    %v884 = vrcp.pop %v880
    %v885 = vmul.f32 %v862, %v881
    %v886 = vmul.f32 %v864, %v882
    %v887 = vmul.f32 %v866, %v883
    %v888 = vmul.f32 %v868, %v884
    %v889 = vpack.c.bf16 %v886, %v885
    %v890 = vpack.c.bf16 %v888, %v887
    %v892 = vsel %vm737, %v889, 0
    %v895 = vsel %vm737, %v890, 0
    %897 = vmatprep.subr.bf16.mxu0 0
    %898 = vmatpush1.bf16.msra.mxu0 0
    %899 = vmatprep.subr.bf16.mxu0 0
    %900 = vmatpush1.bf16.msra.mxu0 0
    %901 = vmatprep.subr.bf16.mxu0 0
    %902 = vmatpush1.bf16.msra.mxu0 0
    %903 = vmatprep.subr.bf16.mxu0 0
    %904 = vmatpush1.bf16.msra.mxu0 0
    %905 = vmatprep.subr.bf16.mxu0 0
    %906 = vmatpush1.bf16.msra.mxu0 0
    %907 = vmatprep.subr.bf16.mxu0 0
    %908 = vmatpush1.bf16.msra.mxu0 0
    %909 = vmatprep.subr.bf16.mxu0 0
    %910 = vmatpush1.bf16.msra.mxu0 %v795
    %911 = vmatprep.subr.bf16.mxu0 0
    %912 = vmatpush1.bf16.msra.mxu0 %v794
    %913 = vmatprep.subr.bf16.mxu0 0
    %914 = vmatpush2.bf16.msra.mxu0 0
    %915 = vmatprep.subr.bf16.mxu0 0
    %916 = vmatpush2.bf16.msra.mxu0 0
    %917 = vmatprep.subr.bf16.mxu0 0
    %918 = vmatpush2.bf16.msra.mxu0 0
    %919 = vmatprep.subr.bf16.mxu0 0
    %920 = vmatpush2.bf16.msra.mxu0 0
    %921 = vmatprep.subr.bf16.mxu0 0
    %922 = vmatpush2.bf16.msra.mxu0 0
    %923 = vmatprep.subr.bf16.mxu0 0
    %924 = vmatpush2.bf16.msra.mxu0 0
    %925 = vmatprep.subr.bf16.mxu0 0
    %926 = vmatpush2.bf16.msra.mxu0 0
    %927 = vmatprep.subr.bf16.mxu0 0
    %928 = vmatpush2.bf16.msra.mxu0 0
    %929 = vmatprep.mubr.bf16.mxu0 0
    %930 = vmatmul.mubr.bf16.gmra.mxu0 %v892
    %v931 = vpop.f32.mrf.mxu0
    %v932 = vadd.f32 0.0, %v931
    %v933 = vpop.f32.mrf.mxu0
    %v934 = vpop.f32.mrf.mxu0
    %v935 = vadd.f32 0.0, %v934
    %v936 = vpop.f32.mrf.mxu0
    %937 = vmatprep.mubr.bf16.mxu0 0
    %938 = vmatmul.mubr.bf16.gmra.mxu0 %v895
    %v939 = vpop.f32.mrf.mxu0
    %v940 = vadd.f32 0.0, %v939
    %v941 = vpop.f32.mrf.mxu0
    %v942 = vpop.f32.mrf.mxu0
    %v943 = vadd.f32 0.0, %v942
    %v944 = vpop.f32.mrf.mxu0
    %945 = vdwg.mxu0
    %v947 = vsel %vm737, %v782, 0
    %v950 = vsel %vm737, %v783, 0
    %952 = vmatprep.subr.bf16.mxu0 0
    %953 = vmatpush1.bf16.msra.mxu0 0
    %954 = vmatprep.subr.bf16.mxu0 0
    %955 = vmatpush1.bf16.msra.mxu0 0
    %956 = vmatprep.subr.bf16.mxu0 0
    %957 = vmatpush1.bf16.msra.mxu0 0
    %958 = vmatprep.subr.bf16.mxu0 0
    %959 = vmatpush1.bf16.msra.mxu0 0
    %960 = vmatprep.subr.bf16.mxu0 0
    %961 = vmatpush1.bf16.msra.mxu0 0
    %962 = vmatprep.subr.bf16.mxu0 0
    %963 = vmatpush1.bf16.msra.mxu0 0
    %964 = vmatprep.subr.bf16.mxu0 0
    %965 = vmatpush1.bf16.msra.mxu0 %v687
    %966 = vmatprep.subr.bf16.mxu0 0
    %967 = vmatpush1.bf16.msra.mxu0 %v686
    %968 = vmatprep.subr.bf16.mxu0 0
    %969 = vmatpush2.bf16.msra.mxu0 0
    %970 = vmatprep.subr.bf16.mxu0 0
    %971 = vmatpush2.bf16.msra.mxu0 0
    %972 = vmatprep.subr.bf16.mxu0 0
    %973 = vmatpush2.bf16.msra.mxu0 0
    %974 = vmatprep.subr.bf16.mxu0 0
    %975 = vmatpush2.bf16.msra.mxu0 0
    %976 = vmatprep.subr.bf16.mxu0 0
    %977 = vmatpush2.bf16.msra.mxu0 0
    %978 = vmatprep.subr.bf16.mxu0 0
    %979 = vmatpush2.bf16.msra.mxu0 0
    %980 = vmatprep.subr.bf16.mxu0 0
    %981 = vmatpush2.bf16.msra.mxu0 0
    %982 = vmatprep.subr.bf16.mxu0 0
    %983 = vmatpush2.bf16.msra.mxu0 0
    %984 = vmatprep.mubr.bf16.mxu0 0
    %985 = vmatmul.mubr.bf16.gmra.mxu0 %v947
    %v986 = vpop.f32.mrf.mxu0
    %v987 = vadd.f32 %v932, %v986
    %v988 = vpop.f32.mrf.mxu0
    %v989 = vpop.f32.mrf.mxu0
    %v990 = vadd.f32 %v935, %v989
    %v991 = vpop.f32.mrf.mxu0
    %992 = vmatprep.mubr.bf16.mxu0 0
    %993 = vmatmul.mubr.bf16.gmra.mxu0 %v950
    %v994 = vpop.f32.mrf.mxu0
    %v995 = vadd.f32 %v940, %v994
    %v996 = vpop.f32.mrf.mxu0
    %v997 = vpop.f32.mrf.mxu0
    %v998 = vadd.f32 %v943, %v997
    %v999 = vpop.f32.mrf.mxu0
    %1000 = vdwg.mxu0
    %v1001 = vpack.c.bf16 %v990, %v987
    %v1002 = vpack.c.bf16 %v998, %v995
    %v1003 = vld [vmem:[#allocation6] sm:$0xf]
    %v1004 = vld [vmem:[#allocation6 + $0x4] sm:$0xf]
    %v1005 = vld [vmem:[#allocation6 + $0x8] sm:$0xf]
    %v1006 = vld [vmem:[#allocation6 + $0xc] sm:$0xf]
    %v1007 = vld [vmem:[#allocation6 + $0x10] sm:$0xf]
    %v1008 = vld [vmem:[#allocation6 + $0x14] sm:$0xf]
    %v1009 = vld [vmem:[#allocation6 + $0x18] sm:$0xf]
    %v1010 = vld [vmem:[#allocation6 + $0x1c] sm:$0xf]
    %v1011 = vld [vmem:[#allocation6 + $0x20] sm:$0xf]
    %v1012 = vld [vmem:[#allocation6 + $0x24] sm:$0xf]
    %v1013 = vld [vmem:[#allocation6 + $0x28] sm:$0xf]
    %v1014 = vld [vmem:[#allocation6 + $0x2c] sm:$0xf]
    %v1015 = vld [vmem:[#allocation6 + $0x30] sm:$0xf]
    %v1016 = vld [vmem:[#allocation6 + $0x34] sm:$0xf]
    %v1017 = vld [vmem:[#allocation6 + $0x38] sm:$0xf]
    %v1018 = vld [vmem:[#allocation6 + $0x3c] sm:$0xf]
    %v1019 = vld [vmem:[%s10] sm:$0x1]
    %v1021 = vlaneseq
    %v1022 = vshrl.u32 %v1021, 7
    %v1023 = vsub.s32 0, %v1022
    %v1024 = vrot.slane %v1019, %v1023
    %v1042 = vunpack.c.l.b16 %v1003
    %v1043 = vunpack.c.l.b16 %v1004
    %v1044 = vunpack.c.l.b16 %v1005
    %v1045 = vunpack.c.l.b16 %v1006
    %v1046 = vunpack.c.l.b16 %v1007
    %v1047 = vunpack.c.l.b16 %v1008
    %v1048 = vunpack.c.l.b16 %v1009
    %v1049 = vunpack.c.l.b16 %v1010
    %v1050 = vunpack.c.l.b16 %v1011
    %v1051 = vunpack.c.l.b16 %v1012
    %v1052 = vunpack.c.l.b16 %v1013
    %v1053 = vunpack.c.l.b16 %v1014
    %v1054 = vunpack.c.l.b16 %v1015
    %v1055 = vunpack.c.l.b16 %v1016
    %v1056 = vunpack.c.l.b16 %v1017
    %v1057 = vunpack.c.l.b16 %v1018
    %v1058 = vpack.c.b16 %v1043, %v1042
    %v1059 = vpack.c.b16 %v1045, %v1044
    %v1060 = vpack.c.b16 %v1047, %v1046
    %v1061 = vpack.c.b16 %v1049, %v1048
    %v1062 = vpack.c.b16 %v1051, %v1050
    %v1063 = vpack.c.b16 %v1053, %v1052
    %v1064 = vpack.c.b16 %v1055, %v1054
    %v1065 = vpack.c.b16 %v1057, %v1056
    %1074 = vmatprep.subr.bf16.mxu0 0
    %1075 = vmatpush1.bf16.msra.mxu0 %v1065
    %1076 = vmatprep.subr.bf16.mxu0 0
    %1077 = vmatpush1.bf16.msra.mxu0 %v1064
    %1078 = vmatprep.subr.bf16.mxu0 0
    %1079 = vmatpush1.bf16.msra.mxu0 %v1063
    %1080 = vmatprep.subr.bf16.mxu0 0
    %1081 = vmatpush1.bf16.msra.mxu0 %v1062
    %1082 = vmatprep.subr.bf16.mxu0 0
    %1083 = vmatpush1.bf16.msra.mxu0 %v1061
    %1084 = vmatprep.subr.bf16.mxu0 0
    %1085 = vmatpush1.bf16.msra.mxu0 %v1060
    %1086 = vmatprep.subr.bf16.mxu0 0
    %1087 = vmatpush1.bf16.msra.mxu0 %v1059
    %1088 = vmatprep.subr.bf16.mxu0 0
    %1089 = vmatpush1.bf16.msra.mxu0 %v1058
    %1090 = vmatprep.subr.bf16.mxu0 0
    %1091 = vmatpush2.bf16.msra.mxu0 0
    %1092 = vmatprep.subr.bf16.mxu0 0
    %1093 = vmatpush2.bf16.msra.mxu0 0
    %1094 = vmatprep.subr.bf16.mxu0 0
    %1095 = vmatpush2.bf16.msra.mxu0 0
    %1096 = vmatprep.subr.bf16.mxu0 0
    %1097 = vmatpush2.bf16.msra.mxu0 0
    %1098 = vmatprep.subr.bf16.mxu0 0
    %1099 = vmatpush2.bf16.msra.mxu0 0
    %1100 = vmatprep.subr.bf16.mxu0 0
    %1101 = vmatpush2.bf16.msra.mxu0 0
    %1102 = vmatprep.subr.bf16.mxu0 0
    %1103 = vmatpush2.bf16.msra.mxu0 0
    %1104 = vmatprep.subr.bf16.mxu0 0
    %1105 = vmatpush2.bf16.msra.mxu0 0
    %1106 = vmatprep.mubr.bf16.mxu0 0
    %1107 = vmatmul.mubr.bf16.gmra.mxu0 %v1001
    %v1108 = vpop.f32.mrf.mxu0
    %v1109 = vadd.f32 %v1024, %v1108
    %v1110 = vpop.f32.mrf.mxu0
    %v1111 = vpop.f32.mrf.mxu0
    %v1112 = vadd.f32 %v1024, %v1111
    %v1113 = vpop.f32.mrf.mxu0
    %1114 = vmatprep.mubr.bf16.mxu0 0
    %1115 = vmatmul.mubr.bf16.gmra.mxu0 %v1002
    %v1116 = vpop.f32.mrf.mxu0
    %v1117 = vadd.f32 %v1024, %v1116
    %v1118 = vpop.f32.mrf.mxu0
    %v1119 = vpop.f32.mrf.mxu0
    %v1120 = vadd.f32 %v1024, %v1119
    %v1121 = vpop.f32.mrf.mxu0
    %1122 = vdwg.mxu0
    %v1123 = vadd.f32 %v1109, %v375
    %v1124 = vadd.f32 %v1112, %v376
    %v1125 = vadd.f32 %v1117, %v377
    %v1126 = vadd.f32 %v1120, %v378
    %v1127 = vld [vmem:[%s11] sm:$0x1]
    %v1128 = vld [vmem:[%s12] sm:$0x1]
    %1129 = vadd.xlane.f32.xlu0 %v1123
    %v1130 = vpop.xlane.xlu0 %1129
    %1131 = vadd.xlane.f32.xlu0 %v1124
    %v1132 = vpop.xlane.xlu0 %1131
    %1133 = vadd.xlane.f32.xlu0 %v1125
    %v1134 = vpop.xlane.xlu0 %1133
    %1135 = vadd.xlane.f32.xlu0 %v1126
    %v1136 = vpop.xlane.xlu0 %1135
    %v1137 = vmul.f32 %v1130, %v322
    %v1138 = vmul.f32 %v1132, %v322
    %v1139 = vmul.f32 %v1134, %v322
    %v1140 = vmul.f32 %v1136, %v322
    %v1141 = vsub.f32 %v1123, %v1137
    %v1142 = vsub.f32 %v1124, %v1138
    %v1143 = vsub.f32 %v1125, %v1139
    %v1144 = vsub.f32 %v1126, %v1140
    %v1145 = vmul.f32 %v1141, %v1141
    %v1146 = vmul.f32 %v1142, %v1142
    %v1147 = vmul.f32 %v1143, %v1143
    %v1148 = vmul.f32 %v1144, %v1144
    %1149 = vadd.xlane.f32.xlu0 %v1145
    %v1150 = vpop.xlane.xlu0 %1149
    %1151 = vadd.xlane.f32.xlu0 %v1146
    %v1152 = vpop.xlane.xlu0 %1151
    %1153 = vadd.xlane.f32.xlu0 %v1147
    %v1154 = vpop.xlane.xlu0 %1153
    %1155 = vadd.xlane.f32.xlu0 %v1148
    %v1156 = vpop.xlane.xlu0 %1155
    %v1157 = vmul.f32 %v1150, %v322
    %v1158 = vmul.f32 %v1152, %v322
    %v1159 = vmul.f32 %v1154, %v322
    %v1160 = vmul.f32 %v1156, %v322
    %v1161 = vadd.f32 %v1157, 1e-12
    %v1162 = vadd.f32 %v1158, 1e-12
    %v1163 = vadd.f32 %v1159, 1e-12
    %v1164 = vadd.f32 %v1160, 1e-12
    %v1165 = vrsqrt.pop %v1161
    %v1166 = vrsqrt.pop %v1162
    %v1167 = vrsqrt.pop %v1163
    %v1168 = vrsqrt.pop %v1164
    %v1169 = vmul.f32 %v1141, %v1165
    %v1170 = vmul.f32 %v1142, %v1166
    %v1171 = vmul.f32 %v1143, %v1167
    %v1172 = vmul.f32 %v1144, %v1168
    %v1174 = vlaneseq
    %v1175 = vshrl.u32 %v1174, 7
    %v1176 = vsub.s32 0, %v1175
    %v1177 = vrot.slane %v1127, %v1176
    %v1179 = vmul.f32 %v1169, %v1177
    %v1180 = vmul.f32 %v1170, %v1177
    %v1181 = vmul.f32 %v1171, %v1177
    %v1182 = vmul.f32 %v1172, %v1177
    %v1184 = vlaneseq
    %v1185 = vshrl.u32 %v1184, 7
    %v1186 = vsub.s32 0, %v1185
    %v1187 = vrot.slane %v1128, %v1186
    %v1189 = vadd.f32 %v1179, %v1187
    %v1190 = vadd.f32 %v1180, %v1187
    %v1191 = vadd.f32 %v1181, %v1187
    %v1192 = vadd.f32 %v1182, %v1187
    %v1193 = vpack.c.bf16 %v1190, %v1189
    %v1194 = vpack.c.bf16 %v1192, %v1191
    %v1195 = vld [vmem:[#allocation7] sm:$0xff]
    %v1196 = vld [vmem:[#allocation7 + $0x8] sm:$0xff]
    %v1197 = vld [vmem:[#allocation7 + $0x10] sm:$0xff]
    %v1198 = vld [vmem:[#allocation7 + $0x18] sm:$0xff]
    %v1199 = vld [vmem:[#allocation7 + $0x20] sm:$0xff]
    %v1200 = vld [vmem:[#allocation7 + $0x28] sm:$0xff]
    %v1201 = vld [vmem:[#allocation7 + $0x30] sm:$0xff]
    %v1202 = vld [vmem:[#allocation7 + $0x38] sm:$0xff]
    %v1203 = vld [vmem:[#allocation7 + $0x40] sm:$0xff]
    %v1204 = vld [vmem:[#allocation7 + $0x48] sm:$0xff]
    %v1205 = vld [vmem:[#allocation7 + $0x50] sm:$0xff]
    %v1206 = vld [vmem:[#allocation7 + $0x58] sm:$0xff]
    %v1207 = vld [vmem:[#allocation7 + $0x60] sm:$0xff]
    %v1208 = vld [vmem:[#allocation7 + $0x68] sm:$0xff]
    %v1209 = vld [vmem:[#allocation7 + $0x70] sm:$0xff]
    %v1210 = vld [vmem:[#allocation7 + $0x78] sm:$0xff]
    %v1211 = vld [vmem:[%s14] sm:$0x3]
    %v1213 = vlaneseq
    %v1214 = vshrl.u32 %v1213, 7
    %v1215 = vsub.s32 0, %v1214
    %v1216 = vrot.slane %v1211, %v1215
    %v1217 = vlaneseq
    %v1218 = vshrl.u32 %v1217, 7
    %v1219 = vsub.s32 1, %v1218
    %v1220 = vrot.slane %v1211, %v1219
    %v1239 = vunpack.c.l.b16 %v1195
    %v1240 = vunpack.c.h.b16 %v1195
    %v1241 = vunpack.c.l.b16 %v1196
    %v1242 = vunpack.c.h.b16 %v1196
    %v1243 = vunpack.c.l.b16 %v1197
    %v1244 = vunpack.c.h.b16 %v1197
    %v1245 = vunpack.c.l.b16 %v1198
    %v1246 = vunpack.c.h.b16 %v1198
    %v1247 = vunpack.c.l.b16 %v1199
    %v1248 = vunpack.c.h.b16 %v1199
    %v1249 = vunpack.c.l.b16 %v1200
    %v1250 = vunpack.c.h.b16 %v1200
    %v1251 = vunpack.c.l.b16 %v1201
    %v1252 = vunpack.c.h.b16 %v1201
    %v1253 = vunpack.c.l.b16 %v1202
    %v1254 = vunpack.c.h.b16 %v1202
    %v1255 = vunpack.c.l.b16 %v1203
    %v1256 = vunpack.c.h.b16 %v1203
    %v1257 = vunpack.c.l.b16 %v1204
    %v1258 = vunpack.c.h.b16 %v1204
    %v1259 = vunpack.c.l.b16 %v1205
    %v1260 = vunpack.c.h.b16 %v1205
    %v1261 = vunpack.c.l.b16 %v1206
    %v1262 = vunpack.c.h.b16 %v1206
    %v1263 = vunpack.c.l.b16 %v1207
    %v1264 = vunpack.c.h.b16 %v1207
    %v1265 = vunpack.c.l.b16 %v1208
    %v1266 = vunpack.c.h.b16 %v1208
    %v1267 = vunpack.c.l.b16 %v1209
    %v1268 = vunpack.c.h.b16 %v1209
    %v1269 = vunpack.c.l.b16 %v1210
    %v1270 = vunpack.c.h.b16 %v1210
    %v1271 = vpack.c.b16 %v1241, %v1239
    %v1272 = vpack.c.b16 %v1242, %v1240
    %v1273 = vpack.c.b16 %v1245, %v1243
    %v1274 = vpack.c.b16 %v1246, %v1244
    %v1275 = vpack.c.b16 %v1249, %v1247
    %v1276 = vpack.c.b16 %v1250, %v1248
    %v1277 = vpack.c.b16 %v1253, %v1251
    %v1278 = vpack.c.b16 %v1254, %v1252
    %v1279 = vpack.c.b16 %v1257, %v1255
    %v1280 = vpack.c.b16 %v1258, %v1256
    %v1281 = vpack.c.b16 %v1261, %v1259
    %v1282 = vpack.c.b16 %v1262, %v1260
    %v1283 = vpack.c.b16 %v1265, %v1263
    %v1284 = vpack.c.b16 %v1266, %v1264
    %v1285 = vpack.c.b16 %v1269, %v1267
    %v1286 = vpack.c.b16 %v1270, %v1268
    %1303 = vmatprep.subr.bf16.mxu0 %v1286
    %1304 = vmatpush1.bf16.msra.mxu0 %v1285
    %1305 = vmatprep.subr.bf16.mxu0 %v1284
    %1306 = vmatpush1.bf16.msra.mxu0 %v1283
    %1307 = vmatprep.subr.bf16.mxu0 %v1282
    %1308 = vmatpush1.bf16.msra.mxu0 %v1281
    %1309 = vmatprep.subr.bf16.mxu0 %v1280
    %1310 = vmatpush1.bf16.msra.mxu0 %v1279
    %1311 = vmatprep.subr.bf16.mxu0 %v1278
    %1312 = vmatpush1.bf16.msra.mxu0 %v1277
    %1313 = vmatprep.subr.bf16.mxu0 %v1276
    %1314 = vmatpush1.bf16.msra.mxu0 %v1275
    %1315 = vmatprep.subr.bf16.mxu0 %v1274
    %1316 = vmatpush1.bf16.msra.mxu0 %v1273
    %1317 = vmatprep.subr.bf16.mxu0 %v1272
    %1318 = vmatpush1.bf16.msra.mxu0 %v1271
    %1319 = vmatprep.subr.bf16.mxu0 0
    %1320 = vmatpush2.bf16.msra.mxu0 0
    %1321 = vmatprep.subr.bf16.mxu0 0
    %1322 = vmatpush2.bf16.msra.mxu0 0
    %1323 = vmatprep.subr.bf16.mxu0 0
    %1324 = vmatpush2.bf16.msra.mxu0 0
    %1325 = vmatprep.subr.bf16.mxu0 0
    %1326 = vmatpush2.bf16.msra.mxu0 0
    %1327 = vmatprep.subr.bf16.mxu0 0
    %1328 = vmatpush2.bf16.msra.mxu0 0
    %1329 = vmatprep.subr.bf16.mxu0 0
    %1330 = vmatpush2.bf16.msra.mxu0 0
    %1331 = vmatprep.subr.bf16.mxu0 0
    %1332 = vmatpush2.bf16.msra.mxu0 0
    %1333 = vmatprep.subr.bf16.mxu0 0
    %1334 = vmatpush2.bf16.msra.mxu0 0
    %1335 = vmatprep.mubr.bf16.mxu0 0
    %1336 = vmatmul.mubr.bf16.gmra.mxu0 %v1193
    %v1337 = vpop.f32.mrf.mxu0
    %v1338 = vadd.f32 %v1216, %v1337
    %v1339 = vpop.f32.mrf.mxu0
    %v1340 = vadd.f32 %v1220, %v1339
    %v1341 = vpop.f32.mrf.mxu0
    %v1342 = vadd.f32 %v1216, %v1341
    %v1343 = vpop.f32.mrf.mxu0
    %v1344 = vadd.f32 %v1220, %v1343
    %1345 = vmatprep.mubr.bf16.mxu0 0
    %1346 = vmatmul.mubr.bf16.gmra.mxu0 %v1194
    %v1347 = vpop.f32.mrf.mxu0
    %v1348 = vadd.f32 %v1216, %v1347
    %v1349 = vpop.f32.mrf.mxu0
    %v1350 = vadd.f32 %v1220, %v1349
    %v1351 = vpop.f32.mrf.mxu0
    %v1352 = vadd.f32 %v1216, %v1351
    %v1353 = vpop.f32.mrf.mxu0
    %v1354 = vadd.f32 %v1220, %v1353
    %1355 = vdwg.mxu0
    %v1356 = vmul.f32 %v1338, %v1338
    %v1357 = vmul.f32 %v1340, %v1340
    %v1358 = vmul.f32 %v1342, %v1342
    %v1359 = vmul.f32 %v1344, %v1344
    %v1360 = vmul.f32 %v1348, %v1348
    %v1361 = vmul.f32 %v1350, %v1350
    %v1362 = vmul.f32 %v1352, %v1352
    %v1363 = vmul.f32 %v1354, %v1354
    %v1364 = vmul.f32 %v1338, %v1356
    %v1365 = vmul.f32 %v1340, %v1357
    %v1366 = vmul.f32 %v1342, %v1358
    %v1367 = vmul.f32 %v1344, %v1359
    %v1368 = vmul.f32 %v1348, %v1360
    %v1369 = vmul.f32 %v1350, %v1361
    %v1370 = vmul.f32 %v1352, %v1362
    %v1371 = vmul.f32 %v1354, %v1363
    %v1372 = vmul.f32 %v1364, 0.044715
    %v1373 = vmul.f32 %v1365, 0.044715
    %v1374 = vmul.f32 %v1366, 0.044715
    %v1375 = vmul.f32 %v1367, 0.044715
    %v1376 = vmul.f32 %v1368, 0.044715
    %v1377 = vmul.f32 %v1369, 0.044715
    %v1378 = vmul.f32 %v1370, 0.044715
    %v1379 = vmul.f32 %v1371, 0.044715
    %v1380 = vadd.f32 %v1338, %v1372
    %v1381 = vadd.f32 %v1340, %v1373
    %v1382 = vadd.f32 %v1342, %v1374
    %v1383 = vadd.f32 %v1344, %v1375
    %v1384 = vadd.f32 %v1348, %v1376
    %v1385 = vadd.f32 %v1350, %v1377
    %v1386 = vadd.f32 %v1352, %v1378
    %v1387 = vadd.f32 %v1354, %v1379
    %v1388 = vmul.f32 %v1380, 0.7978846
    %v1389 = vmul.f32 %v1381, 0.7978846
    %v1390 = vmul.f32 %v1382, 0.7978846
    %v1391 = vmul.f32 %v1383, 0.7978846
    %v1392 = vmul.f32 %v1384, 0.7978846
    %v1393 = vmul.f32 %v1385, 0.7978846
    %v1394 = vmul.f32 %v1386, 0.7978846
    %v1395 = vmul.f32 %v1387, 0.7978846
    %v1396 = vtanh.pop %v1388
    %v1397 = vtanh.pop %v1389
    %v1398 = vtanh.pop %v1390
    %v1399 = vtanh.pop %v1391
    %v1400 = vtanh.pop %v1392
    %v1401 = vtanh.pop %v1393
    %v1402 = vtanh.pop %v1394
    %v1403 = vtanh.pop %v1395
    %v1404 = vadd.f32 %v1396, 1.0
    %v1405 = vadd.f32 %v1397, 1.0
    %v1406 = vadd.f32 %v1398, 1.0
    %v1407 = vadd.f32 %v1399, 1.0
    %v1408 = vadd.f32 %v1400, 1.0
    %v1409 = vadd.f32 %v1401, 1.0
    %v1410 = vadd.f32 %v1402, 1.0
    %v1411 = vadd.f32 %v1403, 1.0
    %v1412 = vmul.f32 %v1404, 0.5
    %v1413 = vmul.f32 %v1405, 0.5
    %v1414 = vmul.f32 %v1406, 0.5
    %v1415 = vmul.f32 %v1407, 0.5
    %v1416 = vmul.f32 %v1408, 0.5
    %v1417 = vmul.f32 %v1409, 0.5
    %v1418 = vmul.f32 %v1410, 0.5
    %v1419 = vmul.f32 %v1411, 0.5
    %v1420 = vmul.f32 %v1338, %v1412
    %v1421 = vmul.f32 %v1340, %v1413
    %v1422 = vmul.f32 %v1342, %v1414
    %v1423 = vmul.f32 %v1344, %v1415
    %v1424 = vmul.f32 %v1348, %v1416
    %v1425 = vmul.f32 %v1350, %v1417
    %v1426 = vmul.f32 %v1352, %v1418
    %v1427 = vmul.f32 %v1354, %v1419
    %v1428 = vpack.c.bf16 %v1422, %v1420
    %v1429 = vpack.c.bf16 %v1423, %v1421
    %v1430 = vpack.c.bf16 %v1426, %v1424
    %v1431 = vpack.c.bf16 %v1427, %v1425
    %v1432 = vld [vmem:[#allocation9] sm:$0xf]
    %v1433 = vld [vmem:[#allocation9 + $0x4] sm:$0xf]
    %v1434 = vld [vmem:[#allocation9 + $0x8] sm:$0xf]
    %v1435 = vld [vmem:[#allocation9 + $0xc] sm:$0xf]
    %v1436 = vld [vmem:[#allocation9 + $0x10] sm:$0xf]
    %v1437 = vld [vmem:[#allocation9 + $0x14] sm:$0xf]
    %v1438 = vld [vmem:[#allocation9 + $0x18] sm:$0xf]
    %v1439 = vld [vmem:[#allocation9 + $0x1c] sm:$0xf]
    %v1440 = vld [vmem:[#allocation9 + $0x20] sm:$0xf]
    %v1441 = vld [vmem:[#allocation9 + $0x24] sm:$0xf]
    %v1442 = vld [vmem:[#allocation9 + $0x28] sm:$0xf]
    %v1443 = vld [vmem:[#allocation9 + $0x2c] sm:$0xf]
    %v1444 = vld [vmem:[#allocation9 + $0x30] sm:$0xf]
    %v1445 = vld [vmem:[#allocation9 + $0x34] sm:$0xf]
    %v1446 = vld [vmem:[#allocation9 + $0x38] sm:$0xf]
    %v1447 = vld [vmem:[#allocation9 + $0x3c] sm:$0xf]
    %v1448 = vld [vmem:[#allocation9 + $0x40] sm:$0xf]
    %v1449 = vld [vmem:[#allocation9 + $0x44] sm:$0xf]
    %v1450 = vld [vmem:[#allocation9 + $0x48] sm:$0xf]
    %v1451 = vld [vmem:[#allocation9 + $0x4c] sm:$0xf]
    %v1452 = vld [vmem:[#allocation9 + $0x50] sm:$0xf]
    %v1453 = vld [vmem:[#allocation9 + $0x54] sm:$0xf]
    %v1454 = vld [vmem:[#allocation9 + $0x58] sm:$0xf]
    %v1455 = vld [vmem:[#allocation9 + $0x5c] sm:$0xf]
    %v1456 = vld [vmem:[#allocation9 + $0x60] sm:$0xf]
    %v1457 = vld [vmem:[#allocation9 + $0x64] sm:$0xf]
    %v1458 = vld [vmem:[#allocation9 + $0x68] sm:$0xf]
    %v1459 = vld [vmem:[#allocation9 + $0x6c] sm:$0xf]
    %v1460 = vld [vmem:[#allocation9 + $0x70] sm:$0xf]
    %v1461 = vld [vmem:[#allocation9 + $0x74] sm:$0xf]
    %v1462 = vld [vmem:[#allocation9 + $0x78] sm:$0xf]
    %v1463 = vld [vmem:[#allocation9 + $0x7c] sm:$0xf]
    %v1464 = vld [vmem:[%s16] sm:$0x1]
    %v1466 = vlaneseq
    %v1467 = vshrl.u32 %v1466, 7
    %v1468 = vsub.s32 0, %v1467
    %v1469 = vrot.slane %v1464, %v1468
    %v1503 = vunpack.c.l.b16 %v1432
    %v1504 = vunpack.c.l.b16 %v1433
    %v1505 = vunpack.c.l.b16 %v1434
    %v1506 = vunpack.c.l.b16 %v1435
    %v1507 = vunpack.c.l.b16 %v1436
    %v1508 = vunpack.c.l.b16 %v1437
    %v1509 = vunpack.c.l.b16 %v1438
    %v1510 = vunpack.c.l.b16 %v1439
    %v1511 = vunpack.c.l.b16 %v1440
    %v1512 = vunpack.c.l.b16 %v1441
    %v1513 = vunpack.c.l.b16 %v1442
    %v1514 = vunpack.c.l.b16 %v1443
    %v1515 = vunpack.c.l.b16 %v1444
    %v1516 = vunpack.c.l.b16 %v1445
    %v1517 = vunpack.c.l.b16 %v1446
    %v1518 = vunpack.c.l.b16 %v1447
    %v1519 = vunpack.c.l.b16 %v1448
    %v1520 = vunpack.c.l.b16 %v1449
    %v1521 = vunpack.c.l.b16 %v1450
    %v1522 = vunpack.c.l.b16 %v1451
    %v1523 = vunpack.c.l.b16 %v1452
    %v1524 = vunpack.c.l.b16 %v1453
    %v1525 = vunpack.c.l.b16 %v1454
    %v1526 = vunpack.c.l.b16 %v1455
    %v1527 = vunpack.c.l.b16 %v1456
    %v1528 = vunpack.c.l.b16 %v1457
    %v1529 = vunpack.c.l.b16 %v1458
    %v1530 = vunpack.c.l.b16 %v1459
    %v1531 = vunpack.c.l.b16 %v1460
    %v1532 = vunpack.c.l.b16 %v1461
    %v1533 = vunpack.c.l.b16 %v1462
    %v1534 = vunpack.c.l.b16 %v1463
    %v1535 = vpack.c.b16 %v1504, %v1503
    %v1536 = vpack.c.b16 %v1506, %v1505
    %v1537 = vpack.c.b16 %v1508, %v1507
    %v1538 = vpack.c.b16 %v1510, %v1509
    %v1539 = vpack.c.b16 %v1512, %v1511
    %v1540 = vpack.c.b16 %v1514, %v1513
    %v1541 = vpack.c.b16 %v1516, %v1515
    %v1542 = vpack.c.b16 %v1518, %v1517
    %v1543 = vpack.c.b16 %v1520, %v1519
    %v1544 = vpack.c.b16 %v1522, %v1521
    %v1545 = vpack.c.b16 %v1524, %v1523
    %v1546 = vpack.c.b16 %v1526, %v1525
    %v1547 = vpack.c.b16 %v1528, %v1527
    %v1548 = vpack.c.b16 %v1530, %v1529
    %v1549 = vpack.c.b16 %v1532, %v1531
    %v1550 = vpack.c.b16 %v1534, %v1533
    %1567 = vmatprep.subr.bf16.mxu0 0
    %1568 = vmatpush1.bf16.msra.mxu0 %v1542
    %1569 = vmatprep.subr.bf16.mxu0 0
    %1570 = vmatpush1.bf16.msra.mxu0 %v1541
    %1571 = vmatprep.subr.bf16.mxu0 0
    %1572 = vmatpush1.bf16.msra.mxu0 %v1540
    %1573 = vmatprep.subr.bf16.mxu0 0
    %1574 = vmatpush1.bf16.msra.mxu0 %v1539
    %1575 = vmatprep.subr.bf16.mxu0 0
    %1576 = vmatpush1.bf16.msra.mxu0 %v1538
    %1577 = vmatprep.subr.bf16.mxu0 0
    %1578 = vmatpush1.bf16.msra.mxu0 %v1537
    %1579 = vmatprep.subr.bf16.mxu0 0
    %1580 = vmatpush1.bf16.msra.mxu0 %v1536
    %1581 = vmatprep.subr.bf16.mxu0 0
    %1582 = vmatpush1.bf16.msra.mxu0 %v1535
    %1583 = vmatprep.subr.bf16.mxu0 0
    %1584 = vmatpush2.bf16.msra.mxu0 %v1550
    %1585 = vmatprep.subr.bf16.mxu0 0
    %1586 = vmatpush2.bf16.msra.mxu0 %v1549
    %1587 = vmatprep.subr.bf16.mxu0 0
    %1588 = vmatpush2.bf16.msra.mxu0 %v1548
    %1589 = vmatprep.subr.bf16.mxu0 0
    %1590 = vmatpush2.bf16.msra.mxu0 %v1547
    %1591 = vmatprep.subr.bf16.mxu0 0
    %1592 = vmatpush2.bf16.msra.mxu0 %v1546
    %1593 = vmatprep.subr.bf16.mxu0 0
    %1594 = vmatpush2.bf16.msra.mxu0 %v1545
    %1595 = vmatprep.subr.bf16.mxu0 0
    %1596 = vmatpush2.bf16.msra.mxu0 %v1544
    %1597 = vmatprep.subr.bf16.mxu0 0
    %1598 = vmatpush2.bf16.msra.mxu0 %v1543
    %1599 = vmatprep.mubr.bf16.mxu0 %v1429
    %1600 = vmatmul.mubr.bf16.gmra.mxu0 %v1428
    %v1601 = vpop.f32.mrf.mxu0
    %v1602 = vadd.f32 %v1469, %v1601
    %v1603 = vpop.f32.mrf.mxu0
    %v1604 = vpop.f32.mrf.mxu0
    %v1605 = vadd.f32 %v1469, %v1604
    %v1606 = vpop.f32.mrf.mxu0
    %1607 = vmatprep.mubr.bf16.mxu0 %v1431
    %1608 = vmatmul.mubr.bf16.gmra.mxu0 %v1430
    %v1609 = vpop.f32.mrf.mxu0
    %v1610 = vadd.f32 %v1469, %v1609
    %v1611 = vpop.f32.mrf.mxu0
    %v1612 = vpop.f32.mrf.mxu0
    %v1613 = vadd.f32 %v1469, %v1612
    %v1614 = vpop.f32.mrf.mxu0
    %1615 = vdwg.mxu0
    %v1616 = vadd.f32 %v1602, %v1189
    %v1617 = vadd.f32 %v1605, %v1190
    %v1618 = vadd.f32 %v1610, %v1191
    %v1619 = vadd.f32 %v1613, %v1192
    %v1620 = vld [vmem:[%s17] sm:$0x1]
    %v1621 = vld [vmem:[%s18] sm:$0x1]
    %1622 = vadd.xlane.f32.xlu0 %v1616
    %v1623 = vpop.xlane.xlu0 %1622
    %1624 = vadd.xlane.f32.xlu0 %v1617
    %v1625 = vpop.xlane.xlu0 %1624
    %1626 = vadd.xlane.f32.xlu0 %v1618
    %v1627 = vpop.xlane.xlu0 %1626
    %1628 = vadd.xlane.f32.xlu0 %v1619
    %v1629 = vpop.xlane.xlu0 %1628
    %v1630 = vmul.f32 %v1623, %v322
    %v1631 = vmul.f32 %v1625, %v322
    %v1632 = vmul.f32 %v1627, %v322
    %v1633 = vmul.f32 %v1629, %v322
    %v1634 = vsub.f32 %v1616, %v1630
    %v1635 = vsub.f32 %v1617, %v1631
    %v1636 = vsub.f32 %v1618, %v1632
    %v1637 = vsub.f32 %v1619, %v1633
    %v1638 = vmul.f32 %v1634, %v1634
    %v1639 = vmul.f32 %v1635, %v1635
    %v1640 = vmul.f32 %v1636, %v1636
    %v1641 = vmul.f32 %v1637, %v1637
    %1642 = vadd.xlane.f32.xlu0 %v1638
    %v1643 = vpop.xlane.xlu0 %1642
    %1644 = vadd.xlane.f32.xlu0 %v1639
    %v1645 = vpop.xlane.xlu0 %1644
    %1646 = vadd.xlane.f32.xlu0 %v1640
    %v1647 = vpop.xlane.xlu0 %1646
    %1648 = vadd.xlane.f32.xlu0 %v1641
    %v1649 = vpop.xlane.xlu0 %1648
    %v1650 = vmul.f32 %v1643, %v322
    %v1651 = vmul.f32 %v1645, %v322
    %v1652 = vmul.f32 %v1647, %v322
    %v1653 = vmul.f32 %v1649, %v322
    %v1654 = vadd.f32 %v1650, 1e-12
    %v1655 = vadd.f32 %v1651, 1e-12
    %v1656 = vadd.f32 %v1652, 1e-12
    %v1657 = vadd.f32 %v1653, 1e-12
    %v1658 = vrsqrt.pop %v1654
    %v1659 = vrsqrt.pop %v1655
    %v1660 = vrsqrt.pop %v1656
    %v1661 = vrsqrt.pop %v1657
    %v1662 = vmul.f32 %v1634, %v1658
    %v1663 = vmul.f32 %v1635, %v1659
    %v1664 = vmul.f32 %v1636, %v1660
    %v1665 = vmul.f32 %v1637, %v1661
    %v1667 = vlaneseq
    %v1668 = vshrl.u32 %v1667, 7
    %v1669 = vsub.s32 0, %v1668
    %v1670 = vrot.slane %v1620, %v1669
    %v1672 = vmul.f32 %v1662, %v1670
    %v1673 = vmul.f32 %v1663, %v1670
    %v1674 = vmul.f32 %v1664, %v1670
    %v1675 = vmul.f32 %v1665, %v1670
    %v1677 = vlaneseq
    %v1678 = vshrl.u32 %v1677, 7
    %v1679 = vsub.s32 0, %v1678
    %v1680 = vrot.slane %v1621, %v1679
    %v1682 = vadd.f32 %v1672, %v1680
    %v1683 = vadd.f32 %v1673, %v1680
    %v1684 = vadd.f32 %v1674, %v1680
    %v1685 = vadd.f32 %v1675, %v1680
    %v1686 = vpack.c.bf16 %v1683, %v1682
    %v1687 = vpack.c.bf16 %v1685, %v1684
    %s1688 = scalar_lea.vmem [#allocation4], 192
    %v1689 = vld [vmem:[%s1688] sm:$0xff]
    %v1690 = vld [vmem:[%s1688 + $0x8] sm:$0xf]
    %v1691 = vld [vmem:[%s1688 + $0xc] sm:$0xff]
    %v1692 = vld [vmem:[%s1688 + $0x14] sm:$0xf]
    %v1693 = vld [vmem:[%s1688 + $0x18] sm:$0xff]
    %v1694 = vld [vmem:[%s1688 + $0x20] sm:$0xf]
    %v1695 = vld [vmem:[%s1688 + $0x24] sm:$0xff]
    %v1696 = vld [vmem:[%s1688 + $0x2c] sm:$0xf]
    %v1697 = vld [vmem:[%s1688 + $0x30] sm:$0xff]
    %v1698 = vld [vmem:[%s1688 + $0x38] sm:$0xf]
    %v1699 = vld [vmem:[%s1688 + $0x3c] sm:$0xff]
    %v1700 = vld [vmem:[%s1688 + $0x44] sm:$0xf]
    %v1701 = vld [vmem:[%s1688 + $0x48] sm:$0xff]
    %v1702 = vld [vmem:[%s1688 + $0x50] sm:$0xf]
    %v1703 = vld [vmem:[%s1688 + $0x54] sm:$0xff]
    %v1704 = vld [vmem:[%s1688 + $0x5c] sm:$0xf]
    %v1705 = vld [vmem:[%s1688 + $0x60] sm:$0xff]
    %v1706 = vld [vmem:[%s1688 + $0x68] sm:$0xf]
    %v1707 = vld [vmem:[%s1688 + $0x6c] sm:$0xff]
    %v1708 = vld [vmem:[%s1688 + $0x74] sm:$0xf]
    %v1709 = vld [vmem:[%s1688 + $0x78] sm:$0xff]
    %v1710 = vld [vmem:[%s1688 + $0x80] sm:$0xf]
    %v1711 = vld [vmem:[%s1688 + $0x84] sm:$0xff]
    %v1712 = vld [vmem:[%s1688 + $0x8c] sm:$0xf]
    %v1713 = vld [vmem:[%s1688 + $0x90] sm:$0xff]
    %v1714 = vld [vmem:[%s1688 + $0x98] sm:$0xf]
    %v1715 = vld [vmem:[%s1688 + $0x9c] sm:$0xff]
    %v1716 = vld [vmem:[%s1688 + $0xa4] sm:$0xf]
    %v1717 = vld [vmem:[%s1688 + $0xa8] sm:$0xff]
    %v1718 = vld [vmem:[%s1688 + $0xb0] sm:$0xf]
    %v1719 = vld [vmem:[%s1688 + $0xb4] sm:$0xff]
    %v1720 = vld [vmem:[%s1688 + $0xbc] sm:$0xf]
    %s1721 = scalar_lea.vmem %s8, 3
    %v1722 = vld [vmem:[%s1721] sm:$0x7]
    %v1724 = vlaneseq
    %v1725 = vshrl.u32 %v1724, 7
    %v1726 = vsub.s32 0, %v1725
    %v1727 = vrot.slane %v1722, %v1726
    %v1728 = vlaneseq
    %v1729 = vshrl.u32 %v1728, 7
    %v1730 = vsub.s32 1, %v1729
    %v1731 = vrot.slane %v1722, %v1730
    %v1732 = vlaneseq
    %v1733 = vshrl.u32 %v1732, 7
    %v1734 = vsub.s32 2, %v1733
    %v1735 = vrot.slane %v1722, %v1734
    %v1771 = vunpack.c.l.b16 %v1689
    %v1772 = vunpack.c.h.b16 %v1689
    %v1773 = vunpack.c.l.b16 %v1690
    %v1774 = vunpack.c.l.b16 %v1691
    %v1775 = vunpack.c.h.b16 %v1691
    %v1776 = vunpack.c.l.b16 %v1692
    %v1777 = vunpack.c.l.b16 %v1693
    %v1778 = vunpack.c.h.b16 %v1693
    %v1779 = vunpack.c.l.b16 %v1694
    %v1780 = vunpack.c.l.b16 %v1695
    %v1781 = vunpack.c.h.b16 %v1695
    %v1782 = vunpack.c.l.b16 %v1696
    %v1783 = vunpack.c.l.b16 %v1697
    %v1784 = vunpack.c.h.b16 %v1697
    %v1785 = vunpack.c.l.b16 %v1698
    %v1786 = vunpack.c.l.b16 %v1699
    %v1787 = vunpack.c.h.b16 %v1699
    %v1788 = vunpack.c.l.b16 %v1700
    %v1789 = vunpack.c.l.b16 %v1701
    %v1790 = vunpack.c.h.b16 %v1701
    %v1791 = vunpack.c.l.b16 %v1702
    %v1792 = vunpack.c.l.b16 %v1703
    %v1793 = vunpack.c.h.b16 %v1703
    %v1794 = vunpack.c.l.b16 %v1704
    %v1795 = vunpack.c.l.b16 %v1705
    %v1796 = vunpack.c.h.b16 %v1705
    %v1797 = vunpack.c.l.b16 %v1706
    %v1798 = vunpack.c.l.b16 %v1707
    %v1799 = vunpack.c.h.b16 %v1707
    %v1800 = vunpack.c.l.b16 %v1708
    %v1801 = vunpack.c.l.b16 %v1709
    %v1802 = vunpack.c.h.b16 %v1709
    %v1803 = vunpack.c.l.b16 %v1710
    %v1804 = vunpack.c.l.b16 %v1711
    %v1805 = vunpack.c.h.b16 %v1711
    %v1806 = vunpack.c.l.b16 %v1712
    %v1807 = vunpack.c.l.b16 %v1713
    %v1808 = vunpack.c.h.b16 %v1713
    %v1809 = vunpack.c.l.b16 %v1714
    %v1810 = vunpack.c.l.b16 %v1715
    %v1811 = vunpack.c.h.b16 %v1715
    %v1812 = vunpack.c.l.b16 %v1716
    %v1813 = vunpack.c.l.b16 %v1717
    %v1814 = vunpack.c.h.b16 %v1717
    %v1815 = vunpack.c.l.b16 %v1718
    %v1816 = vunpack.c.l.b16 %v1719
    %v1817 = vunpack.c.h.b16 %v1719
    %v1818 = vunpack.c.l.b16 %v1720
    %v1819 = vpack.c.b16 %v1774, %v1771
    %v1820 = vpack.c.b16 %v1775, %v1772
    %v1821 = vpack.c.b16 %v1776, %v1773
    %v1822 = vpack.c.b16 %v1780, %v1777
    %v1823 = vpack.c.b16 %v1781, %v1778
    %v1824 = vpack.c.b16 %v1782, %v1779
    %v1825 = vpack.c.b16 %v1786, %v1783
    %v1826 = vpack.c.b16 %v1787, %v1784
    %v1827 = vpack.c.b16 %v1788, %v1785
    %v1828 = vpack.c.b16 %v1792, %v1789
    %v1829 = vpack.c.b16 %v1793, %v1790
    %v1830 = vpack.c.b16 %v1794, %v1791
    %v1831 = vpack.c.b16 %v1798, %v1795
    %v1832 = vpack.c.b16 %v1799, %v1796
    %v1833 = vpack.c.b16 %v1800, %v1797
    %v1834 = vpack.c.b16 %v1804, %v1801
    %v1835 = vpack.c.b16 %v1805, %v1802
    %v1836 = vpack.c.b16 %v1806, %v1803
    %v1837 = vpack.c.b16 %v1810, %v1807
    %v1838 = vpack.c.b16 %v1811, %v1808
    %v1839 = vpack.c.b16 %v1812, %v1809
    %v1840 = vpack.c.b16 %v1816, %v1813
    %v1841 = vpack.c.b16 %v1817, %v1814
    %v1842 = vpack.c.b16 %v1818, %v1815
    %1867 = vmatprep.subr.bf16.mxu0 %v1841
    %1868 = vmatpush1.bf16.msra.mxu0 %v1840
    %1869 = vmatprep.subr.bf16.mxu0 %v1838
    %1870 = vmatpush1.bf16.msra.mxu0 %v1837
    %1871 = vmatprep.subr.bf16.mxu0 %v1835
    %1872 = vmatpush1.bf16.msra.mxu0 %v1834
    %1873 = vmatprep.subr.bf16.mxu0 %v1832
    %1874 = vmatpush1.bf16.msra.mxu0 %v1831
    %1875 = vmatprep.subr.bf16.mxu0 %v1829
    %1876 = vmatpush1.bf16.msra.mxu0 %v1828
    %1877 = vmatprep.subr.bf16.mxu0 %v1826
    %1878 = vmatpush1.bf16.msra.mxu0 %v1825
    %1879 = vmatprep.subr.bf16.mxu0 %v1823
    %1880 = vmatpush1.bf16.msra.mxu0 %v1822
    %1881 = vmatprep.subr.bf16.mxu0 %v1820
    %1882 = vmatpush1.bf16.msra.mxu0 %v1819
    %1883 = vmatprep.subr.bf16.mxu0 0
    %1884 = vmatpush2.bf16.msra.mxu0 0
    %1885 = vmatprep.subr.bf16.mxu0 0
    %1886 = vmatpush2.bf16.msra.mxu0 0
    %1887 = vmatprep.subr.bf16.mxu0 0
    %1888 = vmatpush2.bf16.msra.mxu0 0
    %1889 = vmatprep.subr.bf16.mxu0 0
    %1890 = vmatpush2.bf16.msra.mxu0 0
    %1891 = vmatprep.subr.bf16.mxu0 0
    %1892 = vmatpush2.bf16.msra.mxu0 0
    %1893 = vmatprep.subr.bf16.mxu0 0
    %1894 = vmatpush2.bf16.msra.mxu0 0
    %1895 = vmatprep.subr.bf16.mxu0 0
    %1896 = vmatpush2.bf16.msra.mxu0 0
    %1897 = vmatprep.subr.bf16.mxu0 0
    %1898 = vmatpush2.bf16.msra.mxu0 0
    %1899 = vmatprep.mubr.bf16.mxu0 0
    %1900 = vmatmul.mubr.bf16.gmra.mxu0 %v1686
    %v1901 = vpop.f32.mrf.mxu0
    %v1902 = vadd.f32 %v1727, %v1901
    %v1903 = vpop.f32.mrf.mxu0
    %v1904 = vadd.f32 %v1731, %v1903
    %v1905 = vpop.f32.mrf.mxu0
    %v1906 = vadd.f32 %v1727, %v1905
    %v1907 = vpop.f32.mrf.mxu0
    %v1908 = vadd.f32 %v1731, %v1907
    %1909 = vmatprep.mubr.bf16.mxu0 0
    %1910 = vmatmul.mubr.bf16.gmra.mxu0 %v1687
    %v1911 = vpop.f32.mrf.mxu0
    %v1912 = vadd.f32 %v1727, %v1911
    %v1913 = vpop.f32.mrf.mxu0
    %v1914 = vadd.f32 %v1731, %v1913
    %v1915 = vpop.f32.mrf.mxu0
    %v1916 = vadd.f32 %v1727, %v1915
    %v1917 = vpop.f32.mrf.mxu0
    %v1918 = vadd.f32 %v1731, %v1917
    %1919 = vdwg.mxu0
    %1920 = vmatprep.subr.bf16.mxu0 0
    %1921 = vmatpush1.bf16.msra.mxu0 %v1842
    %1922 = vmatprep.subr.bf16.mxu0 0
    %1923 = vmatpush1.bf16.msra.mxu0 %v1839
    %1924 = vmatprep.subr.bf16.mxu0 0
    %1925 = vmatpush1.bf16.msra.mxu0 %v1836
    %1926 = vmatprep.subr.bf16.mxu0 0
    %1927 = vmatpush1.bf16.msra.mxu0 %v1833
    %1928 = vmatprep.subr.bf16.mxu0 0
    %1929 = vmatpush1.bf16.msra.mxu0 %v1830
    %1930 = vmatprep.subr.bf16.mxu0 0
    %1931 = vmatpush1.bf16.msra.mxu0 %v1827
    %1932 = vmatprep.subr.bf16.mxu0 0
    %1933 = vmatpush1.bf16.msra.mxu0 %v1824
    %1934 = vmatprep.subr.bf16.mxu0 0
    %1935 = vmatpush1.bf16.msra.mxu0 %v1821
    %1936 = vmatprep.subr.bf16.mxu0 0
    %1937 = vmatpush2.bf16.msra.mxu0 0
    %1938 = vmatprep.subr.bf16.mxu0 0
    %1939 = vmatpush2.bf16.msra.mxu0 0
    %1940 = vmatprep.subr.bf16.mxu0 0
    %1941 = vmatpush2.bf16.msra.mxu0 0
    %1942 = vmatprep.subr.bf16.mxu0 0
    %1943 = vmatpush2.bf16.msra.mxu0 0
    %1944 = vmatprep.subr.bf16.mxu0 0
    %1945 = vmatpush2.bf16.msra.mxu0 0
    %1946 = vmatprep.subr.bf16.mxu0 0
    %1947 = vmatpush2.bf16.msra.mxu0 0
    %1948 = vmatprep.subr.bf16.mxu0 0
    %1949 = vmatpush2.bf16.msra.mxu0 0
    %1950 = vmatprep.subr.bf16.mxu0 0
    %1951 = vmatpush2.bf16.msra.mxu0 0
    %1952 = vmatprep.mubr.bf16.mxu0 0
    %1953 = vmatmul.mubr.bf16.gmra.mxu0 %v1686
    %v1954 = vpop.f32.mrf.mxu0
    %v1955 = vadd.f32 %v1735, %v1954
    %v1956 = vpop.f32.mrf.mxu0
    %v1957 = vpop.f32.mrf.mxu0
    %v1958 = vadd.f32 %v1735, %v1957
    %v1959 = vpop.f32.mrf.mxu0
    %1960 = vmatprep.mubr.bf16.mxu0 0
    %1961 = vmatmul.mubr.bf16.gmra.mxu0 %v1687
    %v1962 = vpop.f32.mrf.mxu0
    %v1963 = vadd.f32 %v1735, %v1962
    %v1964 = vpop.f32.mrf.mxu0
    %v1965 = vpop.f32.mrf.mxu0
    %v1966 = vadd.f32 %v1735, %v1965
    %v1967 = vpop.f32.mrf.mxu0
    %1968 = vdwg.mxu0
    %v1969 = vpack.c.bf16 %v1906, %v1902
    %v1970 = vpack.c.bf16 %v1916, %v1912
    %v1971 = vmul.f32 %v1904, %v387
    %v1972 = vmul.f32 %v1908, %v387
    %v1973 = vmul.f32 %v1914, %v387
    %v1974 = vmul.f32 %v1918, %v387
    %v1975 = vpack.c.bf16 %v1972, %v1971
    %v1976 = vpack.c.bf16 %v1974, %v1973
    %v1977 = vmul.f32 %v1955, %v387
    %v1978 = vmul.f32 %v1958, %v387
    %v1979 = vmul.f32 %v1963, %v387
    %v1980 = vmul.f32 %v1966, %v387
    %v1981 = vpack.c.bf16 %v1978, %v1977
    %v1982 = vpack.c.bf16 %v1980, %v1979
    %1983 = vmatprep.subr.bf16.mxu0 0
    %1984 = vmatpush1.bf16.xpose.msra.mxu0 0
    %1985 = vmatprep.subr.bf16.mxu0 0
    %1986 = vmatpush1.bf16.xpose.msra.mxu0 0
    %1987 = vmatprep.subr.bf16.mxu0 0
    %1988 = vmatpush1.bf16.xpose.msra.mxu0 0
    %1989 = vmatprep.subr.bf16.mxu0 0
    %1990 = vmatpush1.bf16.xpose.msra.mxu0 0
    %1991 = vmatprep.subr.bf16.mxu0 0
    %1992 = vmatpush1.bf16.xpose.msra.mxu0 0
    %1993 = vmatprep.subr.bf16.mxu0 0
    %1994 = vmatpush1.bf16.xpose.msra.mxu0 0
    %1995 = vmatprep.subr.bf16.mxu0 0
    %1996 = vmatpush1.bf16.xpose.msra.mxu0 %v1976
    %1997 = vmatprep.subr.bf16.mxu0 0
    %1998 = vmatpush1.bf16.xpose.msra.mxu0 %v1975
    %1999 = vmatprep.subr.bf16.mxu0 0
    %2000 = vmatpush2.bf16.xpose.msra.mxu0 0
    %2001 = vmatprep.subr.bf16.mxu0 0
    %2002 = vmatpush2.bf16.xpose.msra.mxu0 0
    %2003 = vmatprep.subr.bf16.mxu0 0
    %2004 = vmatpush2.bf16.xpose.msra.mxu0 0
    %2005 = vmatprep.subr.bf16.mxu0 0
    %2006 = vmatpush2.bf16.xpose.msra.mxu0 0
    %2007 = vmatprep.subr.bf16.mxu0 0
    %2008 = vmatpush2.bf16.xpose.msra.mxu0 0
    %2009 = vmatprep.subr.bf16.mxu0 0
    %2010 = vmatpush2.bf16.xpose.msra.mxu0 0
    %2011 = vmatprep.subr.bf16.mxu0 0
    %2012 = vmatpush2.bf16.xpose.msra.mxu0 0
    %2013 = vmatprep.subr.bf16.mxu0 0
    %2014 = vmatpush2.bf16.xpose.msra.mxu0 0
    %2015 = vmatprep.mubr.bf16.mxu0 0
    %2016 = vmatmul.mubr.bf16.gmra.mxu0 %v1969
    %v2017 = vpop.f32.mrf.mxu0
    %v2018 = vadd.f32 %v379, %v2017
    %v2019 = vpop.f32.mrf.mxu0
    %v2020 = vpop.f32.mrf.mxu0
    %v2021 = vadd.f32 %v380, %v2020
    %v2022 = vpop.f32.mrf.mxu0
    %2023 = vmatprep.mubr.bf16.mxu0 0
    %2024 = vmatmul.mubr.bf16.gmra.mxu0 %v1970
    %v2025 = vpop.f32.mrf.mxu0
    %v2026 = vadd.f32 %v381, %v2025
    %v2027 = vpop.f32.mrf.mxu0
    %v2028 = vpop.f32.mrf.mxu0
    %v2029 = vadd.f32 %v382, %v2028
    %v2030 = vpop.f32.mrf.mxu0
    %2031 = vdwg.mxu0
    %v2032 = vsel %vm737, %v2018, -inf
    %2033 = vmax.xlane.f32.xlu0 %v2032
    %v2034 = vpop.xlane.xlu0 %2033
    %v2035 = vsel %vm737, %v2021, -inf
    %2036 = vmax.xlane.f32.xlu0 %v2035
    %v2037 = vpop.xlane.xlu0 %2036
    %v2038 = vsel %vm737, %v2026, -inf
    %2039 = vmax.xlane.f32.xlu0 %v2038
    %v2040 = vpop.xlane.xlu0 %2039
    %v2041 = vsel %vm737, %v2029, -inf
    %2042 = vmax.xlane.f32.xlu0 %v2041
    %v2043 = vpop.xlane.xlu0 %2042
    %v2044 = vsub.f32 %v2018, %v2034
    %v2045 = vsub.f32 %v2021, %v2037
    %v2046 = vsub.f32 %v2026, %v2040
    %v2047 = vsub.f32 %v2029, %v2043
    %v2048 = vmul.f32 %v2044, 1.442695
    %v2049 = vpow.pop %v2048
    %v2050 = vmul.f32 %v2045, 1.442695
    %v2051 = vpow.pop %v2050
    %v2052 = vmul.f32 %v2046, 1.442695
    %v2053 = vpow.pop %v2052
    %v2054 = vmul.f32 %v2047, 1.442695
    %v2055 = vpow.pop %v2054
    %v2056 = vsel %vm737, %v2049, 0.0
    %2057 = vadd.xlane.f32.xlu0 %v2056
    %v2058 = vpop.xlane.xlu0 %2057
    %v2059 = vsel %vm737, %v2051, 0.0
    %2060 = vadd.xlane.f32.xlu0 %v2059
    %v2061 = vpop.xlane.xlu0 %2060
    %v2062 = vsel %vm737, %v2053, 0.0
    %2063 = vadd.xlane.f32.xlu0 %v2062
    %v2064 = vpop.xlane.xlu0 %2063
    %v2065 = vsel %vm737, %v2055, 0.0
    %2066 = vadd.xlane.f32.xlu0 %v2065
    %v2067 = vpop.xlane.xlu0 %2066
    %v2068 = vrcp.pop %v2058
    %v2069 = vrcp.pop %v2061
    %v2070 = vrcp.pop %v2064
    %v2071 = vrcp.pop %v2067
    %v2072 = vmul.f32 %v2049, %v2068
    %v2073 = vmul.f32 %v2051, %v2069
    %v2074 = vmul.f32 %v2053, %v2070
    %v2075 = vmul.f32 %v2055, %v2071
    %v2076 = vpack.c.bf16 %v2073, %v2072
    %v2077 = vpack.c.bf16 %v2075, %v2074
    %v2078 = vmul.f32 %v1904, %v392
    %v2079 = vmul.f32 %v1908, %v392
    %v2080 = vmul.f32 %v1914, %v392
    %v2081 = vmul.f32 %v1918, %v392
    %v2082 = vpack.c.bf16 %v2079, %v2078
    %v2083 = vpack.c.bf16 %v2081, %v2080
    %v2084 = vmul.f32 %v1955, %v392
    %v2085 = vmul.f32 %v1958, %v392
    %v2086 = vmul.f32 %v1963, %v392
    %v2087 = vmul.f32 %v1966, %v392
    %v2088 = vpack.c.bf16 %v2085, %v2084
    %v2089 = vpack.c.bf16 %v2087, %v2086
    %2090 = vmatprep.subr.bf16.mxu0 0
    %2091 = vmatpush1.bf16.xpose.msra.mxu0 0
    %2092 = vmatprep.subr.bf16.mxu0 0
    %2093 = vmatpush1.bf16.xpose.msra.mxu0 0
    %2094 = vmatprep.subr.bf16.mxu0 0
    %2095 = vmatpush1.bf16.xpose.msra.mxu0 0
    %2096 = vmatprep.subr.bf16.mxu0 0
    %2097 = vmatpush1.bf16.xpose.msra.mxu0 0
    %2098 = vmatprep.subr.bf16.mxu0 0
    %2099 = vmatpush1.bf16.xpose.msra.mxu0 0
    %2100 = vmatprep.subr.bf16.mxu0 0
    %2101 = vmatpush1.bf16.xpose.msra.mxu0 0
    %2102 = vmatprep.subr.bf16.mxu0 0
    %2103 = vmatpush1.bf16.xpose.msra.mxu0 %v2083
    %2104 = vmatprep.subr.bf16.mxu0 0
    %2105 = vmatpush1.bf16.xpose.msra.mxu0 %v2082
    %2106 = vmatprep.subr.bf16.mxu0 0
    %2107 = vmatpush2.bf16.xpose.msra.mxu0 0
    %2108 = vmatprep.subr.bf16.mxu0 0
    %2109 = vmatpush2.bf16.xpose.msra.mxu0 0
    %2110 = vmatprep.subr.bf16.mxu0 0
    %2111 = vmatpush2.bf16.xpose.msra.mxu0 0
    %2112 = vmatprep.subr.bf16.mxu0 0
    %2113 = vmatpush2.bf16.xpose.msra.mxu0 0
    %2114 = vmatprep.subr.bf16.mxu0 0
    %2115 = vmatpush2.bf16.xpose.msra.mxu0 0
    %2116 = vmatprep.subr.bf16.mxu0 0
    %2117 = vmatpush2.bf16.xpose.msra.mxu0 0
    %2118 = vmatprep.subr.bf16.mxu0 0
    %2119 = vmatpush2.bf16.xpose.msra.mxu0 0
    %2120 = vmatprep.subr.bf16.mxu0 0
    %2121 = vmatpush2.bf16.xpose.msra.mxu0 0
    %2122 = vmatprep.mubr.bf16.mxu0 0
    %2123 = vmatmul.mubr.bf16.gmra.mxu0 %v1969
    %v2124 = vpop.f32.mrf.mxu0
    %v2125 = vadd.f32 %v379, %v2124
    %v2126 = vpop.f32.mrf.mxu0
    %v2127 = vpop.f32.mrf.mxu0
    %v2128 = vadd.f32 %v380, %v2127
    %v2129 = vpop.f32.mrf.mxu0
    %2130 = vmatprep.mubr.bf16.mxu0 0
    %2131 = vmatmul.mubr.bf16.gmra.mxu0 %v1970
    %v2132 = vpop.f32.mrf.mxu0
    %v2133 = vadd.f32 %v381, %v2132
    %v2134 = vpop.f32.mrf.mxu0
    %v2135 = vpop.f32.mrf.mxu0
    %v2136 = vadd.f32 %v382, %v2135
    %v2137 = vpop.f32.mrf.mxu0
    %2138 = vdwg.mxu0
    %v2139 = vsel %vm737, %v2125, -inf
    %2140 = vmax.xlane.f32.xlu0 %v2139
    %v2141 = vpop.xlane.xlu0 %2140
    %v2142 = vsel %vm737, %v2128, -inf
    %2143 = vmax.xlane.f32.xlu0 %v2142
    %v2144 = vpop.xlane.xlu0 %2143
    %v2145 = vsel %vm737, %v2133, -inf
    %2146 = vmax.xlane.f32.xlu0 %v2145
    %v2147 = vpop.xlane.xlu0 %2146
    %v2148 = vsel %vm737, %v2136, -inf
    %2149 = vmax.xlane.f32.xlu0 %v2148
    %v2150 = vpop.xlane.xlu0 %2149
    %v2151 = vsub.f32 %v2125, %v2141
    %v2152 = vsub.f32 %v2128, %v2144
    %v2153 = vsub.f32 %v2133, %v2147
    %v2154 = vsub.f32 %v2136, %v2150
    %v2155 = vmul.f32 %v2151, 1.442695
    %v2156 = vpow.pop %v2155
    %v2157 = vmul.f32 %v2152, 1.442695
    %v2158 = vpow.pop %v2157
    %v2159 = vmul.f32 %v2153, 1.442695
    %v2160 = vpow.pop %v2159
    %v2161 = vmul.f32 %v2154, 1.442695
    %v2162 = vpow.pop %v2161
    %v2163 = vsel %vm737, %v2156, 0.0
    %2164 = vadd.xlane.f32.xlu0 %v2163
    %v2165 = vpop.xlane.xlu0 %2164
    %v2166 = vsel %vm737, %v2158, 0.0
    %2167 = vadd.xlane.f32.xlu0 %v2166
    %v2168 = vpop.xlane.xlu0 %2167
    %v2169 = vsel %vm737, %v2160, 0.0
    %2170 = vadd.xlane.f32.xlu0 %v2169
    %v2171 = vpop.xlane.xlu0 %2170
    %v2172 = vsel %vm737, %v2162, 0.0
    %2173 = vadd.xlane.f32.xlu0 %v2172
    %v2174 = vpop.xlane.xlu0 %2173
    %v2175 = vrcp.pop %v2165
    %v2176 = vrcp.pop %v2168
    %v2177 = vrcp.pop %v2171
    %v2178 = vrcp.pop %v2174
    %v2179 = vmul.f32 %v2156, %v2175
    %v2180 = vmul.f32 %v2158, %v2176
    %v2181 = vmul.f32 %v2160, %v2177
    %v2182 = vmul.f32 %v2162, %v2178
    %v2183 = vpack.c.bf16 %v2180, %v2179
    %v2184 = vpack.c.bf16 %v2182, %v2181
    %v2186 = vsel %vm737, %v2183, 0
    %v2189 = vsel %vm737, %v2184, 0
    %2191 = vmatprep.subr.bf16.mxu0 0
    %2192 = vmatpush1.bf16.msra.mxu0 0
    %2193 = vmatprep.subr.bf16.mxu0 0
    %2194 = vmatpush1.bf16.msra.mxu0 0
    %2195 = vmatprep.subr.bf16.mxu0 0
    %2196 = vmatpush1.bf16.msra.mxu0 0
    %2197 = vmatprep.subr.bf16.mxu0 0
    %2198 = vmatpush1.bf16.msra.mxu0 0
    %2199 = vmatprep.subr.bf16.mxu0 0
    %2200 = vmatpush1.bf16.msra.mxu0 0
    %2201 = vmatprep.subr.bf16.mxu0 0
    %2202 = vmatpush1.bf16.msra.mxu0 0
    %2203 = vmatprep.subr.bf16.mxu0 0
    %2204 = vmatpush1.bf16.msra.mxu0 %v2089
    %2205 = vmatprep.subr.bf16.mxu0 0
    %2206 = vmatpush1.bf16.msra.mxu0 %v2088
    %2207 = vmatprep.subr.bf16.mxu0 0
    %2208 = vmatpush2.bf16.msra.mxu0 0
    %2209 = vmatprep.subr.bf16.mxu0 0
    %2210 = vmatpush2.bf16.msra.mxu0 0
    %2211 = vmatprep.subr.bf16.mxu0 0
    %2212 = vmatpush2.bf16.msra.mxu0 0
    %2213 = vmatprep.subr.bf16.mxu0 0
    %2214 = vmatpush2.bf16.msra.mxu0 0
    %2215 = vmatprep.subr.bf16.mxu0 0
    %2216 = vmatpush2.bf16.msra.mxu0 0
    %2217 = vmatprep.subr.bf16.mxu0 0
    %2218 = vmatpush2.bf16.msra.mxu0 0
    %2219 = vmatprep.subr.bf16.mxu0 0
    %2220 = vmatpush2.bf16.msra.mxu0 0
    %2221 = vmatprep.subr.bf16.mxu0 0
    %2222 = vmatpush2.bf16.msra.mxu0 0
    %2223 = vmatprep.mubr.bf16.mxu0 0
    %2224 = vmatmul.mubr.bf16.gmra.mxu0 %v2186
    %v2225 = vpop.f32.mrf.mxu0
    %v2226 = vadd.f32 0.0, %v2225
    %v2227 = vpop.f32.mrf.mxu0
    %v2228 = vpop.f32.mrf.mxu0
    %v2229 = vadd.f32 0.0, %v2228
    %v2230 = vpop.f32.mrf.mxu0
    %2231 = vmatprep.mubr.bf16.mxu0 0
    %2232 = vmatmul.mubr.bf16.gmra.mxu0 %v2189
    %v2233 = vpop.f32.mrf.mxu0
    %v2234 = vadd.f32 0.0, %v2233
    %v2235 = vpop.f32.mrf.mxu0
    %v2236 = vpop.f32.mrf.mxu0
    %v2237 = vadd.f32 0.0, %v2236
    %v2238 = vpop.f32.mrf.mxu0
    %2239 = vdwg.mxu0
    %v2241 = vsel %vm737, %v2076, 0
    %v2244 = vsel %vm737, %v2077, 0
    %2246 = vmatprep.subr.bf16.mxu0 0
    %2247 = vmatpush1.bf16.msra.mxu0 0
    %2248 = vmatprep.subr.bf16.mxu0 0
    %2249 = vmatpush1.bf16.msra.mxu0 0
    %2250 = vmatprep.subr.bf16.mxu0 0
    %2251 = vmatpush1.bf16.msra.mxu0 0
    %2252 = vmatprep.subr.bf16.mxu0 0
    %2253 = vmatpush1.bf16.msra.mxu0 0
    %2254 = vmatprep.subr.bf16.mxu0 0
    %2255 = vmatpush1.bf16.msra.mxu0 0
    %2256 = vmatprep.subr.bf16.mxu0 0
    %2257 = vmatpush1.bf16.msra.mxu0 0
    %2258 = vmatprep.subr.bf16.mxu0 0
    %2259 = vmatpush1.bf16.msra.mxu0 %v1982
    %2260 = vmatprep.subr.bf16.mxu0 0
    %2261 = vmatpush1.bf16.msra.mxu0 %v1981
    %2262 = vmatprep.subr.bf16.mxu0 0
    %2263 = vmatpush2.bf16.msra.mxu0 0
    %2264 = vmatprep.subr.bf16.mxu0 0
    %2265 = vmatpush2.bf16.msra.mxu0 0
    %2266 = vmatprep.subr.bf16.mxu0 0
    %2267 = vmatpush2.bf16.msra.mxu0 0
    %2268 = vmatprep.subr.bf16.mxu0 0
    %2269 = vmatpush2.bf16.msra.mxu0 0
    %2270 = vmatprep.subr.bf16.mxu0 0
    %2271 = vmatpush2.bf16.msra.mxu0 0
    %2272 = vmatprep.subr.bf16.mxu0 0
    %2273 = vmatpush2.bf16.msra.mxu0 0
    %2274 = vmatprep.subr.bf16.mxu0 0
    %2275 = vmatpush2.bf16.msra.mxu0 0
    %2276 = vmatprep.subr.bf16.mxu0 0
    %2277 = vmatpush2.bf16.msra.mxu0 0
    %2278 = vmatprep.mubr.bf16.mxu0 0
    %2279 = vmatmul.mubr.bf16.gmra.mxu0 %v2241
    %v2280 = vpop.f32.mrf.mxu0
    %v2281 = vadd.f32 %v2226, %v2280
    %v2282 = vpop.f32.mrf.mxu0
    %v2283 = vpop.f32.mrf.mxu0
    %v2284 = vadd.f32 %v2229, %v2283
    %v2285 = vpop.f32.mrf.mxu0
    %2286 = vmatprep.mubr.bf16.mxu0 0
    %2287 = vmatmul.mubr.bf16.gmra.mxu0 %v2244
    %v2288 = vpop.f32.mrf.mxu0
    %v2289 = vadd.f32 %v2234, %v2288
    %v2290 = vpop.f32.mrf.mxu0
    %v2291 = vpop.f32.mrf.mxu0
    %v2292 = vadd.f32 %v2237, %v2291
    %v2293 = vpop.f32.mrf.mxu0
    %2294 = vdwg.mxu0
    %v2295 = vpack.c.bf16 %v2284, %v2281
    %v2296 = vpack.c.bf16 %v2292, %v2289
    %s2297 = scalar_lea.vmem [#allocation6], 64
    %v2298 = vld [vmem:[%s2297] sm:$0xf]
    %v2299 = vld [vmem:[%s2297 + $0x4] sm:$0xf]
    %v2300 = vld [vmem:[%s2297 + $0x8] sm:$0xf]
    %v2301 = vld [vmem:[%s2297 + $0xc] sm:$0xf]
    %v2302 = vld [vmem:[%s2297 + $0x10] sm:$0xf]
    %v2303 = vld [vmem:[%s2297 + $0x14] sm:$0xf]
    %v2304 = vld [vmem:[%s2297 + $0x18] sm:$0xf]
    %v2305 = vld [vmem:[%s2297 + $0x1c] sm:$0xf]
    %v2306 = vld [vmem:[%s2297 + $0x20] sm:$0xf]
    %v2307 = vld [vmem:[%s2297 + $0x24] sm:$0xf]
    %v2308 = vld [vmem:[%s2297 + $0x28] sm:$0xf]
    %v2309 = vld [vmem:[%s2297 + $0x2c] sm:$0xf]
    %v2310 = vld [vmem:[%s2297 + $0x30] sm:$0xf]
    %v2311 = vld [vmem:[%s2297 + $0x34] sm:$0xf]
    %v2312 = vld [vmem:[%s2297 + $0x38] sm:$0xf]
    %v2313 = vld [vmem:[%s2297 + $0x3c] sm:$0xf]
    %s2314 = scalar_lea.vmem %s10, 1
    %v2315 = vld [vmem:[%s2314] sm:$0x1]
    %v2317 = vlaneseq
    %v2318 = vshrl.u32 %v2317, 7
    %v2319 = vsub.s32 0, %v2318
    %v2320 = vrot.slane %v2315, %v2319
    %v2338 = vunpack.c.l.b16 %v2298
    %v2339 = vunpack.c.l.b16 %v2299
    %v2340 = vunpack.c.l.b16 %v2300
    %v2341 = vunpack.c.l.b16 %v2301
    %v2342 = vunpack.c.l.b16 %v2302
    %v2343 = vunpack.c.l.b16 %v2303
    %v2344 = vunpack.c.l.b16 %v2304
    %v2345 = vunpack.c.l.b16 %v2305
    %v2346 = vunpack.c.l.b16 %v2306
    %v2347 = vunpack.c.l.b16 %v2307
    %v2348 = vunpack.c.l.b16 %v2308
    %v2349 = vunpack.c.l.b16 %v2309
    %v2350 = vunpack.c.l.b16 %v2310
    %v2351 = vunpack.c.l.b16 %v2311
    %v2352 = vunpack.c.l.b16 %v2312
    %v2353 = vunpack.c.l.b16 %v2313
    %v2354 = vpack.c.b16 %v2339, %v2338
    %v2355 = vpack.c.b16 %v2341, %v2340
    %v2356 = vpack.c.b16 %v2343, %v2342
    %v2357 = vpack.c.b16 %v2345, %v2344
    %v2358 = vpack.c.b16 %v2347, %v2346
    %v2359 = vpack.c.b16 %v2349, %v2348
    %v2360 = vpack.c.b16 %v2351, %v2350
    %v2361 = vpack.c.b16 %v2353, %v2352
    %2370 = vmatprep.subr.bf16.mxu0 0
    %2371 = vmatpush1.bf16.msra.mxu0 %v2361
    %2372 = vmatprep.subr.bf16.mxu0 0
    %2373 = vmatpush1.bf16.msra.mxu0 %v2360
    %2374 = vmatprep.subr.bf16.mxu0 0
    %2375 = vmatpush1.bf16.msra.mxu0 %v2359
    %2376 = vmatprep.subr.bf16.mxu0 0
    %2377 = vmatpush1.bf16.msra.mxu0 %v2358
    %2378 = vmatprep.subr.bf16.mxu0 0
    %2379 = vmatpush1.bf16.msra.mxu0 %v2357
    %2380 = vmatprep.subr.bf16.mxu0 0
    %2381 = vmatpush1.bf16.msra.mxu0 %v2356
    %2382 = vmatprep.subr.bf16.mxu0 0
    %2383 = vmatpush1.bf16.msra.mxu0 %v2355
    %2384 = vmatprep.subr.bf16.mxu0 0
    %2385 = vmatpush1.bf16.msra.mxu0 %v2354
    %2386 = vmatprep.subr.bf16.mxu0 0
    %2387 = vmatpush2.bf16.msra.mxu0 0
    %2388 = vmatprep.subr.bf16.mxu0 0
    %2389 = vmatpush2.bf16.msra.mxu0 0
    %2390 = vmatprep.subr.bf16.mxu0 0
    %2391 = vmatpush2.bf16.msra.mxu0 0
    %2392 = vmatprep.subr.bf16.mxu0 0
    %2393 = vmatpush2.bf16.msra.mxu0 0
    %2394 = vmatprep.subr.bf16.mxu0 0
    %2395 = vmatpush2.bf16.msra.mxu0 0
    %2396 = vmatprep.subr.bf16.mxu0 0
    %2397 = vmatpush2.bf16.msra.mxu0 0
    %2398 = vmatprep.subr.bf16.mxu0 0
    %2399 = vmatpush2.bf16.msra.mxu0 0
    %2400 = vmatprep.subr.bf16.mxu0 0
    %2401 = vmatpush2.bf16.msra.mxu0 0
    %2402 = vmatprep.mubr.bf16.mxu0 0
    %2403 = vmatmul.mubr.bf16.gmra.mxu0 %v2295
    %v2404 = vpop.f32.mrf.mxu0
    %v2405 = vadd.f32 %v2320, %v2404
    %v2406 = vpop.f32.mrf.mxu0
    %v2407 = vpop.f32.mrf.mxu0
    %v2408 = vadd.f32 %v2320, %v2407
    %v2409 = vpop.f32.mrf.mxu0
    %2410 = vmatprep.mubr.bf16.mxu0 0
    %2411 = vmatmul.mubr.bf16.gmra.mxu0 %v2296
    %v2412 = vpop.f32.mrf.mxu0
    %v2413 = vadd.f32 %v2320, %v2412
    %v2414 = vpop.f32.mrf.mxu0
    %v2415 = vpop.f32.mrf.mxu0
    %v2416 = vadd.f32 %v2320, %v2415
    %v2417 = vpop.f32.mrf.mxu0
    %2418 = vdwg.mxu0
    %v2419 = vadd.f32 %v2405, %v1682
    %v2420 = vadd.f32 %v2408, %v1683
    %v2421 = vadd.f32 %v2413, %v1684
    %v2422 = vadd.f32 %v2416, %v1685
    %s2423 = scalar_lea.vmem %s11, 1
    %v2424 = vld [vmem:[%s2423] sm:$0x1]
    %s2425 = scalar_lea.vmem %s12, 1
    %v2426 = vld [vmem:[%s2425] sm:$0x1]
    %2427 = vadd.xlane.f32.xlu0 %v2419
    %v2428 = vpop.xlane.xlu0 %2427
    %2429 = vadd.xlane.f32.xlu0 %v2420
    %v2430 = vpop.xlane.xlu0 %2429
    %2431 = vadd.xlane.f32.xlu0 %v2421
    %v2432 = vpop.xlane.xlu0 %2431
    %2433 = vadd.xlane.f32.xlu0 %v2422
    %v2434 = vpop.xlane.xlu0 %2433
    %v2435 = vmul.f32 %v2428, %v322
    %v2436 = vmul.f32 %v2430, %v322
    %v2437 = vmul.f32 %v2432, %v322
    %v2438 = vmul.f32 %v2434, %v322
    %v2439 = vsub.f32 %v2419, %v2435
    %v2440 = vsub.f32 %v2420, %v2436
    %v2441 = vsub.f32 %v2421, %v2437
    %v2442 = vsub.f32 %v2422, %v2438
    %v2443 = vmul.f32 %v2439, %v2439
    %v2444 = vmul.f32 %v2440, %v2440
    %v2445 = vmul.f32 %v2441, %v2441
    %v2446 = vmul.f32 %v2442, %v2442
    %2447 = vadd.xlane.f32.xlu0 %v2443
    %v2448 = vpop.xlane.xlu0 %2447
    %2449 = vadd.xlane.f32.xlu0 %v2444
    %v2450 = vpop.xlane.xlu0 %2449
    %2451 = vadd.xlane.f32.xlu0 %v2445
    %v2452 = vpop.xlane.xlu0 %2451
    %2453 = vadd.xlane.f32.xlu0 %v2446
    %v2454 = vpop.xlane.xlu0 %2453
    %v2455 = vmul.f32 %v2448, %v322
    %v2456 = vmul.f32 %v2450, %v322
    %v2457 = vmul.f32 %v2452, %v322
    %v2458 = vmul.f32 %v2454, %v322
    %v2459 = vadd.f32 %v2455, 1e-12
    %v2460 = vadd.f32 %v2456, 1e-12
    %v2461 = vadd.f32 %v2457, 1e-12
    %v2462 = vadd.f32 %v2458, 1e-12
    %v2463 = vrsqrt.pop %v2459
    %v2464 = vrsqrt.pop %v2460
    %v2465 = vrsqrt.pop %v2461
    %v2466 = vrsqrt.pop %v2462
    %v2467 = vmul.f32 %v2439, %v2463
    %v2468 = vmul.f32 %v2440, %v2464
    %v2469 = vmul.f32 %v2441, %v2465
    %v2470 = vmul.f32 %v2442, %v2466
    %v2472 = vlaneseq
    %v2473 = vshrl.u32 %v2472, 7
    %v2474 = vsub.s32 0, %v2473
    %v2475 = vrot.slane %v2424, %v2474
    %v2477 = vmul.f32 %v2467, %v2475
    %v2478 = vmul.f32 %v2468, %v2475
    %v2479 = vmul.f32 %v2469, %v2475
    %v2480 = vmul.f32 %v2470, %v2475
    %v2482 = vlaneseq
    %v2483 = vshrl.u32 %v2482, 7
    %v2484 = vsub.s32 0, %v2483
    %v2485 = vrot.slane %v2426, %v2484
    %v2487 = vadd.f32 %v2477, %v2485
    %v2488 = vadd.f32 %v2478, %v2485
    %v2489 = vadd.f32 %v2479, %v2485
    %v2490 = vadd.f32 %v2480, %v2485
    %v2491 = vpack.c.bf16 %v2488, %v2487
    %v2492 = vpack.c.bf16 %v2490, %v2489
    %s2493 = scalar_lea.vmem [#allocation7], 128
    %v2494 = vld [vmem:[%s2493] sm:$0xff]
    %v2495 = vld [vmem:[%s2493 + $0x8] sm:$0xff]
    %v2496 = vld [vmem:[%s2493 + $0x10] sm:$0xff]
    %v2497 = vld [vmem:[%s2493 + $0x18] sm:$0xff]
    %v2498 = vld [vmem:[%s2493 + $0x20] sm:$0xff]
    %v2499 = vld [vmem:[%s2493 + $0x28] sm:$0xff]
    %v2500 = vld [vmem:[%s2493 + $0x30] sm:$0xff]
    %v2501 = vld [vmem:[%s2493 + $0x38] sm:$0xff]
    %v2502 = vld [vmem:[%s2493 + $0x40] sm:$0xff]
    %v2503 = vld [vmem:[%s2493 + $0x48] sm:$0xff]
    %v2504 = vld [vmem:[%s2493 + $0x50] sm:$0xff]
    %v2505 = vld [vmem:[%s2493 + $0x58] sm:$0xff]
    %v2506 = vld [vmem:[%s2493 + $0x60] sm:$0xff]
    %v2507 = vld [vmem:[%s2493 + $0x68] sm:$0xff]
    %v2508 = vld [vmem:[%s2493 + $0x70] sm:$0xff]
    %v2509 = vld [vmem:[%s2493 + $0x78] sm:$0xff]
    %s2510 = scalar_lea.vmem %s14, 2
    %v2511 = vld [vmem:[%s2510] sm:$0x3]
    %v2513 = vlaneseq
    %v2514 = vshrl.u32 %v2513, 7
    %v2515 = vsub.s32 0, %v2514
    %v2516 = vrot.slane %v2511, %v2515
    %v2517 = vlaneseq
    %v2518 = vshrl.u32 %v2517, 7
    %v2519 = vsub.s32 1, %v2518
    %v2520 = vrot.slane %v2511, %v2519
    %v2539 = vunpack.c.l.b16 %v2494
    %v2540 = vunpack.c.h.b16 %v2494
    %v2541 = vunpack.c.l.b16 %v2495
    %v2542 = vunpack.c.h.b16 %v2495
    %v2543 = vunpack.c.l.b16 %v2496
    %v2544 = vunpack.c.h.b16 %v2496
    %v2545 = vunpack.c.l.b16 %v2497
    %v2546 = vunpack.c.h.b16 %v2497
    %v2547 = vunpack.c.l.b16 %v2498
    %v2548 = vunpack.c.h.b16 %v2498
    %v2549 = vunpack.c.l.b16 %v2499
    %v2550 = vunpack.c.h.b16 %v2499
    %v2551 = vunpack.c.l.b16 %v2500
    %v2552 = vunpack.c.h.b16 %v2500
    %v2553 = vunpack.c.l.b16 %v2501
    %v2554 = vunpack.c.h.b16 %v2501
    %v2555 = vunpack.c.l.b16 %v2502
    %v2556 = vunpack.c.h.b16 %v2502
    %v2557 = vunpack.c.l.b16 %v2503
    %v2558 = vunpack.c.h.b16 %v2503
    %v2559 = vunpack.c.l.b16 %v2504
    %v2560 = vunpack.c.h.b16 %v2504
    %v2561 = vunpack.c.l.b16 %v2505
    %v2562 = vunpack.c.h.b16 %v2505
    %v2563 = vunpack.c.l.b16 %v2506
    %v2564 = vunpack.c.h.b16 %v2506
    %v2565 = vunpack.c.l.b16 %v2507
    %v2566 = vunpack.c.h.b16 %v2507
    %v2567 = vunpack.c.l.b16 %v2508
    %v2568 = vunpack.c.h.b16 %v2508
    %v2569 = vunpack.c.l.b16 %v2509
    %v2570 = vunpack.c.h.b16 %v2509
    %v2571 = vpack.c.b16 %v2541, %v2539
    %v2572 = vpack.c.b16 %v2542, %v2540
    %v2573 = vpack.c.b16 %v2545, %v2543
    %v2574 = vpack.c.b16 %v2546, %v2544
    %v2575 = vpack.c.b16 %v2549, %v2547
    %v2576 = vpack.c.b16 %v2550, %v2548
    %v2577 = vpack.c.b16 %v2553, %v2551
    %v2578 = vpack.c.b16 %v2554, %v2552
    %v2579 = vpack.c.b16 %v2557, %v2555
    %v2580 = vpack.c.b16 %v2558, %v2556
    %v2581 = vpack.c.b16 %v2561, %v2559
    %v2582 = vpack.c.b16 %v2562, %v2560
    %v2583 = vpack.c.b16 %v2565, %v2563
    %v2584 = vpack.c.b16 %v2566, %v2564
    %v2585 = vpack.c.b16 %v2569, %v2567
    %v2586 = vpack.c.b16 %v2570, %v2568
    %2603 = vmatprep.subr.bf16.mxu0 %v2586
    %2604 = vmatpush1.bf16.msra.mxu0 %v2585
    %2605 = vmatprep.subr.bf16.mxu0 %v2584
    %2606 = vmatpush1.bf16.msra.mxu0 %v2583
    %2607 = vmatprep.subr.bf16.mxu0 %v2582
    %2608 = vmatpush1.bf16.msra.mxu0 %v2581
    %2609 = vmatprep.subr.bf16.mxu0 %v2580
    %2610 = vmatpush1.bf16.msra.mxu0 %v2579
    %2611 = vmatprep.subr.bf16.mxu0 %v2578
    %2612 = vmatpush1.bf16.msra.mxu0 %v2577
    %2613 = vmatprep.subr.bf16.mxu0 %v2576
    %2614 = vmatpush1.bf16.msra.mxu0 %v2575
    %2615 = vmatprep.subr.bf16.mxu0 %v2574
    %2616 = vmatpush1.bf16.msra.mxu0 %v2573
    %2617 = vmatprep.subr.bf16.mxu0 %v2572
    %2618 = vmatpush1.bf16.msra.mxu0 %v2571
    %2619 = vmatprep.subr.bf16.mxu0 0
    %2620 = vmatpush2.bf16.msra.mxu0 0
    %2621 = vmatprep.subr.bf16.mxu0 0
    %2622 = vmatpush2.bf16.msra.mxu0 0
    %2623 = vmatprep.subr.bf16.mxu0 0
    %2624 = vmatpush2.bf16.msra.mxu0 0
    %2625 = vmatprep.subr.bf16.mxu0 0
    %2626 = vmatpush2.bf16.msra.mxu0 0
    %2627 = vmatprep.subr.bf16.mxu0 0
    %2628 = vmatpush2.bf16.msra.mxu0 0
    %2629 = vmatprep.subr.bf16.mxu0 0
    %2630 = vmatpush2.bf16.msra.mxu0 0
    %2631 = vmatprep.subr.bf16.mxu0 0
    %2632 = vmatpush2.bf16.msra.mxu0 0
    %2633 = vmatprep.subr.bf16.mxu0 0
    %2634 = vmatpush2.bf16.msra.mxu0 0
    %2635 = vmatprep.mubr.bf16.mxu0 0
    %2636 = vmatmul.mubr.bf16.gmra.mxu0 %v2491
    %v2637 = vpop.f32.mrf.mxu0
    %v2638 = vadd.f32 %v2516, %v2637
    %v2639 = vpop.f32.mrf.mxu0
    %v2640 = vadd.f32 %v2520, %v2639
    %v2641 = vpop.f32.mrf.mxu0
    %v2642 = vadd.f32 %v2516, %v2641
    %v2643 = vpop.f32.mrf.mxu0
    %v2644 = vadd.f32 %v2520, %v2643
    %2645 = vmatprep.mubr.bf16.mxu0 0
    %2646 = vmatmul.mubr.bf16.gmra.mxu0 %v2492
    %v2647 = vpop.f32.mrf.mxu0
    %v2648 = vadd.f32 %v2516, %v2647
    %v2649 = vpop.f32.mrf.mxu0
    %v2650 = vadd.f32 %v2520, %v2649
    %v2651 = vpop.f32.mrf.mxu0
    %v2652 = vadd.f32 %v2516, %v2651
    %v2653 = vpop.f32.mrf.mxu0
    %v2654 = vadd.f32 %v2520, %v2653
    %2655 = vdwg.mxu0
    %v2656 = vmul.f32 %v2638, %v2638
    %v2657 = vmul.f32 %v2640, %v2640
    %v2658 = vmul.f32 %v2642, %v2642
    %v2659 = vmul.f32 %v2644, %v2644
    %v2660 = vmul.f32 %v2648, %v2648
    %v2661 = vmul.f32 %v2650, %v2650
    %v2662 = vmul.f32 %v2652, %v2652
    %v2663 = vmul.f32 %v2654, %v2654
    %v2664 = vmul.f32 %v2638, %v2656
    %v2665 = vmul.f32 %v2640, %v2657
    %v2666 = vmul.f32 %v2642, %v2658
    %v2667 = vmul.f32 %v2644, %v2659
    %v2668 = vmul.f32 %v2648, %v2660
    %v2669 = vmul.f32 %v2650, %v2661
    %v2670 = vmul.f32 %v2652, %v2662
    %v2671 = vmul.f32 %v2654, %v2663
    %v2672 = vmul.f32 %v2664, 0.044715
    %v2673 = vmul.f32 %v2665, 0.044715
    %v2674 = vmul.f32 %v2666, 0.044715
    %v2675 = vmul.f32 %v2667, 0.044715
    %v2676 = vmul.f32 %v2668, 0.044715
    %v2677 = vmul.f32 %v2669, 0.044715
    %v2678 = vmul.f32 %v2670, 0.044715
    %v2679 = vmul.f32 %v2671, 0.044715
    %v2680 = vadd.f32 %v2638, %v2672
    %v2681 = vadd.f32 %v2640, %v2673
    %v2682 = vadd.f32 %v2642, %v2674
    %v2683 = vadd.f32 %v2644, %v2675
    %v2684 = vadd.f32 %v2648, %v2676
    %v2685 = vadd.f32 %v2650, %v2677
    %v2686 = vadd.f32 %v2652, %v2678
    %v2687 = vadd.f32 %v2654, %v2679
    %v2688 = vmul.f32 %v2680, 0.7978846
    %v2689 = vmul.f32 %v2681, 0.7978846
    %v2690 = vmul.f32 %v2682, 0.7978846
    %v2691 = vmul.f32 %v2683, 0.7978846
    %v2692 = vmul.f32 %v2684, 0.7978846
    %v2693 = vmul.f32 %v2685, 0.7978846
    %v2694 = vmul.f32 %v2686, 0.7978846
    %v2695 = vmul.f32 %v2687, 0.7978846
    %v2696 = vtanh.pop %v2688
    %v2697 = vtanh.pop %v2689
    %v2698 = vtanh.pop %v2690
    %v2699 = vtanh.pop %v2691
    %v2700 = vtanh.pop %v2692
    %v2701 = vtanh.pop %v2693
    %v2702 = vtanh.pop %v2694
    %v2703 = vtanh.pop %v2695
    %v2704 = vadd.f32 %v2696, 1.0
    %v2705 = vadd.f32 %v2697, 1.0
    %v2706 = vadd.f32 %v2698, 1.0
    %v2707 = vadd.f32 %v2699, 1.0
    %v2708 = vadd.f32 %v2700, 1.0
    %v2709 = vadd.f32 %v2701, 1.0
    %v2710 = vadd.f32 %v2702, 1.0
    %v2711 = vadd.f32 %v2703, 1.0
    %v2712 = vmul.f32 %v2704, 0.5
    %v2713 = vmul.f32 %v2705, 0.5
    %v2714 = vmul.f32 %v2706, 0.5
    %v2715 = vmul.f32 %v2707, 0.5
    %v2716 = vmul.f32 %v2708, 0.5
    %v2717 = vmul.f32 %v2709, 0.5
    %v2718 = vmul.f32 %v2710, 0.5
    %v2719 = vmul.f32 %v2711, 0.5
    %v2720 = vmul.f32 %v2638, %v2712
    %v2721 = vmul.f32 %v2640, %v2713
    %v2722 = vmul.f32 %v2642, %v2714
    %v2723 = vmul.f32 %v2644, %v2715
    %v2724 = vmul.f32 %v2648, %v2716
    %v2725 = vmul.f32 %v2650, %v2717
    %v2726 = vmul.f32 %v2652, %v2718
    %v2727 = vmul.f32 %v2654, %v2719
    %v2728 = vpack.c.bf16 %v2722, %v2720
    %v2729 = vpack.c.bf16 %v2723, %v2721
    %v2730 = vpack.c.bf16 %v2726, %v2724
    %v2731 = vpack.c.bf16 %v2727, %v2725
    %s2732 = scalar_lea.vmem [#allocation9], 128
    %v2733 = vld [vmem:[%s2732] sm:$0xf]
    %v2734 = vld [vmem:[%s2732 + $0x4] sm:$0xf]
    %v2735 = vld [vmem:[%s2732 + $0x8] sm:$0xf]
    %v2736 = vld [vmem:[%s2732 + $0xc] sm:$0xf]
    %v2737 = vld [vmem:[%s2732 + $0x10] sm:$0xf]
    %v2738 = vld [vmem:[%s2732 + $0x14] sm:$0xf]
    %v2739 = vld [vmem:[%s2732 + $0x18] sm:$0xf]
    %v2740 = vld [vmem:[%s2732 + $0x1c] sm:$0xf]
    %v2741 = vld [vmem:[%s2732 + $0x20] sm:$0xf]
    %v2742 = vld [vmem:[%s2732 + $0x24] sm:$0xf]
    %v2743 = vld [vmem:[%s2732 + $0x28] sm:$0xf]
    %v2744 = vld [vmem:[%s2732 + $0x2c] sm:$0xf]
    %v2745 = vld [vmem:[%s2732 + $0x30] sm:$0xf]
    %v2746 = vld [vmem:[%s2732 + $0x34] sm:$0xf]
    %v2747 = vld [vmem:[%s2732 + $0x38] sm:$0xf]
    %v2748 = vld [vmem:[%s2732 + $0x3c] sm:$0xf]
    %v2749 = vld [vmem:[%s2732 + $0x40] sm:$0xf]
    %v2750 = vld [vmem:[%s2732 + $0x44] sm:$0xf]
    %v2751 = vld [vmem:[%s2732 + $0x48] sm:$0xf]
    %v2752 = vld [vmem:[%s2732 + $0x4c] sm:$0xf]
    %v2753 = vld [vmem:[%s2732 + $0x50] sm:$0xf]
    %v2754 = vld [vmem:[%s2732 + $0x54] sm:$0xf]
    %v2755 = vld [vmem:[%s2732 + $0x58] sm:$0xf]
    %v2756 = vld [vmem:[%s2732 + $0x5c] sm:$0xf]
    %v2757 = vld [vmem:[%s2732 + $0x60] sm:$0xf]
    %v2758 = vld [vmem:[%s2732 + $0x64] sm:$0xf]
    %v2759 = vld [vmem:[%s2732 + $0x68] sm:$0xf]
    %v2760 = vld [vmem:[%s2732 + $0x6c] sm:$0xf]
    %v2761 = vld [vmem:[%s2732 + $0x70] sm:$0xf]
    %v2762 = vld [vmem:[%s2732 + $0x74] sm:$0xf]
    %v2763 = vld [vmem:[%s2732 + $0x78] sm:$0xf]
    %v2764 = vld [vmem:[%s2732 + $0x7c] sm:$0xf]
    %s2765 = scalar_lea.vmem %s16, 1
    %v2766 = vld [vmem:[%s2765] sm:$0x1]
    %v2768 = vlaneseq
    %v2769 = vshrl.u32 %v2768, 7
    %v2770 = vsub.s32 0, %v2769
    %v2771 = vrot.slane %v2766, %v2770
    %v2805 = vunpack.c.l.b16 %v2733
    %v2806 = vunpack.c.l.b16 %v2734
    %v2807 = vunpack.c.l.b16 %v2735
    %v2808 = vunpack.c.l.b16 %v2736
    %v2809 = vunpack.c.l.b16 %v2737
    %v2810 = vunpack.c.l.b16 %v2738
    %v2811 = vunpack.c.l.b16 %v2739
    %v2812 = vunpack.c.l.b16 %v2740
    %v2813 = vunpack.c.l.b16 %v2741
    %v2814 = vunpack.c.l.b16 %v2742
    %v2815 = vunpack.c.l.b16 %v2743
    %v2816 = vunpack.c.l.b16 %v2744
    %v2817 = vunpack.c.l.b16 %v2745
    %v2818 = vunpack.c.l.b16 %v2746
    %v2819 = vunpack.c.l.b16 %v2747
    %v2820 = vunpack.c.l.b16 %v2748
    %v2821 = vunpack.c.l.b16 %v2749
    %v2822 = vunpack.c.l.b16 %v2750
    %v2823 = vunpack.c.l.b16 %v2751
    %v2824 = vunpack.c.l.b16 %v2752
    %v2825 = vunpack.c.l.b16 %v2753
    %v2826 = vunpack.c.l.b16 %v2754
    %v2827 = vunpack.c.l.b16 %v2755
    %v2828 = vunpack.c.l.b16 %v2756
    %v2829 = vunpack.c.l.b16 %v2757
    %v2830 = vunpack.c.l.b16 %v2758
    %v2831 = vunpack.c.l.b16 %v2759
    %v2832 = vunpack.c.l.b16 %v2760
    %v2833 = vunpack.c.l.b16 %v2761
    %v2834 = vunpack.c.l.b16 %v2762
    %v2835 = vunpack.c.l.b16 %v2763
    %v2836 = vunpack.c.l.b16 %v2764
    %v2837 = vpack.c.b16 %v2806, %v2805
    %v2838 = vpack.c.b16 %v2808, %v2807
    %v2839 = vpack.c.b16 %v2810, %v2809
    %v2840 = vpack.c.b16 %v2812, %v2811
    %v2841 = vpack.c.b16 %v2814, %v2813
    %v2842 = vpack.c.b16 %v2816, %v2815
    %v2843 = vpack.c.b16 %v2818, %v2817
    %v2844 = vpack.c.b16 %v2820, %v2819
    %v2845 = vpack.c.b16 %v2822, %v2821
    %v2846 = vpack.c.b16 %v2824, %v2823
    %v2847 = vpack.c.b16 %v2826, %v2825
    %v2848 = vpack.c.b16 %v2828, %v2827
    %v2849 = vpack.c.b16 %v2830, %v2829
    %v2850 = vpack.c.b16 %v2832, %v2831
    %v2851 = vpack.c.b16 %v2834, %v2833
    %v2852 = vpack.c.b16 %v2836, %v2835
    %2869 = vmatprep.subr.bf16.mxu0 0
    %2870 = vmatpush1.bf16.msra.mxu0 %v2844
    %2871 = vmatprep.subr.bf16.mxu0 0
    %2872 = vmatpush1.bf16.msra.mxu0 %v2843
    %2873 = vmatprep.subr.bf16.mxu0 0
    %2874 = vmatpush1.bf16.msra.mxu0 %v2842
    %2875 = vmatprep.subr.bf16.mxu0 0
    %2876 = vmatpush1.bf16.msra.mxu0 %v2841
    %2877 = vmatprep.subr.bf16.mxu0 0
    %2878 = vmatpush1.bf16.msra.mxu0 %v2840
    %2879 = vmatprep.subr.bf16.mxu0 0
    %2880 = vmatpush1.bf16.msra.mxu0 %v2839
    %2881 = vmatprep.subr.bf16.mxu0 0
    %2882 = vmatpush1.bf16.msra.mxu0 %v2838
    %2883 = vmatprep.subr.bf16.mxu0 0
    %2884 = vmatpush1.bf16.msra.mxu0 %v2837
    %2885 = vmatprep.subr.bf16.mxu0 0
    %2886 = vmatpush2.bf16.msra.mxu0 %v2852
    %2887 = vmatprep.subr.bf16.mxu0 0
    %2888 = vmatpush2.bf16.msra.mxu0 %v2851
    %2889 = vmatprep.subr.bf16.mxu0 0
    %2890 = vmatpush2.bf16.msra.mxu0 %v2850
    %2891 = vmatprep.subr.bf16.mxu0 0
    %2892 = vmatpush2.bf16.msra.mxu0 %v2849
    %2893 = vmatprep.subr.bf16.mxu0 0
    %2894 = vmatpush2.bf16.msra.mxu0 %v2848
    %2895 = vmatprep.subr.bf16.mxu0 0
    %2896 = vmatpush2.bf16.msra.mxu0 %v2847
    %2897 = vmatprep.subr.bf16.mxu0 0
    %2898 = vmatpush2.bf16.msra.mxu0 %v2846
    %2899 = vmatprep.subr.bf16.mxu0 0
    %2900 = vmatpush2.bf16.msra.mxu0 %v2845
    %2901 = vmatprep.mubr.bf16.mxu0 %v2729
    %2902 = vmatmul.mubr.bf16.gmra.mxu0 %v2728
    %v2903 = vpop.f32.mrf.mxu0
    %v2904 = vadd.f32 %v2771, %v2903
    %v2905 = vpop.f32.mrf.mxu0
    %v2906 = vpop.f32.mrf.mxu0
    %v2907 = vpop.f32.mrf.mxu0
    %2908 = vmatprep.mubr.bf16.mxu0 %v2731
    %2909 = vmatmul.mubr.bf16.gmra.mxu0 %v2730
    %v2910 = vpop.f32.mrf.mxu0
    %v2911 = vadd.f32 %v2771, %v2910
    %v2912 = vpop.f32.mrf.mxu0
    %v2913 = vpop.f32.mrf.mxu0
    %v2914 = vpop.f32.mrf.mxu0
    %2915 = vdwg.mxu0
    %v2916 = vadd.f32 %v2904, %v2487
    %v2917 = vadd.f32 %v2911, %v2489
    %s2918 = scalar_lea.vmem %s17, 1
    %v2919 = vld [vmem:[%s2918] sm:$0x1]
    %s2920 = scalar_lea.vmem %s18, 1
    %v2921 = vld [vmem:[%s2920] sm:$0x1]
    %2922 = vadd.xlane.f32.xlu0 %v2916
    %v2923 = vpop.xlane.xlu0 %2922
    %2924 = vadd.xlane.f32.xlu0 %v2917
    %v2925 = vpop.xlane.xlu0 %2924
    %v2926 = vmul.f32 %v2923, %v322
    %v2927 = vmul.f32 %v2925, %v322
    %v2928 = vsub.f32 %v2916, %v2926
    %v2929 = vsub.f32 %v2917, %v2927
    %v2930 = vmul.f32 %v2928, %v2928
    %v2931 = vmul.f32 %v2929, %v2929
    %2932 = vadd.xlane.f32.xlu0 %v2930
    %v2933 = vpop.xlane.xlu0 %2932
    %2934 = vadd.xlane.f32.xlu0 %v2931
    %v2935 = vpop.xlane.xlu0 %2934
    %v2936 = vmul.f32 %v2933, %v322
    %v2937 = vmul.f32 %v2935, %v322
    %v2938 = vadd.f32 %v2936, 1e-12
    %v2939 = vadd.f32 %v2937, 1e-12
    %v2940 = vrsqrt.pop %v2938
    %v2941 = vrsqrt.pop %v2939
    %v2942 = vmul.f32 %v2928, %v2940
    %v2943 = vmul.f32 %v2929, %v2941
    %v2945 = vlaneseq
    %v2946 = vshrl.u32 %v2945, 7
    %v2947 = vsub.s32 0, %v2946
    %v2948 = vrot.slane %v2919, %v2947
    %v2950 = vmul.f32 %v2942, %v2948
    %v2951 = vmul.f32 %v2943, %v2948
    %v2953 = vlaneseq
    %v2954 = vshrl.u32 %v2953, 7
    %v2955 = vsub.s32 0, %v2954
    %v2956 = vrot.slane %v2921, %v2955
    %v2958 = vadd.f32 %v2950, %v2956
    %v2959 = vadd.f32 %v2951, %v2956
    %v2960 = vpack.c.bf16 %v2958, %v2958
    %v2961 = vld [vmem:[#allocation10] sm:$0xf]
    %v2962 = vld [vmem:[#allocation10 + $0x4] sm:$0xf]
    %v2963 = vld [vmem:[#allocation10 + $0x8] sm:$0xf]
    %v2964 = vld [vmem:[#allocation10 + $0xc] sm:$0xf]
    %v2965 = vld [vmem:[#allocation10 + $0x10] sm:$0xf]
    %v2966 = vld [vmem:[#allocation10 + $0x14] sm:$0xf]
    %v2967 = vld [vmem:[#allocation10 + $0x18] sm:$0xf]
    %v2968 = vld [vmem:[#allocation10 + $0x1c] sm:$0xf]
    %v2969 = vld [vmem:[#allocation10 + $0x20] sm:$0xf]
    %v2970 = vld [vmem:[#allocation10 + $0x24] sm:$0xf]
    %v2971 = vld [vmem:[#allocation10 + $0x28] sm:$0xf]
    %v2972 = vld [vmem:[#allocation10 + $0x2c] sm:$0xf]
    %v2973 = vld [vmem:[#allocation10 + $0x30] sm:$0xf]
    %v2974 = vld [vmem:[#allocation10 + $0x34] sm:$0xf]
    %v2975 = vld [vmem:[#allocation10 + $0x38] sm:$0xf]
    %v2976 = vld [vmem:[#allocation10 + $0x3c] sm:$0xf]
    %v2977 = vld [vmem:[%s20] sm:$0x1]
    %v2994 = vunpack.c.l.b16 %v2961
    %v2995 = vunpack.c.l.b16 %v2962
    %v2996 = vunpack.c.l.b16 %v2963
    %v2997 = vunpack.c.l.b16 %v2964
    %v2998 = vunpack.c.l.b16 %v2965
    %v2999 = vunpack.c.l.b16 %v2966
    %v3000 = vunpack.c.l.b16 %v2967
    %v3001 = vunpack.c.l.b16 %v2968
    %v3002 = vunpack.c.l.b16 %v2969
    %v3003 = vunpack.c.l.b16 %v2970
    %v3004 = vunpack.c.l.b16 %v2971
    %v3005 = vunpack.c.l.b16 %v2972
    %v3006 = vunpack.c.l.b16 %v2973
    %v3007 = vunpack.c.l.b16 %v2974
    %v3008 = vunpack.c.l.b16 %v2975
    %v3009 = vunpack.c.l.b16 %v2976
    %v3010 = vpack.c.b16 %v2995, %v2994
    %v3011 = vpack.c.b16 %v2997, %v2996
    %v3012 = vpack.c.b16 %v2999, %v2998
    %v3013 = vpack.c.b16 %v3001, %v3000
    %v3014 = vpack.c.b16 %v3003, %v3002
    %v3015 = vpack.c.b16 %v3005, %v3004
    %v3016 = vpack.c.b16 %v3007, %v3006
    %v3017 = vpack.c.b16 %v3009, %v3008
    %3026 = vmatprep.subr.bf16.mxu0 0
    %3027 = vmatpush1.bf16.msra.mxu0 %v3017
    %3028 = vmatprep.subr.bf16.mxu0 0
    %3029 = vmatpush1.bf16.msra.mxu0 %v3016
    %3030 = vmatprep.subr.bf16.mxu0 0
    %3031 = vmatpush1.bf16.msra.mxu0 %v3015
    %3032 = vmatprep.subr.bf16.mxu0 0
    %3033 = vmatpush1.bf16.msra.mxu0 %v3014
    %3034 = vmatprep.subr.bf16.mxu0 0
    %3035 = vmatpush1.bf16.msra.mxu0 %v3013
    %3036 = vmatprep.subr.bf16.mxu0 0
    %3037 = vmatpush1.bf16.msra.mxu0 %v3012
    %3038 = vmatprep.subr.bf16.mxu0 0
    %3039 = vmatpush1.bf16.msra.mxu0 %v3011
    %3040 = vmatprep.subr.bf16.mxu0 0
    %3041 = vmatpush1.bf16.msra.mxu0 %v3010
    %3042 = vmatprep.subr.bf16.mxu0 0
    %3043 = vmatpush2.bf16.msra.mxu0 0
    %3044 = vmatprep.subr.bf16.mxu0 0
    %3045 = vmatpush2.bf16.msra.mxu0 0
    %3046 = vmatprep.subr.bf16.mxu0 0
    %3047 = vmatpush2.bf16.msra.mxu0 0
    %3048 = vmatprep.subr.bf16.mxu0 0
    %3049 = vmatpush2.bf16.msra.mxu0 0
    %3050 = vmatprep.subr.bf16.mxu0 0
    %3051 = vmatpush2.bf16.msra.mxu0 0
    %3052 = vmatprep.subr.bf16.mxu0 0
    %3053 = vmatpush2.bf16.msra.mxu0 0
    %3054 = vmatprep.subr.bf16.mxu0 0
    %3055 = vmatpush2.bf16.msra.mxu0 0
    %3056 = vmatprep.subr.bf16.mxu0 0
    %3057 = vmatpush2.bf16.msra.mxu0 0
    %3058 = vmatprep.mubr.bf16.mxu0 0
    %3059 = vmatmul.mubr.bf16.gmra.mxu0 %v2960
    %v3060 = vpop.f32.mrf.mxu0
    %v3061 = vadd.f32 %v2977, %v3060
    %v3062 = vpop.f32.mrf.mxu0
    %v3063 = vpop.f32.mrf.mxu0
    %v3064 = vpop.f32.mrf.mxu0
    %3065 = vdwg.mxu0
    %v3066 = vtanh.pop %v3061
    %v3067 = vpack.c.bf16 %v3066, %v3066
    %v3068 = vld [vmem:[#allocation12] sm:$0xf]
    %v3069 = vld [vmem:[#allocation12 + $0x4] sm:$0xf]
    %v3070 = vld [vmem:[#allocation12 + $0x8] sm:$0xf]
    %v3071 = vld [vmem:[#allocation12 + $0xc] sm:$0xf]
    %v3072 = vld [vmem:[#allocation12 + $0x10] sm:$0xf]
    %v3073 = vld [vmem:[#allocation12 + $0x14] sm:$0xf]
    %v3074 = vld [vmem:[#allocation12 + $0x18] sm:$0xf]
    %v3075 = vld [vmem:[#allocation12 + $0x1c] sm:$0xf]
    %v3076 = vld [vmem:[#allocation12 + $0x20] sm:$0xf]
    %v3077 = vld [vmem:[#allocation12 + $0x24] sm:$0xf]
    %v3078 = vld [vmem:[#allocation12 + $0x28] sm:$0xf]
    %v3079 = vld [vmem:[#allocation12 + $0x2c] sm:$0xf]
    %v3080 = vld [vmem:[#allocation12 + $0x30] sm:$0xf]
    %v3081 = vld [vmem:[#allocation12 + $0x34] sm:$0xf]
    %v3082 = vld [vmem:[#allocation12 + $0x38] sm:$0xf]
    %v3083 = vld [vmem:[#allocation12 + $0x3c] sm:$0xf]
    %v3084 = vld [vmem:[%s22] sm:$0x1]
    %v3101 = vunpack.c.l.b16 %v3068
    %v3102 = vunpack.c.l.b16 %v3069
    %v3103 = vunpack.c.l.b16 %v3070
    %v3104 = vunpack.c.l.b16 %v3071
    %v3105 = vunpack.c.l.b16 %v3072
    %v3106 = vunpack.c.l.b16 %v3073
    %v3107 = vunpack.c.l.b16 %v3074
    %v3108 = vunpack.c.l.b16 %v3075
    %v3109 = vunpack.c.l.b16 %v3076
    %v3110 = vunpack.c.l.b16 %v3077
    %v3111 = vunpack.c.l.b16 %v3078
    %v3112 = vunpack.c.l.b16 %v3079
    %v3113 = vunpack.c.l.b16 %v3080
    %v3114 = vunpack.c.l.b16 %v3081
    %v3115 = vunpack.c.l.b16 %v3082
    %v3116 = vunpack.c.l.b16 %v3083
    %v3117 = vpack.c.b16 %v3102, %v3101
    %v3118 = vpack.c.b16 %v3104, %v3103
    %v3119 = vpack.c.b16 %v3106, %v3105
    %v3120 = vpack.c.b16 %v3108, %v3107
    %v3121 = vpack.c.b16 %v3110, %v3109
    %v3122 = vpack.c.b16 %v3112, %v3111
    %v3123 = vpack.c.b16 %v3114, %v3113
    %v3124 = vpack.c.b16 %v3116, %v3115
    %3133 = vmatprep.subr.bf16.mxu0 0
    %3134 = vmatpush1.bf16.msra.mxu0 %v3124
    %3135 = vmatprep.subr.bf16.mxu0 0
    %3136 = vmatpush1.bf16.msra.mxu0 %v3123
    %3137 = vmatprep.subr.bf16.mxu0 0
    %3138 = vmatpush1.bf16.msra.mxu0 %v3122
    %3139 = vmatprep.subr.bf16.mxu0 0
    %3140 = vmatpush1.bf16.msra.mxu0 %v3121
    %3141 = vmatprep.subr.bf16.mxu0 0
    %3142 = vmatpush1.bf16.msra.mxu0 %v3120
    %3143 = vmatprep.subr.bf16.mxu0 0
    %3144 = vmatpush1.bf16.msra.mxu0 %v3119
    %3145 = vmatprep.subr.bf16.mxu0 0
    %3146 = vmatpush1.bf16.msra.mxu0 %v3118
    %3147 = vmatprep.subr.bf16.mxu0 0
    %3148 = vmatpush1.bf16.msra.mxu0 %v3117
    %3149 = vmatprep.subr.bf16.mxu0 0
    %3150 = vmatpush2.bf16.msra.mxu0 0
    %3151 = vmatprep.subr.bf16.mxu0 0
    %3152 = vmatpush2.bf16.msra.mxu0 0
    %3153 = vmatprep.subr.bf16.mxu0 0
    %3154 = vmatpush2.bf16.msra.mxu0 0
    %3155 = vmatprep.subr.bf16.mxu0 0
    %3156 = vmatpush2.bf16.msra.mxu0 0
    %3157 = vmatprep.subr.bf16.mxu0 0
    %3158 = vmatpush2.bf16.msra.mxu0 0
    %3159 = vmatprep.subr.bf16.mxu0 0
    %3160 = vmatpush2.bf16.msra.mxu0 0
    %3161 = vmatprep.subr.bf16.mxu0 0
    %3162 = vmatpush2.bf16.msra.mxu0 0
    %3163 = vmatprep.subr.bf16.mxu0 0
    %3164 = vmatpush2.bf16.msra.mxu0 0
    %3165 = vmatprep.mubr.bf16.mxu0 0
    %3166 = vmatmul.mubr.bf16.gmra.mxu0 %v3067
    %v3167 = vpop.f32.mrf.mxu0
    %v3168 = vadd.f32 %v3084, %v3167
    %v3169 = vpop.f32.mrf.mxu0
    %v3170 = vpop.f32.mrf.mxu0
    %v3171 = vpop.f32.mrf.mxu0
    %3172 = vdwg.mxu0
    %3173 = vst [vmem:[%s23] sm:$0x1] %v3168
    %v3174 = vpack.c.bf16 %v2959, %v2959
    %v3175 = vld [vmem:[#allocation10] sm:$0xf]
    %v3176 = vld [vmem:[#allocation10 + $0x4] sm:$0xf]
    %v3177 = vld [vmem:[#allocation10 + $0x8] sm:$0xf]
    %v3178 = vld [vmem:[#allocation10 + $0xc] sm:$0xf]
    %v3179 = vld [vmem:[#allocation10 + $0x10] sm:$0xf]
    %v3180 = vld [vmem:[#allocation10 + $0x14] sm:$0xf]
    %v3181 = vld [vmem:[#allocation10 + $0x18] sm:$0xf]
    %v3182 = vld [vmem:[#allocation10 + $0x1c] sm:$0xf]
    %v3183 = vld [vmem:[#allocation10 + $0x20] sm:$0xf]
    %v3184 = vld [vmem:[#allocation10 + $0x24] sm:$0xf]
    %v3185 = vld [vmem:[#allocation10 + $0x28] sm:$0xf]
    %v3186 = vld [vmem:[#allocation10 + $0x2c] sm:$0xf]
    %v3187 = vld [vmem:[#allocation10 + $0x30] sm:$0xf]
    %v3188 = vld [vmem:[#allocation10 + $0x34] sm:$0xf]
    %v3189 = vld [vmem:[#allocation10 + $0x38] sm:$0xf]
    %v3190 = vld [vmem:[#allocation10 + $0x3c] sm:$0xf]
    %v3191 = vld [vmem:[%s20] sm:$0x1]
    %v3208 = vunpack.c.l.b16 %v3175
    %v3209 = vunpack.c.l.b16 %v3176
    %v3210 = vunpack.c.l.b16 %v3177
    %v3211 = vunpack.c.l.b16 %v3178
    %v3212 = vunpack.c.l.b16 %v3179
    %v3213 = vunpack.c.l.b16 %v3180
    %v3214 = vunpack.c.l.b16 %v3181
    %v3215 = vunpack.c.l.b16 %v3182
    %v3216 = vunpack.c.l.b16 %v3183
    %v3217 = vunpack.c.l.b16 %v3184
    %v3218 = vunpack.c.l.b16 %v3185
    %v3219 = vunpack.c.l.b16 %v3186
    %v3220 = vunpack.c.l.b16 %v3187
    %v3221 = vunpack.c.l.b16 %v3188
    %v3222 = vunpack.c.l.b16 %v3189
    %v3223 = vunpack.c.l.b16 %v3190
    %v3224 = vpack.c.b16 %v3209, %v3208
    %v3225 = vpack.c.b16 %v3211, %v3210
    %v3226 = vpack.c.b16 %v3213, %v3212
    %v3227 = vpack.c.b16 %v3215, %v3214
    %v3228 = vpack.c.b16 %v3217, %v3216
    %v3229 = vpack.c.b16 %v3219, %v3218
    %v3230 = vpack.c.b16 %v3221, %v3220
    %v3231 = vpack.c.b16 %v3223, %v3222
    %3240 = vmatprep.subr.bf16.mxu0 0
    %3241 = vmatpush1.bf16.msra.mxu0 %v3231
    %3242 = vmatprep.subr.bf16.mxu0 0
    %3243 = vmatpush1.bf16.msra.mxu0 %v3230
    %3244 = vmatprep.subr.bf16.mxu0 0
    %3245 = vmatpush1.bf16.msra.mxu0 %v3229
    %3246 = vmatprep.subr.bf16.mxu0 0
    %3247 = vmatpush1.bf16.msra.mxu0 %v3228
    %3248 = vmatprep.subr.bf16.mxu0 0
    %3249 = vmatpush1.bf16.msra.mxu0 %v3227
    %3250 = vmatprep.subr.bf16.mxu0 0
    %3251 = vmatpush1.bf16.msra.mxu0 %v3226
    %3252 = vmatprep.subr.bf16.mxu0 0
    %3253 = vmatpush1.bf16.msra.mxu0 %v3225
    %3254 = vmatprep.subr.bf16.mxu0 0
    %3255 = vmatpush1.bf16.msra.mxu0 %v3224
    %3256 = vmatprep.subr.bf16.mxu0 0
    %3257 = vmatpush2.bf16.msra.mxu0 0
    %3258 = vmatprep.subr.bf16.mxu0 0
    %3259 = vmatpush2.bf16.msra.mxu0 0
    %3260 = vmatprep.subr.bf16.mxu0 0
    %3261 = vmatpush2.bf16.msra.mxu0 0
    %3262 = vmatprep.subr.bf16.mxu0 0
    %3263 = vmatpush2.bf16.msra.mxu0 0
    %3264 = vmatprep.subr.bf16.mxu0 0
    %3265 = vmatpush2.bf16.msra.mxu0 0
    %3266 = vmatprep.subr.bf16.mxu0 0
    %3267 = vmatpush2.bf16.msra.mxu0 0
    %3268 = vmatprep.subr.bf16.mxu0 0
    %3269 = vmatpush2.bf16.msra.mxu0 0
    %3270 = vmatprep.subr.bf16.mxu0 0
    %3271 = vmatpush2.bf16.msra.mxu0 0
    %3272 = vmatprep.mubr.bf16.mxu0 0
    %3273 = vmatmul.mubr.bf16.gmra.mxu0 %v3174
    %v3274 = vpop.f32.mrf.mxu0
    %v3275 = vadd.f32 %v3191, %v3274
    %v3276 = vpop.f32.mrf.mxu0
    %v3277 = vpop.f32.mrf.mxu0
    %v3278 = vpop.f32.mrf.mxu0
    %3279 = vdwg.mxu0
    %v3280 = vtanh.pop %v3275
    %v3281 = vpack.c.bf16 %v3280, %v3280
    %v3282 = vld [vmem:[#allocation12] sm:$0xf]
    %v3283 = vld [vmem:[#allocation12 + $0x4] sm:$0xf]
    %v3284 = vld [vmem:[#allocation12 + $0x8] sm:$0xf]
    %v3285 = vld [vmem:[#allocation12 + $0xc] sm:$0xf]
    %v3286 = vld [vmem:[#allocation12 + $0x10] sm:$0xf]
    %v3287 = vld [vmem:[#allocation12 + $0x14] sm:$0xf]
    %v3288 = vld [vmem:[#allocation12 + $0x18] sm:$0xf]
    %v3289 = vld [vmem:[#allocation12 + $0x1c] sm:$0xf]
    %v3290 = vld [vmem:[#allocation12 + $0x20] sm:$0xf]
    %v3291 = vld [vmem:[#allocation12 + $0x24] sm:$0xf]
    %v3292 = vld [vmem:[#allocation12 + $0x28] sm:$0xf]
    %v3293 = vld [vmem:[#allocation12 + $0x2c] sm:$0xf]
    %v3294 = vld [vmem:[#allocation12 + $0x30] sm:$0xf]
    %v3295 = vld [vmem:[#allocation12 + $0x34] sm:$0xf]
    %v3296 = vld [vmem:[#allocation12 + $0x38] sm:$0xf]
    %v3297 = vld [vmem:[#allocation12 + $0x3c] sm:$0xf]
    %v3298 = vld [vmem:[%s22] sm:$0x1]
    %v3315 = vunpack.c.l.b16 %v3282
    %v3316 = vunpack.c.l.b16 %v3283
    %v3317 = vunpack.c.l.b16 %v3284
    %v3318 = vunpack.c.l.b16 %v3285
    %v3319 = vunpack.c.l.b16 %v3286
    %v3320 = vunpack.c.l.b16 %v3287
    %v3321 = vunpack.c.l.b16 %v3288
    %v3322 = vunpack.c.l.b16 %v3289
    %v3323 = vunpack.c.l.b16 %v3290
    %v3324 = vunpack.c.l.b16 %v3291
    %v3325 = vunpack.c.l.b16 %v3292
    %v3326 = vunpack.c.l.b16 %v3293
    %v3327 = vunpack.c.l.b16 %v3294
    %v3328 = vunpack.c.l.b16 %v3295
    %v3329 = vunpack.c.l.b16 %v3296
    %v3330 = vunpack.c.l.b16 %v3297
    %v3331 = vpack.c.b16 %v3316, %v3315
    %v3332 = vpack.c.b16 %v3318, %v3317
    %v3333 = vpack.c.b16 %v3320, %v3319
    %v3334 = vpack.c.b16 %v3322, %v3321
    %v3335 = vpack.c.b16 %v3324, %v3323
    %v3336 = vpack.c.b16 %v3326, %v3325
    %v3337 = vpack.c.b16 %v3328, %v3327
    %v3338 = vpack.c.b16 %v3330, %v3329
    %3347 = vmatprep.subr.bf16.mxu0 0
    %3348 = vmatpush1.bf16.msra.mxu0 %v3338
    %3349 = vmatprep.subr.bf16.mxu0 0
    %3350 = vmatpush1.bf16.msra.mxu0 %v3337
    %3351 = vmatprep.subr.bf16.mxu0 0
    %3352 = vmatpush1.bf16.msra.mxu0 %v3336
    %3353 = vmatprep.subr.bf16.mxu0 0
    %3354 = vmatpush1.bf16.msra.mxu0 %v3335
    %3355 = vmatprep.subr.bf16.mxu0 0
    %3356 = vmatpush1.bf16.msra.mxu0 %v3334
    %3357 = vmatprep.subr.bf16.mxu0 0
    %3358 = vmatpush1.bf16.msra.mxu0 %v3333
    %3359 = vmatprep.subr.bf16.mxu0 0
    %3360 = vmatpush1.bf16.msra.mxu0 %v3332
    %3361 = vmatprep.subr.bf16.mxu0 0
    %3362 = vmatpush1.bf16.msra.mxu0 %v3331
    %3363 = vmatprep.subr.bf16.mxu0 0
    %3364 = vmatpush2.bf16.msra.mxu0 0
    %3365 = vmatprep.subr.bf16.mxu0 0
    %3366 = vmatpush2.bf16.msra.mxu0 0
    %3367 = vmatprep.subr.bf16.mxu0 0
    %3368 = vmatpush2.bf16.msra.mxu0 0
    %3369 = vmatprep.subr.bf16.mxu0 0
    %3370 = vmatpush2.bf16.msra.mxu0 0
    %3371 = vmatprep.subr.bf16.mxu0 0
    %3372 = vmatpush2.bf16.msra.mxu0 0
    %3373 = vmatprep.subr.bf16.mxu0 0
    %3374 = vmatpush2.bf16.msra.mxu0 0
    %3375 = vmatprep.subr.bf16.mxu0 0
    %3376 = vmatpush2.bf16.msra.mxu0 0
    %3377 = vmatprep.subr.bf16.mxu0 0
    %3378 = vmatpush2.bf16.msra.mxu0 0
    %3379 = vmatprep.mubr.bf16.mxu0 0
    %3380 = vmatmul.mubr.bf16.gmra.mxu0 %v3281
    %v3381 = vpop.f32.mrf.mxu0
    %v3382 = vadd.f32 %v3298, %v3381
    %v3383 = vpop.f32.mrf.mxu0
    %v3384 = vpop.f32.mrf.mxu0
    %v3385 = vpop.f32.mrf.mxu0
    %3386 = vdwg.mxu0
    %3387 = vst [vmem:[%s23 + $0x1] sm:$0x1] %v3382
    // Predicated region
    $region122: #{forward.1} parent=1 // pred_check
      _
    $region123: #{forward.1} parent=1 // pred_check_branch
      %3389 = sbr.rel (0) target = $region125
    $region124: #{forward.1} parent=1 // pred_region
      _
    $region125: #{forward.1} parent=1 // pred_fallthru
      _
    // Predicated region
    $region126: #{forward.1} parent=1 // pred_check
      _
    $region127: #{forward.1} parent=1 // pred_check_branch
      %3391 = sbr.rel (0) target = $region129
    $region128: #{forward.1} parent=1 // pred_region
      _
    $region129: #{forward.1} parent=1 // pred_fallthru
      _
    %3392 = vsyncpa [#allocation3], 1
    %3393 = vsyncpa [#allocation5], 1
    %3394 = vsyncpa [#allocation8], 1
    %3395 = vsyncpa [#allocation11], 1

</llo_original>
